<compile_context>
chip_gen: v7x
topology: tpu7x:2x2x1
jax: 0.10.0
libtpu: 0.0.40
codegen_flags: <defaults>
</compile_context>

<pallas_src>
import functools

import jax
import jax.numpy as jnp
from jax.experimental import pallas as pl
from jax.experimental.pallas import tpu as pltpu


TILE_E = 256          # edges per grid step; multiple of 8 (f32 sublanes)
_HIGH = jax.lax.Precision.HIGHEST   # f32-accurate MXU passes (torch f32 parity)


def _edge_decoder_kernel(zu_ref, zm_ref, w1u_ref, w1m_ref, b1_ref, w2_ref,
                         b2_ref, o_ref):
    # zu_ref, zm_ref : [TILE_E, H]  gathered user / movie features (streamed)
    # w1u_ref,w1m_ref: [H, H]       user / movie halves of lin1 (resident)
    # b1_ref         : [1, H]
    # w2_ref         : [1, H]       lin2 weight row
    # b2_ref         : [1, 1]
    # o_ref          : [TILE_E, 1]
    h = (jnp.dot(zu_ref[...], w1u_ref[...],
                 preferred_element_type=jnp.float32, precision=_HIGH)
         + jnp.dot(zm_ref[...], w1m_ref[...],
                   preferred_element_type=jnp.float32, precision=_HIGH)
         + b1_ref[...])
    h = jnp.maximum(h, 0.0)                                   # ReLU on the VPU
    # lin2 (out_features == 1): VPU multiply + XLU lane reduction instead of an
    # N=1 MXU matmul (which would waste all but one result column).
    out = jnp.sum(h * w2_ref[...], axis=-1, keepdims=True) + b2_ref[...]
    o_ref[...] = out.astype(o_ref.dtype)


@functools.partial(jax.jit, static_argnames=("tile_e",))
def edge_decoder_forward(z_user, z_movie, edge_label_index, kparams,
                         tile_e=TILE_E):
    """Pallas implementation of EdgeDecoder.forward.

    z_user : [num_users,  H] float32
    z_movie: [num_movies, H] float32
    edge_label_index: [2, E] int32  (row -> user idx, col -> movie idx)
    kparams: dict from prepare_kernel_params()
    returns: [E] float32
    """
    row, col = edge_label_index[0], edge_label_index[1]
    E = row.shape[0]
    H = kparams["b1"].shape[-1]

    num_tiles = pl.cdiv(E, tile_e)
    e_pad = num_tiles * tile_e

    # Pad the cheap index vectors (not the feature matrices) so the gathered
    # streams are already a multiple of the tile size.
    row_p = jnp.pad(row, (0, e_pad - E))
    col_p = jnp.pad(col, (0, e_pad - E))

    # Gather stays in XLA glue; the [E, 2H] concat is *not* materialized.
    zu = z_user[row_p]       # [e_pad, H]
    zm = z_movie[col_p]      # [e_pad, H]

    grid_spec = pltpu.PrefetchScalarGridSpec(
        num_scalar_prefetch=0,
        grid=(num_tiles,),
        in_specs=[
            pl.BlockSpec((tile_e, H), lambda i: (i, 0)),   # zu  (streamed)
            pl.BlockSpec((tile_e, H), lambda i: (i, 0)),   # zm  (streamed)
            pl.BlockSpec((H, H), lambda i: (0, 0)),        # W1_u (resident)
            pl.BlockSpec((H, H), lambda i: (0, 0)),        # W1_m (resident)
            pl.BlockSpec((1, H), lambda i: (0, 0)),        # b1   (resident)
            pl.BlockSpec((1, H), lambda i: (0, 0)),        # w2   (resident)
            pl.BlockSpec((1, 1), lambda i: (0, 0)),        # b2   (resident)
        ],
        out_specs=pl.BlockSpec((tile_e, 1), lambda i: (i, 0)),
    )

    out = pl.pallas_call(
        _edge_decoder_kernel,
        out_shape=jax.ShapeDtypeStruct((e_pad, 1), jnp.float32),
        grid_spec=grid_spec,
        compiler_params=pltpu.CompilerParams(
            dimension_semantics=("parallel",),        # 2x TC sharding on v7x
            vmem_limit_bytes=32 * 1024 * 1024,        # explicit, safe on v5e/v7x
        ),
    )(zu, zm, kparams["w1_u"], kparams["w1_m"], kparams["b1"],
      kparams["w2"], kparams["b2"])

    return out.reshape(-1)[:E]                        # == z.view(-1)


def init_params(key, hidden_channels):
    """Deterministic init mimicking torch.nn.Linear shapes (weight: [out, in])."""
    k1, k2, k3, k4 = jax.random.split(key, 4)
    in1 = 2 * hidden_channels
    lim1 = 1.0 / jnp.sqrt(in1)
    lim2 = 1.0 / jnp.sqrt(hidden_channels)
    return {
        "lin1_w": jax.random.uniform(k1, (hidden_channels, in1),
                                     minval=-lim1, maxval=lim1,
                                     dtype=jnp.float32),
        "lin1_b": jax.random.uniform(k2, (hidden_channels,),
                                     minval=-lim1, maxval=lim1,
                                     dtype=jnp.float32),
        "lin2_w": jax.random.uniform(k3, (1, hidden_channels),
                                     minval=-lim2, maxval=lim2,
                                     dtype=jnp.float32),
        "lin2_b": jax.random.uniform(k4, (1,),
                                     minval=-lim2, maxval=lim2,
                                     dtype=jnp.float32),
    }


def prepare_kernel_params(params):
    """One-time conversion of torch-layout params to kernel layout (outside
    the per-call path, so no transpose per forward)."""
    H = params["lin1_b"].shape[0]
    w1 = params["lin1_w"]                         # [H, 2H], z = [user | movie]
    return {
        "w1_u": jnp.asarray(w1[:, :H].T),         # [H, H]  acts on z_user[row]
        "w1_m": jnp.asarray(w1[:, H:].T),         # [H, H]  acts on z_movie[col]
        "b1": params["lin1_b"].reshape(1, H),     # [1, H]
        "w2": params["lin2_w"].reshape(1, H),     # [1, H]
        "b2": params["lin2_b"].reshape(1, 1),     # [1, 1]
    }


def _reference_forward(z_user, z_movie, edge_label_index, params):
    row, col = edge_label_index[0], edge_label_index[1]
    z = jnp.concatenate([z_user[row], z_movie[col]], axis=-1)
    h = jnp.maximum(
        jnp.dot(z, params["lin1_w"].T, precision=_HIGH) + params["lin1_b"], 0.0)
    out = jnp.dot(h, params["lin2_w"].T, precision=_HIGH) + params["lin2_b"]
    return out.reshape(-1)


if __name__ == "__main__":
    hidden = 32
    num_users, num_movies, num_edges = 64, 48, 1000   # E not a TILE_E multiple

    key = jax.random.PRNGKey(0)
    k_zu, k_zm, k_row, k_col, k_par = jax.random.split(key, 5)

    z_user = jax.random.normal(k_zu, (num_users, hidden), dtype=jnp.float32)
    z_movie = jax.random.normal(k_zm, (num_movies, hidden), dtype=jnp.float32)
    row = jax.random.randint(k_row, (num_edges,), 0, num_users, dtype=jnp.int32)
    col = jax.random.randint(k_col, (num_edges,), 0, num_movies, dtype=jnp.int32)
    edge_label_index = jnp.stack([row, col], axis=0)

    params = init_params(k_par, hidden)
    kparams = prepare_kernel_params(params)

    out = edge_decoder_forward(z_user, z_movie, edge_label_index, kparams)
    out = jax.block_until_ready(out)

    ref = _reference_forward(z_user, z_movie, edge_label_index, params)
    assert out.shape == (num_edges,)
    assert jnp.allclose(out, ref, atol=1e-4, rtol=1e-4), (
        float(jnp.max(jnp.abs(out - ref))))

    print("KERNEL_OK")
</pallas_src>

<mosaic_0001>
module attributes {stable_mosaic.version = 11 : i64} {
  func.func @_edge_decoder_kernel(%arg0: i32, %arg1: memref<256x32xf32, #tpu.memory_space<vmem>>, %arg2: memref<256x32xf32, #tpu.memory_space<vmem>>, %arg3: memref<32x32xf32, #tpu.memory_space<vmem>>, %arg4: memref<32x32xf32, #tpu.memory_space<vmem>>, %arg5: memref<1x32xf32, #tpu.memory_space<vmem>>, %arg6: memref<1x32xf32, #tpu.memory_space<vmem>>, %arg7: memref<1x1xf32, #tpu.memory_space<vmem>>, %arg8: memref<256x1xf32, #tpu.memory_space<vmem>>) attributes {dimension_semantics = [#tpu.dimension_semantics<parallel>], iteration_bounds = array<i64: 4>, scalar_prefetch = 0 : i64, scratch_operands = 0 : i64, tpu.core_type = #tpu.core_type<tc>, window_params = [{transform_indices = @transform_0, window_bounds = array<i64: 256, 32>}, {transform_indices = @transform_1, window_bounds = array<i64: 256, 32>}, {pipeline_mode = #tpu.pipeline_mode<synchronous>, transform_indices = @transform_2, window_bounds = array<i64: 32, 32>}, {pipeline_mode = #tpu.pipeline_mode<synchronous>, transform_indices = @transform_3, window_bounds = array<i64: 32, 32>}, {pipeline_mode = #tpu.pipeline_mode<synchronous>, transform_indices = @transform_4, window_bounds = array<i64: 1, 32>}, {pipeline_mode = #tpu.pipeline_mode<synchronous>, transform_indices = @transform_5, window_bounds = array<i64: 1, 32>}, {pipeline_mode = #tpu.pipeline_mode<synchronous>, transform_indices = @transform_6, window_bounds = array<i64: 1, 1>}, {transform_indices = @transform_7, window_bounds = array<i64: 256, 1>}]} {
    %c0 = arith.constant 0 : index
    %c0_0 = arith.constant 0 : index
    %0 = vector.load %arg1[%c0, %c0_0] : memref<256x32xf32, #tpu.memory_space<vmem>>, vector<256x32xf32>
    %c0_1 = arith.constant 0 : index
    %c0_2 = arith.constant 0 : index
    %1 = vector.load %arg3[%c0_1, %c0_2] : memref<32x32xf32, #tpu.memory_space<vmem>>, vector<32x32xf32>
    %cst = arith.constant dense<0.000000e+00> : vector<256x32xf32>
    %2 = tpu.matmul %0, %1, %cst {dimension_numbers = #tpu.dot_dimension_numbers<[1], [0], [0], [1], [0, 0, 1, 1], [], []>, precision = #tpu.contract_precision<fp32>} : vector<256x32xf32>, vector<32x32xf32>, vector<256x32xf32> -> vector<256x32xf32>
    %c0_3 = arith.constant 0 : index
    %c0_4 = arith.constant 0 : index
    %3 = vector.load %arg2[%c0_3, %c0_4] : memref<256x32xf32, #tpu.memory_space<vmem>>, vector<256x32xf32>
    %c0_5 = arith.constant 0 : index
    %c0_6 = arith.constant 0 : index
    %4 = vector.load %arg4[%c0_5, %c0_6] : memref<32x32xf32, #tpu.memory_space<vmem>>, vector<32x32xf32>
    %cst_7 = arith.constant dense<0.000000e+00> : vector<256x32xf32>
    %5 = tpu.matmul %3, %4, %cst_7 {dimension_numbers = #tpu.dot_dimension_numbers<[1], [0], [0], [1], [0, 0, 1, 1], [], []>, precision = #tpu.contract_precision<fp32>} : vector<256x32xf32>, vector<32x32xf32>, vector<256x32xf32> -> vector<256x32xf32>
    %6 = arith.addf %2, %5 : vector<256x32xf32>
    %c0_8 = arith.constant 0 : index
    %c0_9 = arith.constant 0 : index
    %7 = vector.load %arg5[%c0_8, %c0_9] : memref<1x32xf32, #tpu.memory_space<vmem>>, vector<1x32xf32>
    %8 = vector.broadcast %7 : vector<1x32xf32> to vector<256x32xf32>
    %9 = arith.addf %6, %8 : vector<256x32xf32>
    %cst_10 = arith.constant 0.000000e+00 : f32
    %10 = vector.broadcast %cst_10 : f32 to vector<256x32xf32>
    %11 = arith.maximumf %9, %10 : vector<256x32xf32>
    %c0_11 = arith.constant 0 : index
    %c0_12 = arith.constant 0 : index
    %12 = vector.load %arg6[%c0_11, %c0_12] : memref<1x32xf32, #tpu.memory_space<vmem>>, vector<1x32xf32>
    %13 = vector.broadcast %12 : vector<1x32xf32> to vector<256x32xf32>
    %14 = arith.mulf %11, %13 : vector<256x32xf32>
    %cst_13 = arith.constant dense<0.000000e+00> : vector<256xf32>
    %15 = vector.multi_reduction <add>, %14, %cst_13 [1] : vector<256x32xf32> to vector<256xf32>
    %16 = vector.shape_cast %15 : vector<256xf32> to vector<256x1xf32>
    %c0_14 = arith.constant 0 : index
    %c0_15 = arith.constant 0 : index
    %17 = vector.load %arg7[%c0_14, %c0_15] : memref<1x1xf32, #tpu.memory_space<vmem>>, vector<1x1xf32>
    %18 = vector.broadcast %17 : vector<1x1xf32> to vector<256x1xf32>
    %19 = arith.addf %16, %18 : vector<256x1xf32>
    %c0_16 = arith.constant 0 : index
    %c0_17 = arith.constant 0 : index
    %20 = vector.load %arg8[%c0_16, %c0_17] : memref<256x1xf32, #tpu.memory_space<vmem>>, vector<256x1xf32>
    tpu.vector_store %arg8[%c0_16, %c0_17], %19 {strides = array<i32>} : memref<256x1xf32, #tpu.memory_space<vmem>>, vector<256x1xf32>,
    return
  }
  func.func @transform_0(%arg0: i32) -> (i32, i32) {
    %c0_i32 = arith.constant 0 : i32
    %c0_i32_0 = arith.constant 0 : i32
    return %arg0, %c0_i32 : i32, i32
  }
  func.func @transform_1(%arg0: i32) -> (i32, i32) {
    %c0_i32 = arith.constant 0 : i32
    %c0_i32_0 = arith.constant 0 : i32
    return %arg0, %c0_i32 : i32, i32
  }
  func.func @transform_2(%arg0: i32) -> (i32, i32) {
    %c0_i32 = arith.constant 0 : i32
    %c0_i32_0 = arith.constant 0 : i32
    %c0_i32_1 = arith.constant 0 : i32
    return %c0_i32, %c0_i32_0 : i32, i32
  }
  func.func @transform_3(%arg0: i32) -> (i32, i32) {
    %c0_i32 = arith.constant 0 : i32
    %c0_i32_0 = arith.constant 0 : i32
    %c0_i32_1 = arith.constant 0 : i32
    return %c0_i32, %c0_i32_0 : i32, i32
  }
  func.func @transform_4(%arg0: i32) -> (i32, i32) {
    %c0_i32 = arith.constant 0 : i32
    %c0_i32_0 = arith.constant 0 : i32
    %c0_i32_1 = arith.constant 0 : i32
    return %c0_i32, %c0_i32_0 : i32, i32
  }
  func.func @transform_5(%arg0: i32) -> (i32, i32) {
    %c0_i32 = arith.constant 0 : i32
    %c0_i32_0 = arith.constant 0 : i32
    %c0_i32_1 = arith.constant 0 : i32
    return %c0_i32, %c0_i32_0 : i32, i32
  }
  func.func @transform_6(%arg0: i32) -> (i32, i32) {
    %c0_i32 = arith.constant 0 : i32
    %c0_i32_0 = arith.constant 0 : i32
    %c0_i32_1 = arith.constant 0 : i32
    return %c0_i32, %c0_i32_0 : i32, i32
  }
  func.func @transform_7(%arg0: i32) -> (i32, i32) {
    %c0_i32 = arith.constant 0 : i32
    %c0_i32_0 = arith.constant 0 : i32
    return %arg0, %c0_i32 : i32, i32
  }
}

</mosaic_0001>

<llo_original>
// kernel: edge_decoder_forward.1
$region0: #{edge_decoder_forward.1}
  #allocation0 [shape = 'u32[]', space=smem, size = 0x4, offset = 0x4, fixed_abs, tag = 'smem constant byte address 0x4 - core index']
  #allocation1 [shape = 'u32[144,128]{1,0:T(1,128)}', space=vmem, size = 0x12000, scoped, tag = 'internal scratch']
  #allocation2 [shape = 'f32[1,1]{1,0:T(1,128)S(1)}', space=vmem, size = 0x200, scoped, tag = 'scoped memory for edge_decoder_forward.1']
  %s0 = inlined_call_operand.vmem [shape: f32[1024,32], index: 0, kind: input, shape index: {}]
  %s1 = inlined_call_operand.vmem [shape: f32[1024,32], index: 1, kind: input, shape index: {}]
  %s2 = inlined_call_operand.vmem [shape: f32[32,32], index: 2, kind: input, shape index: {}]
  %s3 = inlined_call_operand.vmem [shape: f32[32,32], index: 3, kind: input, shape index: {}]
  %s4 = inlined_call_operand.vmem [shape: f32[1,32], index: 4, kind: input, shape index: {}]
  %s5 = inlined_call_operand.vmem [shape: f32[1,32], index: 5, kind: input, shape index: {}]
  %s6 = inlined_call_operand.<no memory space> [shape: f32[1,1], index: 6, kind: input, shape index: {}]
  %s7 = inlined_call_operand.vmem [shape: f32[1024,1], index: 7, kind: output, shape index: {}]
  %s8 = sld [smem:[#allocation0]]
  $region61: #{edge_decoder_forward.1} parent=0
    _
  %s10 = ssub.s32 1, %s8
  %s11 = scalar_select 0, %s10, %s8
  %v12 = vstv %s6
  %13 = vst [vmem:[#allocation2] sm:$0x1] %v12
  loop: start=0, step=1, limit=6
  $region2: #{edge_decoder_forward.1} parent=0 // loop_pre_header
    _
  $region3: #{edge_decoder_forward.1} parent=0 // loop_header
    %s15 = sphi 0, %s19
    %p16 = scmp.ge.s32.totalorder %s15, 6
    %s25 = sphi 0, %s27
    %s28 = sphi 0, %s25
    %s29 = sphi 0, %s28
    %s45 = sphi 0, %s29
    %s51 = sphi 0, %s53
    %s54 = sphi 0, %s51
    %s55 = sphi 0, %s54
    %s71 = sphi 0, %s55
    %s75 = sphi 0, %s75
    %s77 = sphi 0, %s75
    %s78 = sphi 0, %s77
    %s92 = sphi 0, %s78
    %s96 = sphi 0, %s96
    %s98 = sphi 0, %s96
    %s99 = sphi 0, %s98
    %s113 = sphi 0, %s99
    %s117 = sphi 0, %s117
    %s119 = sphi 0, %s117
    %s120 = sphi 0, %s119
    %s134 = sphi 0, %s120
    %s138 = sphi 0, %s138
    %s140 = sphi 0, %s138
    %s141 = sphi 0, %s140
    %s155 = sphi 0, %s141
    %s159 = sphi 0, %s159
    %s161 = sphi 0, %s159
    %s162 = sphi 0, %s161
    %s176 = sphi 0, %s162
    %s182 = sphi 0, %s184
    %s185 = sphi 0, %s182
    %s186 = sphi 0, %s185
    %s202 = sphi 0, %s186
  $region4: #{edge_decoder_forward.1} parent=0 // loop_header_branch
    %18 = sbr.rel (%p16) target = $region8
  $region5: #{edge_decoder_forward.1} parent=0 // loop_body
    %s20 = ssub.s32 %s15, 1
    %s21 = ssub.s32 %s15, 2
    %s22 = sadd.s32 %s15, 1
    %s23 = ssub.s32 %s15, %s22
    %p24 = scmp.eq.s32.totalorder %s23, 0
    %s26 = sadd.s32 %s25, 1
    %s27 = scalar_select %p24, %s25, %s26
    %p30 = pneg %p24
    %p31 = scmp.eq.s32.totalorder %s15, 3
    %p32 = por %p30, %p31
    %p33 = scmp.ne.s32.totalorder %s25, %s28
    %p34 = scmp.eq.s32.totalorder %s15, 0
    %p35 = por %p33, %p34
    %p36 = scmp.ne.s32.totalorder %s25, %s28
    %p37 = scmp.eq.s32.totalorder %s20, 3
    %p38 = por %p36, %p37
    %p39 = scmp.ne.s32.totalorder %s28, %s29
    %p40 = scmp.eq.s32.totalorder %s20, 0
    %p41 = por %p39, %p40
    %p42 = scmp.ne.s32.totalorder %s28, %s29
    %p43 = scmp.eq.s32.totalorder %s21, 3
    %p44 = por %p42, %p43
    %p46 = scmp.ne.s32.totalorder %s29, %s45
    %p47 = scmp.eq.s32.totalorder %s21, 0
    %p48 = por %p46, %p47
    %s49 = ssub.s32 %s15, %s22
    %p50 = scmp.eq.s32.totalorder %s49, 0
    %s52 = sadd.s32 %s51, 1
    %s53 = scalar_select %p50, %s51, %s52
    %p56 = pneg %p50
    %p57 = scmp.eq.s32.totalorder %s15, 3
    %p58 = por %p56, %p57
    %p59 = scmp.ne.s32.totalorder %s51, %s54
    %p60 = scmp.eq.s32.totalorder %s15, 0
    %p61 = por %p59, %p60
    %p62 = scmp.ne.s32.totalorder %s51, %s54
    %p63 = scmp.eq.s32.totalorder %s20, 3
    %p64 = por %p62, %p63
    %p65 = scmp.ne.s32.totalorder %s54, %s55
    %p66 = scmp.eq.s32.totalorder %s20, 0
    %p67 = por %p65, %p66
    %p68 = scmp.ne.s32.totalorder %s54, %s55
    %p69 = scmp.eq.s32.totalorder %s21, 3
    %p70 = por %p68, %p69
    %p72 = scmp.ne.s32.totalorder %s55, %s71
    %p73 = scmp.eq.s32.totalorder %s21, 0
    %p74 = por %p72, %p73
    %s76 = sadd.s32 %s75, 1
    %p79 = scmp.eq.s32.totalorder %s15, 3
    %p80 = scmp.ne.s32.totalorder %s75, %s77
    %p81 = scmp.eq.s32.totalorder %s15, 0
    %p82 = por %p80, %p81
    %p83 = scmp.ne.s32.totalorder %s75, %s77
    %p84 = scmp.eq.s32.totalorder %s20, 3
    %p85 = por %p83, %p84
    %p86 = scmp.ne.s32.totalorder %s77, %s78
    %p87 = scmp.eq.s32.totalorder %s20, 0
    %p88 = por %p86, %p87
    %p89 = scmp.ne.s32.totalorder %s77, %s78
    %p90 = scmp.eq.s32.totalorder %s21, 3
    %p91 = por %p89, %p90
    %p93 = scmp.ne.s32.totalorder %s78, %s92
    %p94 = scmp.eq.s32.totalorder %s21, 0
    %p95 = por %p93, %p94
    %s97 = sadd.s32 %s96, 1
    %p100 = scmp.eq.s32.totalorder %s15, 3
    %p101 = scmp.ne.s32.totalorder %s96, %s98
    %p102 = scmp.eq.s32.totalorder %s15, 0
    %p103 = por %p101, %p102
    %p104 = scmp.ne.s32.totalorder %s96, %s98
    %p105 = scmp.eq.s32.totalorder %s20, 3
    %p106 = por %p104, %p105
    %p107 = scmp.ne.s32.totalorder %s98, %s99
    %p108 = scmp.eq.s32.totalorder %s20, 0
    %p109 = por %p107, %p108
    %p110 = scmp.ne.s32.totalorder %s98, %s99
    %p111 = scmp.eq.s32.totalorder %s21, 3
    %p112 = por %p110, %p111
    %p114 = scmp.ne.s32.totalorder %s99, %s113
    %p115 = scmp.eq.s32.totalorder %s21, 0
    %p116 = por %p114, %p115
    %s118 = sadd.s32 %s117, 1
    %p121 = scmp.eq.s32.totalorder %s15, 3
    %p122 = scmp.ne.s32.totalorder %s117, %s119
    %p123 = scmp.eq.s32.totalorder %s15, 0
    %p124 = por %p122, %p123
    %p125 = scmp.ne.s32.totalorder %s117, %s119
    %p126 = scmp.eq.s32.totalorder %s20, 3
    %p127 = por %p125, %p126
    %p128 = scmp.ne.s32.totalorder %s119, %s120
    %p129 = scmp.eq.s32.totalorder %s20, 0
    %p130 = por %p128, %p129
    %p131 = scmp.ne.s32.totalorder %s119, %s120
    %p132 = scmp.eq.s32.totalorder %s21, 3
    %p133 = por %p131, %p132
    %p135 = scmp.ne.s32.totalorder %s120, %s134
    %p136 = scmp.eq.s32.totalorder %s21, 0
    %p137 = por %p135, %p136
    %s139 = sadd.s32 %s138, 1
    %p142 = scmp.eq.s32.totalorder %s15, 3
    %p143 = scmp.ne.s32.totalorder %s138, %s140
    %p144 = scmp.eq.s32.totalorder %s15, 0
    %p145 = por %p143, %p144
    %p146 = scmp.ne.s32.totalorder %s138, %s140
    %p147 = scmp.eq.s32.totalorder %s20, 3
    %p148 = por %p146, %p147
    %p149 = scmp.ne.s32.totalorder %s140, %s141
    %p150 = scmp.eq.s32.totalorder %s20, 0
    %p151 = por %p149, %p150
    %p152 = scmp.ne.s32.totalorder %s140, %s141
    %p153 = scmp.eq.s32.totalorder %s21, 3
    %p154 = por %p152, %p153
    %p156 = scmp.ne.s32.totalorder %s141, %s155
    %p157 = scmp.eq.s32.totalorder %s21, 0
    %p158 = por %p156, %p157
    %s160 = sadd.s32 %s159, 1
    %p163 = scmp.eq.s32.totalorder %s15, 3
    %p164 = scmp.ne.s32.totalorder %s159, %s161
    %p165 = scmp.eq.s32.totalorder %s15, 0
    %p166 = por %p164, %p165
    %p167 = scmp.ne.s32.totalorder %s159, %s161
    %p168 = scmp.eq.s32.totalorder %s20, 3
    %p169 = por %p167, %p168
    %p170 = scmp.ne.s32.totalorder %s161, %s162
    %p171 = scmp.eq.s32.totalorder %s20, 0
    %p172 = por %p170, %p171
    %p173 = scmp.ne.s32.totalorder %s161, %s162
    %p174 = scmp.eq.s32.totalorder %s21, 3
    %p175 = por %p173, %p174
    %p177 = scmp.ne.s32.totalorder %s162, %s176
    %p178 = scmp.eq.s32.totalorder %s21, 0
    %p179 = por %p177, %p178
    %s180 = ssub.s32 %s15, %s22
    %p181 = scmp.eq.s32.totalorder %s180, 0
    %s183 = sadd.s32 %s182, 1
    %s184 = scalar_select %p181, %s182, %s183
    %p187 = pneg %p181
    %p188 = scmp.eq.s32.totalorder %s15, 3
    %p189 = por %p187, %p188
    %p190 = scmp.ne.s32.totalorder %s182, %s185
    %p191 = scmp.eq.s32.totalorder %s15, 0
    %p192 = por %p190, %p191
    %p193 = scmp.ne.s32.totalorder %s182, %s185
    %p194 = scmp.eq.s32.totalorder %s20, 3
    %p195 = por %p193, %p194
    %p196 = scmp.ne.s32.totalorder %s185, %s186
    %p197 = scmp.eq.s32.totalorder %s20, 0
    %p198 = por %p196, %p197
    %p199 = scmp.ne.s32.totalorder %s185, %s186
    %p200 = scmp.eq.s32.totalorder %s21, 3
    %p201 = por %p199, %p200
    %p203 = scmp.ne.s32.totalorder %s186, %s202
    %p204 = scmp.eq.s32.totalorder %s21, 0
    %p205 = por %p203, %p204
    %p206 = scmp.le.s32.totalorder 1, %s15
    %p207 = scmp.lt.s32.totalorder %s15, 5
    %p208 = pnand %p206, %p207
    %p209 = pneg %p208
    // Predicated region
    $region9: #{edge_decoder_forward.1} parent=5 // pred_check
      _
    $region10: #{edge_decoder_forward.1} parent=5 // pred_check_branch
      %211 = sbr.rel (%p208) target = $region12
    $region11: #{edge_decoder_forward.1} parent=5 // pred_region
      %s212 = ssub.s32 %s15, 1
      // Predicated region
      $region13: #{edge_decoder_forward.1} parent=11 // pred_check
        %p213 = pneg %p88
      $region14: #{edge_decoder_forward.1} parent=11 // pred_check_branch
        %215 = sbr.rel (%p213) target = $region16
      $region15: #{edge_decoder_forward.1} parent=11 // pred_region
        _
      $region16: #{edge_decoder_forward.1} parent=11 // pred_fallthru
        _
      // Predicated region
      $region17: #{edge_decoder_forward.1} parent=11 // pred_check
        %p216 = pneg %p109
      $region18: #{edge_decoder_forward.1} parent=11 // pred_check_branch
        %218 = sbr.rel (%p216) target = $region20
      $region19: #{edge_decoder_forward.1} parent=11 // pred_region
        _
      $region20: #{edge_decoder_forward.1} parent=11 // pred_fallthru
        _
      // Predicated region
      $region21: #{edge_decoder_forward.1} parent=11 // pred_check
        %p219 = pneg %p130
      $region22: #{edge_decoder_forward.1} parent=11 // pred_check_branch
        %221 = sbr.rel (%p219) target = $region24
      $region23: #{edge_decoder_forward.1} parent=11 // pred_region
        _
      $region24: #{edge_decoder_forward.1} parent=11 // pred_fallthru
        _
      // Predicated region
      $region25: #{edge_decoder_forward.1} parent=11 // pred_check
        %p222 = pneg %p151
      $region26: #{edge_decoder_forward.1} parent=11 // pred_check_branch
        %224 = sbr.rel (%p222) target = $region28
      $region27: #{edge_decoder_forward.1} parent=11 // pred_region
        _
      $region28: #{edge_decoder_forward.1} parent=11 // pred_fallthru
        _
      // Predicated region
      $region29: #{edge_decoder_forward.1} parent=11 // pred_check
        %p225 = pneg %p172
      $region30: #{edge_decoder_forward.1} parent=11 // pred_check_branch
        %227 = sbr.rel (%p225) target = $region32
      $region31: #{edge_decoder_forward.1} parent=11 // pred_region
        _
      $region32: #{edge_decoder_forward.1} parent=11 // pred_fallthru
        _
    $region12: #{edge_decoder_forward.1} parent=5 // pred_fallthru
      _
    %p228 = scmp.lt.s32.totalorder %s15, 4
    // Predicated region
    $region33: #{edge_decoder_forward.1} parent=5 // pred_check
      %p229 = pneg %p228
    $region34: #{edge_decoder_forward.1} parent=5 // pred_check_branch
      %231 = sbr.rel (%p229) target = $region36
    $region35: #{edge_decoder_forward.1} parent=5 // pred_region
      // Predicated region
      $region37: #{edge_decoder_forward.1} parent=35 // pred_check
        %p232 = pneg %p35
      $region38: #{edge_decoder_forward.1} parent=35 // pred_check_branch
        %234 = sbr.rel (%p232) target = $region40
      $region39: #{edge_decoder_forward.1} parent=35 // pred_region
        %s235 = smul.u32 32, %s15
        %p236 = scmp.lt.s32.totalorder %s235, 127
        %s237 = scalar_select %p236, %s235, 127
        %s238 = smul.addr %s237, 8
        %s239 = scalar_lea.vmem %s0, %s238
        %s240 = smul.u32 32, %s15
      $region40: #{edge_decoder_forward.1} parent=35 // pred_fallthru
        _
      // Predicated region
      $region41: #{edge_decoder_forward.1} parent=35 // pred_check
        %p241 = pneg %p61
      $region42: #{edge_decoder_forward.1} parent=35 // pred_check_branch
        %243 = sbr.rel (%p241) target = $region44
      $region43: #{edge_decoder_forward.1} parent=35 // pred_region
        %s244 = smul.u32 32, %s15
        %p245 = scmp.lt.s32.totalorder %s244, 127
        %s246 = scalar_select %p245, %s244, 127
        %s247 = smul.addr %s246, 8
        %s248 = scalar_lea.vmem %s1, %s247
        %s249 = smul.u32 32, %s15
      $region44: #{edge_decoder_forward.1} parent=35 // pred_fallthru
        _
    $region36: #{edge_decoder_forward.1} parent=5 // pred_fallthru
      _
    %p250 = scmp.le.s32.totalorder 1, %s15
    %p251 = scmp.lt.s32.totalorder %s15, 5
    %p252 = pnand %p250, %p251
    %p253 = pneg %p252
    // Predicated region
    $region45: #{edge_decoder_forward.1} parent=5 // pred_check
      _
    $region46: #{edge_decoder_forward.1} parent=5 // pred_check_branch
      %255 = sbr.rel (%p252) target = $region48
    $region47: #{edge_decoder_forward.1} parent=5 // pred_region
      %s256 = ssub.s32 %s15, 1
      %s257 = smul.u32 32, %s20
      %p258 = scmp.lt.s32.totalorder %s257, 127
      %s259 = scalar_select %p258, %s257, 127
      %s260 = smul.addr %s259, 8
      %s261 = scalar_lea.vmem %s0, %s260
      %p262 = pneg %p41
      %p263 = pneg %p38
      %s264 = smul.u32 32, %s20
      %p265 = scmp.lt.s32.totalorder %s264, 127
      %s266 = scalar_select %p265, %s264, 127
      %s267 = smul.addr %s266, 8
      %s268 = scalar_lea.vmem %s1, %s267
      %p269 = pneg %p67
      %p270 = pneg %p64
      %p271 = pneg %p88
      %p272 = pneg %p85
      %p273 = pneg %p109
      %p274 = pneg %p106
      %p275 = pneg %p130
      %p276 = pneg %p127
      %p277 = pneg %p151
      %p278 = pneg %p148
      %p279 = pneg %p172
      %p280 = pneg %p169
      %p281 = pneg %p198
      %p282 = pneg %p195
      %s283 = smul.u32 32, %s20
      %p284 = scmp.lt.s32.totalorder %s283, 127
      %s285 = scalar_select %p284, %s283, 127
      %s286 = smul.addr %s285, 8
      %s287 = scalar_lea.vmem %s7, %s286
      %s288 = smul.u32 32, %s20
      %p289 = scmp.lt.s32.totalorder %s288, 127
      %s290 = scalar_select %p289, %s288, 127
      %s291 = smul.addr %s290, 8
      %s292 = scalar_lea.vmem %s0, %s291
      %s293 = smul.u32 32, %s20
      %s294 = smul.u32 32, %s20
      %p295 = scmp.lt.s32.totalorder %s294, 127
      %s296 = scalar_select %p295, %s294, 127
      %s297 = smul.addr %s296, 8
      %s298 = scalar_lea.vmem %s1, %s297
      %s299 = smul.u32 32, %s20
      %s300 = smul.u32 32, %s20
      %p301 = scmp.lt.s32.totalorder %s300, 127
      %s302 = scalar_select %p301, %s300, 127
      %s303 = smul.addr %s302, 8
      %s304 = scalar_lea.vmem %s7, %s303
      %s305 = smul.u32 32, %s20
      %v306 = vld [vmem:[%s292] sm:$0xff]
      %v307 = vld [vmem:[%s292 + $0x8] sm:$0xff]
      %v308 = vld [vmem:[%s292 + $0x10] sm:$0xff]
      %v309 = vld [vmem:[%s292 + $0x18] sm:$0xff]
      %v310 = vld [vmem:[%s292 + $0x20] sm:$0xff]
      %v311 = vld [vmem:[%s292 + $0x28] sm:$0xff]
      %v312 = vld [vmem:[%s292 + $0x30] sm:$0xff]
      %v313 = vld [vmem:[%s292 + $0x38] sm:$0xff]
      %v314 = vld [vmem:[%s292 + $0x40] sm:$0xff]
      %v315 = vld [vmem:[%s292 + $0x48] sm:$0xff]
      %v316 = vld [vmem:[%s292 + $0x50] sm:$0xff]
      %v317 = vld [vmem:[%s292 + $0x58] sm:$0xff]
      %v318 = vld [vmem:[%s292 + $0x60] sm:$0xff]
      %v319 = vld [vmem:[%s292 + $0x68] sm:$0xff]
      %v320 = vld [vmem:[%s292 + $0x70] sm:$0xff]
      %v321 = vld [vmem:[%s292 + $0x78] sm:$0xff]
      %v322 = vld [vmem:[%s292 + $0x80] sm:$0xff]
      %v323 = vld [vmem:[%s292 + $0x88] sm:$0xff]
      %v324 = vld [vmem:[%s292 + $0x90] sm:$0xff]
      %v325 = vld [vmem:[%s292 + $0x98] sm:$0xff]
      %v326 = vld [vmem:[%s292 + $0xa0] sm:$0xff]
      %v327 = vld [vmem:[%s292 + $0xa8] sm:$0xff]
      %v328 = vld [vmem:[%s292 + $0xb0] sm:$0xff]
      %v329 = vld [vmem:[%s292 + $0xb8] sm:$0xff]
      %v330 = vld [vmem:[%s292 + $0xc0] sm:$0xff]
      %v331 = vld [vmem:[%s292 + $0xc8] sm:$0xff]
      %v332 = vld [vmem:[%s292 + $0xd0] sm:$0xff]
      %v333 = vld [vmem:[%s292 + $0xd8] sm:$0xff]
      %v334 = vld [vmem:[%s292 + $0xe0] sm:$0xff]
      %v335 = vld [vmem:[%s292 + $0xe8] sm:$0xff]
      %v336 = vld [vmem:[%s292 + $0xf0] sm:$0xff]
      %v337 = vld [vmem:[%s292 + $0xf8] sm:$0xff]
      %v338 = vld [vmem:[%s2] sm:$0xff]
      %v339 = vld [vmem:[%s2 + $0x8] sm:$0xff]
      %v340 = vld [vmem:[%s2 + $0x10] sm:$0xff]
      %v341 = vld [vmem:[%s2 + $0x18] sm:$0xff]
      %v342 = vld [vmem:[%s298] sm:$0xff]
      %v343 = vld [vmem:[%s298 + $0x8] sm:$0xff]
      %v344 = vld [vmem:[%s298 + $0x10] sm:$0xff]
      %v345 = vld [vmem:[%s298 + $0x18] sm:$0xff]
      %v346 = vld [vmem:[%s298 + $0x20] sm:$0xff]
      %v347 = vld [vmem:[%s298 + $0x28] sm:$0xff]
      %v348 = vld [vmem:[%s298 + $0x30] sm:$0xff]
      %v349 = vld [vmem:[%s298 + $0x38] sm:$0xff]
      %v350 = vld [vmem:[%s298 + $0x40] sm:$0xff]
      %v351 = vld [vmem:[%s298 + $0x48] sm:$0xff]
      %v352 = vld [vmem:[%s298 + $0x50] sm:$0xff]
      %v353 = vld [vmem:[%s298 + $0x58] sm:$0xff]
      %v354 = vld [vmem:[%s298 + $0x60] sm:$0xff]
      %v355 = vld [vmem:[%s298 + $0x68] sm:$0xff]
      %v356 = vld [vmem:[%s298 + $0x70] sm:$0xff]
      %v357 = vld [vmem:[%s298 + $0x78] sm:$0xff]
      %v358 = vld [vmem:[%s298 + $0x80] sm:$0xff]
      %v359 = vld [vmem:[%s298 + $0x88] sm:$0xff]
      %v360 = vld [vmem:[%s298 + $0x90] sm:$0xff]
      %v361 = vld [vmem:[%s298 + $0x98] sm:$0xff]
      %v362 = vld [vmem:[%s298 + $0xa0] sm:$0xff]
      %v363 = vld [vmem:[%s298 + $0xa8] sm:$0xff]
      %v364 = vld [vmem:[%s298 + $0xb0] sm:$0xff]
      %v365 = vld [vmem:[%s298 + $0xb8] sm:$0xff]
      %v366 = vld [vmem:[%s298 + $0xc0] sm:$0xff]
      %v367 = vld [vmem:[%s298 + $0xc8] sm:$0xff]
      %v368 = vld [vmem:[%s298 + $0xd0] sm:$0xff]
      %v369 = vld [vmem:[%s298 + $0xd8] sm:$0xff]
      %v370 = vld [vmem:[%s298 + $0xe0] sm:$0xff]
      %v371 = vld [vmem:[%s298 + $0xe8] sm:$0xff]
      %v372 = vld [vmem:[%s298 + $0xf0] sm:$0xff]
      %v373 = vld [vmem:[%s298 + $0xf8] sm:$0xff]
      %v374 = vld [vmem:[%s3] sm:$0xff]
      %v375 = vld [vmem:[%s3 + $0x8] sm:$0xff]
      %v376 = vld [vmem:[%s3 + $0x10] sm:$0xff]
      %v377 = vld [vmem:[%s3 + $0x18] sm:$0xff]
      %vm378 = vcmask 261120
      %v380 = vsel %vm378, %v342, 0
      %v383 = vsel %vm378, %v343, 0
      %v386 = vsel %vm378, %v344, 0
      %v389 = vsel %vm378, %v345, 0
      %v392 = vsel %vm378, %v346, 0
      %v395 = vsel %vm378, %v347, 0
      %v398 = vsel %vm378, %v348, 0
      %v401 = vsel %vm378, %v349, 0
      %v404 = vsel %vm378, %v350, 0
      %v407 = vsel %vm378, %v351, 0
      %v410 = vsel %vm378, %v352, 0
      %v413 = vsel %vm378, %v353, 0
      %v416 = vsel %vm378, %v354, 0
      %v419 = vsel %vm378, %v355, 0
      %v422 = vsel %vm378, %v356, 0
      %v425 = vsel %vm378, %v357, 0
      %v428 = vsel %vm378, %v358, 0
      %v431 = vsel %vm378, %v359, 0
      %v434 = vsel %vm378, %v360, 0
      %v437 = vsel %vm378, %v361, 0
      %v440 = vsel %vm378, %v362, 0
      %v443 = vsel %vm378, %v363, 0
      %v446 = vsel %vm378, %v364, 0
      %v449 = vsel %vm378, %v365, 0
      %v452 = vsel %vm378, %v366, 0
      %v455 = vsel %vm378, %v367, 0
      %v458 = vsel %vm378, %v368, 0
      %v461 = vsel %vm378, %v369, 0
      %v464 = vsel %vm378, %v370, 0
      %v467 = vsel %vm378, %v371, 0
      %v470 = vsel %vm378, %v372, 0
      %v473 = vsel %vm378, %v373, 0
      %475 = vmatprep.subr.mxu0 0.0
      %v476 = vand.u32 %v374, 4294901760
      %477 = vmatpush1.msra.mxu0 %v476
      %478 = vmatprep.subr.mxu0 0.0
      %v479 = vand.u32 %v375, 4294901760
      %480 = vmatpush1.msra.mxu0 %v479
      %481 = vmatprep.subr.mxu0 0.0
      %v482 = vand.u32 %v376, 4294901760
      %483 = vmatpush1.msra.mxu0 %v482
      %484 = vmatprep.subr.mxu0 0.0
      %v485 = vand.u32 %v377, 4294901760
      %486 = vmatpush1.msra.mxu0 %v485
      %487 = vmatprep.subr.mxu0 0.0
      %488 = vmatpush1.msra.mxu0 0.0
      %489 = vmatprep.subr.mxu0 0.0
      %490 = vmatpush1.msra.mxu0 0.0
      %491 = vmatprep.subr.mxu0 0.0
      %492 = vmatpush1.msra.mxu0 0.0
      %493 = vmatprep.subr.mxu0 0.0
      %494 = vmatpush1.msra.mxu0 0.0
      %495 = vmatprep.subr.mxu0 0.0
      %496 = vmatpush1.msra.mxu0 0.0
      %497 = vmatprep.subr.mxu0 0.0
      %498 = vmatpush1.msra.mxu0 0.0
      %499 = vmatprep.subr.mxu0 0.0
      %500 = vmatpush1.msra.mxu0 0.0
      %501 = vmatprep.subr.mxu0 0.0
      %502 = vmatpush1.msra.mxu0 0.0
      %503 = vmatprep.subr.mxu0 0.0
      %504 = vmatpush1.msra.mxu0 0.0
      %505 = vmatprep.subr.mxu0 0.0
      %506 = vmatpush1.msra.mxu0 0.0
      %507 = vmatprep.subr.mxu0 0.0
      %508 = vmatpush1.msra.mxu0 0.0
      %509 = vmatprep.subr.mxu0 0.0
      %510 = vmatpush1.msra.mxu0 0.0
      %511 = vmatprep.subr.mxu0 0.0
      %512 = vmatpush1.msra.mxu0 0.0
      %513 = vmatprep.subr.mxu0 0.0
      %514 = vmatpush1.msra.mxu0 0.0
      %515 = vmatprep.subr.mxu0 0.0
      %516 = vmatpush1.msra.mxu0 0.0
      %517 = vmatprep.subr.mxu0 0.0
      %518 = vmatpush1.msra.mxu0 0.0
      %519 = vmatprep.subr.mxu0 0.0
      %520 = vmatpush1.msra.mxu0 0.0
      %521 = vmatprep.subr.mxu0 0.0
      %522 = vmatpush1.msra.mxu0 0.0
      %523 = vmatprep.subr.mxu0 0.0
      %524 = vmatpush1.msra.mxu0 0.0
      %525 = vmatprep.subr.mxu0 0.0
      %526 = vmatpush1.msra.mxu0 0.0
      %527 = vmatprep.subr.mxu0 0.0
      %528 = vmatpush1.msra.mxu0 0.0
      %529 = vmatprep.subr.mxu0 0.0
      %530 = vmatpush1.msra.mxu0 0.0
      %531 = vmatprep.subr.mxu0 0.0
      %532 = vmatpush1.msra.mxu0 0.0
      %533 = vmatprep.subr.mxu0 0.0
      %534 = vmatpush1.msra.mxu0 0.0
      %535 = vmatprep.subr.mxu0 0.0
      %536 = vmatpush1.msra.mxu0 0.0
      %537 = vmatprep.subr.mxu0 0.0
      %538 = vmatpush1.msra.mxu0 0.0
      %539 = vmatprep.subr.mxu0 0.0
      %540 = vmatpush1.msra.mxu0 0.0
      %541 = vmatprep.subr.mxu0 0.0
      %542 = vmatpush1.msra.mxu0 0.0
      %543 = vmatprep.mubr.f32.mxu0 0.0
      %v544 = vand.u32 %v380, 4294901760
      %v545 = vsub.f32 %v380, %v544
      %v546 = vand.u32 %v545, 4294901760
      %v547 = vsub.f32 %v545, %v546
      %v548 = vand.u32 %v547, 4294901760
      %549 = vmatmul.mubr.f32.gmra.mrb[0].mxu0 %v548
      %v550 = vpop.f32.mrb[0].mxu0
      %v551 = vadd.f32 0.0, %v550
      %v552 = vpop.f32.mrb[0].mxu0
      %553 = vmatprep.mubr.f32.mxu0 0.0
      %v554 = vand.u32 %v383, 4294901760
      %v555 = vsub.f32 %v383, %v554
      %v556 = vand.u32 %v555, 4294901760
      %v557 = vsub.f32 %v555, %v556
      %v558 = vand.u32 %v557, 4294901760
      %559 = vmatmul.mubr.f32.gmra.mrb[0].mxu0 %v558
      %v560 = vpop.f32.mrb[0].mxu0
      %v561 = vadd.f32 0.0, %v560
      %v562 = vpop.f32.mrb[0].mxu0
      %563 = vmatprep.mubr.f32.mxu0 0.0
      %v564 = vand.u32 %v386, 4294901760
      %v565 = vsub.f32 %v386, %v564
      %v566 = vand.u32 %v565, 4294901760
      %v567 = vsub.f32 %v565, %v566
      %v568 = vand.u32 %v567, 4294901760
      %569 = vmatmul.mubr.f32.gmra.mrb[0].mxu0 %v568
      %v570 = vpop.f32.mrb[0].mxu0
      %v571 = vadd.f32 0.0, %v570
      %v572 = vpop.f32.mrb[0].mxu0
      %573 = vmatprep.mubr.f32.mxu0 0.0
      %v574 = vand.u32 %v389, 4294901760
      %v575 = vsub.f32 %v389, %v574
      %v576 = vand.u32 %v575, 4294901760
      %v577 = vsub.f32 %v575, %v576
      %v578 = vand.u32 %v577, 4294901760
      %579 = vmatmul.mubr.f32.gmra.mrb[0].mxu0 %v578
      %v580 = vpop.f32.mrb[0].mxu0
      %v581 = vadd.f32 0.0, %v580
      %v582 = vpop.f32.mrb[0].mxu0
      %583 = vmatprep.mubr.f32.mxu0 0.0
      %v584 = vand.u32 %v392, 4294901760
      %v585 = vsub.f32 %v392, %v584
      %v586 = vand.u32 %v585, 4294901760
      %v587 = vsub.f32 %v585, %v586
      %v588 = vand.u32 %v587, 4294901760
      %589 = vmatmul.mubr.f32.gmra.mrb[0].mxu0 %v588
      %v590 = vpop.f32.mrb[0].mxu0
      %v591 = vadd.f32 0.0, %v590
      %v592 = vpop.f32.mrb[0].mxu0
      %593 = vmatprep.mubr.f32.mxu0 0.0
      %v594 = vand.u32 %v395, 4294901760
      %v595 = vsub.f32 %v395, %v594
      %v596 = vand.u32 %v595, 4294901760
      %v597 = vsub.f32 %v595, %v596
      %v598 = vand.u32 %v597, 4294901760
      %599 = vmatmul.mubr.f32.gmra.mrb[0].mxu0 %v598
      %v600 = vpop.f32.mrb[0].mxu0
      %v601 = vadd.f32 0.0, %v600
      %v602 = vpop.f32.mrb[0].mxu0
      %603 = vmatprep.mubr.f32.mxu0 0.0
      %v604 = vand.u32 %v398, 4294901760
      %v605 = vsub.f32 %v398, %v604
      %v606 = vand.u32 %v605, 4294901760
      %v607 = vsub.f32 %v605, %v606
      %v608 = vand.u32 %v607, 4294901760
      %609 = vmatmul.mubr.f32.gmra.mrb[0].mxu0 %v608
      %v610 = vpop.f32.mrb[0].mxu0
      %v611 = vadd.f32 0.0, %v610
      %v612 = vpop.f32.mrb[0].mxu0
      %613 = vmatprep.mubr.f32.mxu0 0.0
      %v614 = vand.u32 %v401, 4294901760
      %v615 = vsub.f32 %v401, %v614
      %v616 = vand.u32 %v615, 4294901760
      %v617 = vsub.f32 %v615, %v616
      %v618 = vand.u32 %v617, 4294901760
      %619 = vmatmul.mubr.f32.gmra.mrb[0].mxu0 %v618
      %v620 = vpop.f32.mrb[0].mxu0
      %v621 = vadd.f32 0.0, %v620
      %v622 = vpop.f32.mrb[0].mxu0
      %623 = vmatprep.mubr.f32.mxu0 0.0
      %v624 = vand.u32 %v404, 4294901760
      %v625 = vsub.f32 %v404, %v624
      %v626 = vand.u32 %v625, 4294901760
      %v627 = vsub.f32 %v625, %v626
      %v628 = vand.u32 %v627, 4294901760
      %629 = vmatmul.mubr.f32.gmra.mrb[0].mxu0 %v628
      %v630 = vpop.f32.mrb[0].mxu0
      %v631 = vadd.f32 0.0, %v630
      %v632 = vpop.f32.mrb[0].mxu0
      %633 = vmatprep.mubr.f32.mxu0 0.0
      %v634 = vand.u32 %v407, 4294901760
      %v635 = vsub.f32 %v407, %v634
      %v636 = vand.u32 %v635, 4294901760
      %v637 = vsub.f32 %v635, %v636
      %v638 = vand.u32 %v637, 4294901760
      %639 = vmatmul.mubr.f32.gmra.mrb[0].mxu0 %v638
      %v640 = vpop.f32.mrb[0].mxu0
      %v641 = vadd.f32 0.0, %v640
      %v642 = vpop.f32.mrb[0].mxu0
      %643 = vmatprep.mubr.f32.mxu0 0.0
      %v644 = vand.u32 %v410, 4294901760
      %v645 = vsub.f32 %v410, %v644
      %v646 = vand.u32 %v645, 4294901760
      %v647 = vsub.f32 %v645, %v646
      %v648 = vand.u32 %v647, 4294901760
      %649 = vmatmul.mubr.f32.gmra.mrb[0].mxu0 %v648
      %v650 = vpop.f32.mrb[0].mxu0
      %v651 = vadd.f32 0.0, %v650
      %v652 = vpop.f32.mrb[0].mxu0
      %653 = vmatprep.mubr.f32.mxu0 0.0
      %v654 = vand.u32 %v413, 4294901760
      %v655 = vsub.f32 %v413, %v654
      %v656 = vand.u32 %v655, 4294901760
      %v657 = vsub.f32 %v655, %v656
      %v658 = vand.u32 %v657, 4294901760
      %659 = vmatmul.mubr.f32.gmra.mrb[0].mxu0 %v658
      %v660 = vpop.f32.mrb[0].mxu0
      %v661 = vadd.f32 0.0, %v660
      %v662 = vpop.f32.mrb[0].mxu0
      %663 = vmatprep.mubr.f32.mxu0 0.0
      %v664 = vand.u32 %v416, 4294901760
      %v665 = vsub.f32 %v416, %v664
      %v666 = vand.u32 %v665, 4294901760
      %v667 = vsub.f32 %v665, %v666
      %v668 = vand.u32 %v667, 4294901760
      %669 = vmatmul.mubr.f32.gmra.mrb[0].mxu0 %v668
      %v670 = vpop.f32.mrb[0].mxu0
      %v671 = vadd.f32 0.0, %v670
      %v672 = vpop.f32.mrb[0].mxu0
      %673 = vmatprep.mubr.f32.mxu0 0.0
      %v674 = vand.u32 %v419, 4294901760
      %v675 = vsub.f32 %v419, %v674
      %v676 = vand.u32 %v675, 4294901760
      %v677 = vsub.f32 %v675, %v676
      %v678 = vand.u32 %v677, 4294901760
      %679 = vmatmul.mubr.f32.gmra.mrb[0].mxu0 %v678
      %v680 = vpop.f32.mrb[0].mxu0
      %v681 = vadd.f32 0.0, %v680
      %v682 = vpop.f32.mrb[0].mxu0
      %683 = vmatprep.mubr.f32.mxu0 0.0
      %v684 = vand.u32 %v422, 4294901760
      %v685 = vsub.f32 %v422, %v684
      %v686 = vand.u32 %v685, 4294901760
      %v687 = vsub.f32 %v685, %v686
      %v688 = vand.u32 %v687, 4294901760
      %689 = vmatmul.mubr.f32.gmra.mrb[0].mxu0 %v688
      %v690 = vpop.f32.mrb[0].mxu0
      %v691 = vadd.f32 0.0, %v690
      %v692 = vpop.f32.mrb[0].mxu0
      %693 = vmatprep.mubr.f32.mxu0 0.0
      %v694 = vand.u32 %v425, 4294901760
      %v695 = vsub.f32 %v425, %v694
      %v696 = vand.u32 %v695, 4294901760
      %v697 = vsub.f32 %v695, %v696
      %v698 = vand.u32 %v697, 4294901760
      %699 = vmatmul.mubr.f32.gmra.mrb[0].mxu0 %v698
      %v700 = vpop.f32.mrb[0].mxu0
      %v701 = vadd.f32 0.0, %v700
      %v702 = vpop.f32.mrb[0].mxu0
      %703 = vmatprep.mubr.f32.mxu0 0.0
      %v704 = vand.u32 %v428, 4294901760
      %v705 = vsub.f32 %v428, %v704
      %v706 = vand.u32 %v705, 4294901760
      %v707 = vsub.f32 %v705, %v706
      %v708 = vand.u32 %v707, 4294901760
      %709 = vmatmul.mubr.f32.gmra.mrb[0].mxu0 %v708
      %v710 = vpop.f32.mrb[0].mxu0
      %v711 = vadd.f32 0.0, %v710
      %v712 = vpop.f32.mrb[0].mxu0
      %713 = vmatprep.mubr.f32.mxu0 0.0
      %v714 = vand.u32 %v431, 4294901760
      %v715 = vsub.f32 %v431, %v714
      %v716 = vand.u32 %v715, 4294901760
      %v717 = vsub.f32 %v715, %v716
      %v718 = vand.u32 %v717, 4294901760
      %719 = vmatmul.mubr.f32.gmra.mrb[0].mxu0 %v718
      %v720 = vpop.f32.mrb[0].mxu0
      %v721 = vadd.f32 0.0, %v720
      %v722 = vpop.f32.mrb[0].mxu0
      %723 = vmatprep.mubr.f32.mxu0 0.0
      %v724 = vand.u32 %v434, 4294901760
      %v725 = vsub.f32 %v434, %v724
      %v726 = vand.u32 %v725, 4294901760
      %v727 = vsub.f32 %v725, %v726
      %v728 = vand.u32 %v727, 4294901760
      %729 = vmatmul.mubr.f32.gmra.mrb[0].mxu0 %v728
      %v730 = vpop.f32.mrb[0].mxu0
      %v731 = vadd.f32 0.0, %v730
      %v732 = vpop.f32.mrb[0].mxu0
      %733 = vmatprep.mubr.f32.mxu0 0.0
      %v734 = vand.u32 %v437, 4294901760
      %v735 = vsub.f32 %v437, %v734
      %v736 = vand.u32 %v735, 4294901760
      %v737 = vsub.f32 %v735, %v736
      %v738 = vand.u32 %v737, 4294901760
      %739 = vmatmul.mubr.f32.gmra.mrb[0].mxu0 %v738
      %v740 = vpop.f32.mrb[0].mxu0
      %v741 = vadd.f32 0.0, %v740
      %v742 = vpop.f32.mrb[0].mxu0
      %743 = vmatprep.mubr.f32.mxu0 0.0
      %v744 = vand.u32 %v440, 4294901760
      %v745 = vsub.f32 %v440, %v744
      %v746 = vand.u32 %v745, 4294901760
      %v747 = vsub.f32 %v745, %v746
      %v748 = vand.u32 %v747, 4294901760
      %749 = vmatmul.mubr.f32.gmra.mrb[0].mxu0 %v748
      %v750 = vpop.f32.mrb[0].mxu0
      %v751 = vadd.f32 0.0, %v750
      %v752 = vpop.f32.mrb[0].mxu0
      %753 = vmatprep.mubr.f32.mxu0 0.0
      %v754 = vand.u32 %v443, 4294901760
      %v755 = vsub.f32 %v443, %v754
      %v756 = vand.u32 %v755, 4294901760
      %v757 = vsub.f32 %v755, %v756
      %v758 = vand.u32 %v757, 4294901760
      %759 = vmatmul.mubr.f32.gmra.mrb[0].mxu0 %v758
      %v760 = vpop.f32.mrb[0].mxu0
      %v761 = vadd.f32 0.0, %v760
      %v762 = vpop.f32.mrb[0].mxu0
      %763 = vmatprep.mubr.f32.mxu0 0.0
      %v764 = vand.u32 %v446, 4294901760
      %v765 = vsub.f32 %v446, %v764
      %v766 = vand.u32 %v765, 4294901760
      %v767 = vsub.f32 %v765, %v766
      %v768 = vand.u32 %v767, 4294901760
      %769 = vmatmul.mubr.f32.gmra.mrb[0].mxu0 %v768
      %v770 = vpop.f32.mrb[0].mxu0
      %v771 = vadd.f32 0.0, %v770
      %v772 = vpop.f32.mrb[0].mxu0
      %773 = vmatprep.mubr.f32.mxu0 0.0
      %v774 = vand.u32 %v449, 4294901760
      %v775 = vsub.f32 %v449, %v774
      %v776 = vand.u32 %v775, 4294901760
      %v777 = vsub.f32 %v775, %v776
      %v778 = vand.u32 %v777, 4294901760
      %779 = vmatmul.mubr.f32.gmra.mrb[0].mxu0 %v778
      %v780 = vpop.f32.mrb[0].mxu0
      %v781 = vadd.f32 0.0, %v780
      %v782 = vpop.f32.mrb[0].mxu0
      %783 = vmatprep.mubr.f32.mxu0 0.0
      %v784 = vand.u32 %v452, 4294901760
      %v785 = vsub.f32 %v452, %v784
      %v786 = vand.u32 %v785, 4294901760
      %v787 = vsub.f32 %v785, %v786
      %v788 = vand.u32 %v787, 4294901760
      %789 = vmatmul.mubr.f32.gmra.mrb[0].mxu0 %v788
      %v790 = vpop.f32.mrb[0].mxu0
      %v791 = vadd.f32 0.0, %v790
      %v792 = vpop.f32.mrb[0].mxu0
      %793 = vmatprep.mubr.f32.mxu0 0.0
      %v794 = vand.u32 %v455, 4294901760
      %v795 = vsub.f32 %v455, %v794
      %v796 = vand.u32 %v795, 4294901760
      %v797 = vsub.f32 %v795, %v796
      %v798 = vand.u32 %v797, 4294901760
      %799 = vmatmul.mubr.f32.gmra.mrb[0].mxu0 %v798
      %v800 = vpop.f32.mrb[0].mxu0
      %v801 = vadd.f32 0.0, %v800
      %v802 = vpop.f32.mrb[0].mxu0
      %803 = vmatprep.mubr.f32.mxu0 0.0
      %v804 = vand.u32 %v458, 4294901760
      %v805 = vsub.f32 %v458, %v804
      %v806 = vand.u32 %v805, 4294901760
      %v807 = vsub.f32 %v805, %v806
      %v808 = vand.u32 %v807, 4294901760
      %809 = vmatmul.mubr.f32.gmra.mrb[0].mxu0 %v808
      %v810 = vpop.f32.mrb[0].mxu0
      %v811 = vadd.f32 0.0, %v810
      %v812 = vpop.f32.mrb[0].mxu0
      %813 = vmatprep.mubr.f32.mxu0 0.0
      %v814 = vand.u32 %v461, 4294901760
      %v815 = vsub.f32 %v461, %v814
      %v816 = vand.u32 %v815, 4294901760
      %v817 = vsub.f32 %v815, %v816
      %v818 = vand.u32 %v817, 4294901760
      %819 = vmatmul.mubr.f32.gmra.mrb[0].mxu0 %v818
      %v820 = vpop.f32.mrb[0].mxu0
      %v821 = vadd.f32 0.0, %v820
      %v822 = vpop.f32.mrb[0].mxu0
      %823 = vmatprep.mubr.f32.mxu0 0.0
      %v824 = vand.u32 %v464, 4294901760
      %v825 = vsub.f32 %v464, %v824
      %v826 = vand.u32 %v825, 4294901760
      %v827 = vsub.f32 %v825, %v826
      %v828 = vand.u32 %v827, 4294901760
      %829 = vmatmul.mubr.f32.gmra.mrb[0].mxu0 %v828
      %v830 = vpop.f32.mrb[0].mxu0
      %v831 = vadd.f32 0.0, %v830
      %v832 = vpop.f32.mrb[0].mxu0
      %833 = vmatprep.mubr.f32.mxu0 0.0
      %v834 = vand.u32 %v467, 4294901760
      %v835 = vsub.f32 %v467, %v834
      %v836 = vand.u32 %v835, 4294901760
      %v837 = vsub.f32 %v835, %v836
      %v838 = vand.u32 %v837, 4294901760
      %839 = vmatmul.mubr.f32.gmra.mrb[0].mxu0 %v838
      %v840 = vpop.f32.mrb[0].mxu0
      %v841 = vadd.f32 0.0, %v840
      %v842 = vpop.f32.mrb[0].mxu0
      %843 = vmatprep.mubr.f32.mxu0 0.0
      %v844 = vand.u32 %v470, 4294901760
      %v845 = vsub.f32 %v470, %v844
      %v846 = vand.u32 %v845, 4294901760
      %v847 = vsub.f32 %v845, %v846
      %v848 = vand.u32 %v847, 4294901760
      %849 = vmatmul.mubr.f32.gmra.mrb[0].mxu0 %v848
      %v850 = vpop.f32.mrb[0].mxu0
      %v851 = vadd.f32 0.0, %v850
      %v852 = vpop.f32.mrb[0].mxu0
      %853 = vmatprep.mubr.f32.mxu0 0.0
      %v854 = vand.u32 %v473, 4294901760
      %v855 = vsub.f32 %v473, %v854
      %v856 = vand.u32 %v855, 4294901760
      %v857 = vsub.f32 %v855, %v856
      %v858 = vand.u32 %v857, 4294901760
      %859 = vmatmul.mubr.f32.gmra.mrb[0].mxu0 %v858
      %v860 = vpop.f32.mrb[0].mxu0
      %v861 = vadd.f32 0.0, %v860
      %v862 = vpop.f32.mrb[0].mxu0
      %863 = vdwg.mxu0
      %864 = vmatprep.subr.mxu0 0.0
      %v865 = vand.u32 %v374, 4294901760
      %v866 = vsub.f32 %v374, %v865
      %v867 = vand.u32 %v866, 4294901760
      %v868 = vsub.f32 %v866, %v867
      %v869 = vand.u32 %v868, 4294901760
      %870 = vmatpush1.msra.mxu0 %v869
      %871 = vmatprep.subr.mxu0 0.0
      %v872 = vand.u32 %v375, 4294901760
      %v873 = vsub.f32 %v375, %v872
      %v874 = vand.u32 %v873, 4294901760
      %v875 = vsub.f32 %v873, %v874
      %v876 = vand.u32 %v875, 4294901760
      %877 = vmatpush1.msra.mxu0 %v876
      %878 = vmatprep.subr.mxu0 0.0
      %v879 = vand.u32 %v376, 4294901760
      %v880 = vsub.f32 %v376, %v879
      %v881 = vand.u32 %v880, 4294901760
      %v882 = vsub.f32 %v880, %v881
      %v883 = vand.u32 %v882, 4294901760
      %884 = vmatpush1.msra.mxu0 %v883
      %885 = vmatprep.subr.mxu0 0.0
      %v886 = vand.u32 %v377, 4294901760
      %v887 = vsub.f32 %v377, %v886
      %v888 = vand.u32 %v887, 4294901760
      %v889 = vsub.f32 %v887, %v888
      %v890 = vand.u32 %v889, 4294901760
      %891 = vmatpush1.msra.mxu0 %v890
      %892 = vmatprep.subr.mxu0 0.0
      %893 = vmatpush1.msra.mxu0 0.0
      %894 = vmatprep.subr.mxu0 0.0
      %895 = vmatpush1.msra.mxu0 0.0
      %896 = vmatprep.subr.mxu0 0.0
      %897 = vmatpush1.msra.mxu0 0.0
      %898 = vmatprep.subr.mxu0 0.0
      %899 = vmatpush1.msra.mxu0 0.0
      %900 = vmatprep.subr.mxu0 0.0
      %901 = vmatpush1.msra.mxu0 0.0
      %902 = vmatprep.subr.mxu0 0.0
      %903 = vmatpush1.msra.mxu0 0.0
      %904 = vmatprep.subr.mxu0 0.0
      %905 = vmatpush1.msra.mxu0 0.0
      %906 = vmatprep.subr.mxu0 0.0
      %907 = vmatpush1.msra.mxu0 0.0
      %908 = vmatprep.subr.mxu0 0.0
      %909 = vmatpush1.msra.mxu0 0.0
      %910 = vmatprep.subr.mxu0 0.0
      %911 = vmatpush1.msra.mxu0 0.0
      %912 = vmatprep.subr.mxu0 0.0
      %913 = vmatpush1.msra.mxu0 0.0
      %914 = vmatprep.subr.mxu0 0.0
      %915 = vmatpush1.msra.mxu0 0.0
      %916 = vmatprep.subr.mxu0 0.0
      %917 = vmatpush1.msra.mxu0 0.0
      %918 = vmatprep.subr.mxu0 0.0
      %919 = vmatpush1.msra.mxu0 0.0
      %920 = vmatprep.subr.mxu0 0.0
      %921 = vmatpush1.msra.mxu0 0.0
      %922 = vmatprep.subr.mxu0 0.0
      %923 = vmatpush1.msra.mxu0 0.0
      %924 = vmatprep.subr.mxu0 0.0
      %925 = vmatpush1.msra.mxu0 0.0
      %926 = vmatprep.subr.mxu0 0.0
      %927 = vmatpush1.msra.mxu0 0.0
      %928 = vmatprep.subr.mxu0 0.0
      %929 = vmatpush1.msra.mxu0 0.0
      %930 = vmatprep.subr.mxu0 0.0
      %931 = vmatpush1.msra.mxu0 0.0
      %932 = vmatprep.subr.mxu0 0.0
      %933 = vmatpush1.msra.mxu0 0.0
      %934 = vmatprep.subr.mxu0 0.0
      %935 = vmatpush1.msra.mxu0 0.0
      %936 = vmatprep.subr.mxu0 0.0
      %937 = vmatpush1.msra.mxu0 0.0
      %938 = vmatprep.subr.mxu0 0.0
      %939 = vmatpush1.msra.mxu0 0.0
      %940 = vmatprep.subr.mxu0 0.0
      %941 = vmatpush1.msra.mxu0 0.0
      %942 = vmatprep.subr.mxu0 0.0
      %943 = vmatpush1.msra.mxu0 0.0
      %944 = vmatprep.subr.mxu0 0.0
      %945 = vmatpush1.msra.mxu0 0.0
      %946 = vmatprep.subr.mxu0 0.0
      %947 = vmatpush1.msra.mxu0 0.0
      %948 = vmatprep.mubr.f32.mxu0 0.0
      %v949 = vand.u32 %v380, 4294901760
      %950 = vmatmul.mubr.f32.gmra.mrb[0].mxu0 %v949
      %v951 = vpop.f32.mrb[0].mxu0
      %v952 = vadd.f32 %v551, %v951
      %v953 = vpop.f32.mrb[0].mxu0
      %954 = vmatprep.mubr.f32.mxu0 0.0
      %v955 = vand.u32 %v383, 4294901760
      %956 = vmatmul.mubr.f32.gmra.mrb[0].mxu0 %v955
      %v957 = vpop.f32.mrb[0].mxu0
      %v958 = vadd.f32 %v561, %v957
      %v959 = vpop.f32.mrb[0].mxu0
      %960 = vmatprep.mubr.f32.mxu0 0.0
      %v961 = vand.u32 %v386, 4294901760
      %962 = vmatmul.mubr.f32.gmra.mrb[0].mxu0 %v961
      %v963 = vpop.f32.mrb[0].mxu0
      %v964 = vadd.f32 %v571, %v963
      %v965 = vpop.f32.mrb[0].mxu0
      %966 = vmatprep.mubr.f32.mxu0 0.0
      %v967 = vand.u32 %v389, 4294901760
      %968 = vmatmul.mubr.f32.gmra.mrb[0].mxu0 %v967
      %v969 = vpop.f32.mrb[0].mxu0
      %v970 = vadd.f32 %v581, %v969
      %v971 = vpop.f32.mrb[0].mxu0
      %972 = vmatprep.mubr.f32.mxu0 0.0
      %v973 = vand.u32 %v392, 4294901760
      %974 = vmatmul.mubr.f32.gmra.mrb[0].mxu0 %v973
      %v975 = vpop.f32.mrb[0].mxu0
      %v976 = vadd.f32 %v591, %v975
      %v977 = vpop.f32.mrb[0].mxu0
      %978 = vmatprep.mubr.f32.mxu0 0.0
      %v979 = vand.u32 %v395, 4294901760
      %980 = vmatmul.mubr.f32.gmra.mrb[0].mxu0 %v979
      %v981 = vpop.f32.mrb[0].mxu0
      %v982 = vadd.f32 %v601, %v981
      %v983 = vpop.f32.mrb[0].mxu0
      %984 = vmatprep.mubr.f32.mxu0 0.0
      %v985 = vand.u32 %v398, 4294901760
      %986 = vmatmul.mubr.f32.gmra.mrb[0].mxu0 %v985
      %v987 = vpop.f32.mrb[0].mxu0
      %v988 = vadd.f32 %v611, %v987
      %v989 = vpop.f32.mrb[0].mxu0
      %990 = vmatprep.mubr.f32.mxu0 0.0
      %v991 = vand.u32 %v401, 4294901760
      %992 = vmatmul.mubr.f32.gmra.mrb[0].mxu0 %v991
      %v993 = vpop.f32.mrb[0].mxu0
      %v994 = vadd.f32 %v621, %v993
      %v995 = vpop.f32.mrb[0].mxu0
      %996 = vmatprep.mubr.f32.mxu0 0.0
      %v997 = vand.u32 %v404, 4294901760
      %998 = vmatmul.mubr.f32.gmra.mrb[0].mxu0 %v997
      %v999 = vpop.f32.mrb[0].mxu0
      %v1000 = vadd.f32 %v631, %v999
      %v1001 = vpop.f32.mrb[0].mxu0
      %1002 = vmatprep.mubr.f32.mxu0 0.0
      %v1003 = vand.u32 %v407, 4294901760
      %1004 = vmatmul.mubr.f32.gmra.mrb[0].mxu0 %v1003
      %v1005 = vpop.f32.mrb[0].mxu0
      %v1006 = vadd.f32 %v641, %v1005
      %v1007 = vpop.f32.mrb[0].mxu0
      %1008 = vmatprep.mubr.f32.mxu0 0.0
      %v1009 = vand.u32 %v410, 4294901760
      %1010 = vmatmul.mubr.f32.gmra.mrb[0].mxu0 %v1009
      %v1011 = vpop.f32.mrb[0].mxu0
      %v1012 = vadd.f32 %v651, %v1011
      %v1013 = vpop.f32.mrb[0].mxu0
      %1014 = vmatprep.mubr.f32.mxu0 0.0
      %v1015 = vand.u32 %v413, 4294901760
      %1016 = vmatmul.mubr.f32.gmra.mrb[0].mxu0 %v1015
      %v1017 = vpop.f32.mrb[0].mxu0
      %v1018 = vadd.f32 %v661, %v1017
      %v1019 = vpop.f32.mrb[0].mxu0
      %1020 = vmatprep.mubr.f32.mxu0 0.0
      %v1021 = vand.u32 %v416, 4294901760
      %1022 = vmatmul.mubr.f32.gmra.mrb[0].mxu0 %v1021
      %v1023 = vpop.f32.mrb[0].mxu0
      %v1024 = vadd.f32 %v671, %v1023
      %v1025 = vpop.f32.mrb[0].mxu0
      %1026 = vmatprep.mubr.f32.mxu0 0.0
      %v1027 = vand.u32 %v419, 4294901760
      %1028 = vmatmul.mubr.f32.gmra.mrb[0].mxu0 %v1027
      %v1029 = vpop.f32.mrb[0].mxu0
      %v1030 = vadd.f32 %v681, %v1029
      %v1031 = vpop.f32.mrb[0].mxu0
      %1032 = vmatprep.mubr.f32.mxu0 0.0
      %v1033 = vand.u32 %v422, 4294901760
      %1034 = vmatmul.mubr.f32.gmra.mrb[0].mxu0 %v1033
      %v1035 = vpop.f32.mrb[0].mxu0
      %v1036 = vadd.f32 %v691, %v1035
      %v1037 = vpop.f32.mrb[0].mxu0
      %1038 = vmatprep.mubr.f32.mxu0 0.0
      %v1039 = vand.u32 %v425, 4294901760
      %1040 = vmatmul.mubr.f32.gmra.mrb[0].mxu0 %v1039
      %v1041 = vpop.f32.mrb[0].mxu0
      %v1042 = vadd.f32 %v701, %v1041
      %v1043 = vpop.f32.mrb[0].mxu0
      %1044 = vmatprep.mubr.f32.mxu0 0.0
      %v1045 = vand.u32 %v428, 4294901760
      %1046 = vmatmul.mubr.f32.gmra.mrb[0].mxu0 %v1045
      %v1047 = vpop.f32.mrb[0].mxu0
      %v1048 = vadd.f32 %v711, %v1047
      %v1049 = vpop.f32.mrb[0].mxu0
      %1050 = vmatprep.mubr.f32.mxu0 0.0
      %v1051 = vand.u32 %v431, 4294901760
      %1052 = vmatmul.mubr.f32.gmra.mrb[0].mxu0 %v1051
      %v1053 = vpop.f32.mrb[0].mxu0
      %v1054 = vadd.f32 %v721, %v1053
      %v1055 = vpop.f32.mrb[0].mxu0
      %1056 = vmatprep.mubr.f32.mxu0 0.0
      %v1057 = vand.u32 %v434, 4294901760
      %1058 = vmatmul.mubr.f32.gmra.mrb[0].mxu0 %v1057
      %v1059 = vpop.f32.mrb[0].mxu0
      %v1060 = vadd.f32 %v731, %v1059
      %v1061 = vpop.f32.mrb[0].mxu0
      %1062 = vmatprep.mubr.f32.mxu0 0.0
      %v1063 = vand.u32 %v437, 4294901760
      %1064 = vmatmul.mubr.f32.gmra.mrb[0].mxu0 %v1063
      %v1065 = vpop.f32.mrb[0].mxu0
      %v1066 = vadd.f32 %v741, %v1065
      %v1067 = vpop.f32.mrb[0].mxu0
      %1068 = vmatprep.mubr.f32.mxu0 0.0
      %v1069 = vand.u32 %v440, 4294901760
      %1070 = vmatmul.mubr.f32.gmra.mrb[0].mxu0 %v1069
      %v1071 = vpop.f32.mrb[0].mxu0
      %v1072 = vadd.f32 %v751, %v1071
      %v1073 = vpop.f32.mrb[0].mxu0
      %1074 = vmatprep.mubr.f32.mxu0 0.0
      %v1075 = vand.u32 %v443, 4294901760
      %1076 = vmatmul.mubr.f32.gmra.mrb[0].mxu0 %v1075
      %v1077 = vpop.f32.mrb[0].mxu0
      %v1078 = vadd.f32 %v761, %v1077
      %v1079 = vpop.f32.mrb[0].mxu0
      %1080 = vmatprep.mubr.f32.mxu0 0.0
      %v1081 = vand.u32 %v446, 4294901760
      %1082 = vmatmul.mubr.f32.gmra.mrb[0].mxu0 %v1081
      %v1083 = vpop.f32.mrb[0].mxu0
      %v1084 = vadd.f32 %v771, %v1083
      %v1085 = vpop.f32.mrb[0].mxu0
      %1086 = vmatprep.mubr.f32.mxu0 0.0
      %v1087 = vand.u32 %v449, 4294901760
      %1088 = vmatmul.mubr.f32.gmra.mrb[0].mxu0 %v1087
      %v1089 = vpop.f32.mrb[0].mxu0
      %v1090 = vadd.f32 %v781, %v1089
      %v1091 = vpop.f32.mrb[0].mxu0
      %1092 = vmatprep.mubr.f32.mxu0 0.0
      %v1093 = vand.u32 %v452, 4294901760
      %1094 = vmatmul.mubr.f32.gmra.mrb[0].mxu0 %v1093
      %v1095 = vpop.f32.mrb[0].mxu0
      %v1096 = vadd.f32 %v791, %v1095
      %v1097 = vpop.f32.mrb[0].mxu0
      %1098 = vmatprep.mubr.f32.mxu0 0.0
      %v1099 = vand.u32 %v455, 4294901760
      %1100 = vmatmul.mubr.f32.gmra.mrb[0].mxu0 %v1099
      %v1101 = vpop.f32.mrb[0].mxu0
      %v1102 = vadd.f32 %v801, %v1101
      %v1103 = vpop.f32.mrb[0].mxu0
      %1104 = vmatprep.mubr.f32.mxu0 0.0
      %v1105 = vand.u32 %v458, 4294901760
      %1106 = vmatmul.mubr.f32.gmra.mrb[0].mxu0 %v1105
      %v1107 = vpop.f32.mrb[0].mxu0
      %v1108 = vadd.f32 %v811, %v1107
      %v1109 = vpop.f32.mrb[0].mxu0
      %1110 = vmatprep.mubr.f32.mxu0 0.0
      %v1111 = vand.u32 %v461, 4294901760
      %1112 = vmatmul.mubr.f32.gmra.mrb[0].mxu0 %v1111
      %v1113 = vpop.f32.mrb[0].mxu0
      %v1114 = vadd.f32 %v821, %v1113
      %v1115 = vpop.f32.mrb[0].mxu0
      %1116 = vmatprep.mubr.f32.mxu0 0.0
      %v1117 = vand.u32 %v464, 4294901760
      %1118 = vmatmul.mubr.f32.gmra.mrb[0].mxu0 %v1117
      %v1119 = vpop.f32.mrb[0].mxu0
      %v1120 = vadd.f32 %v831, %v1119
      %v1121 = vpop.f32.mrb[0].mxu0
      %1122 = vmatprep.mubr.f32.mxu0 0.0
      %v1123 = vand.u32 %v467, 4294901760
      %1124 = vmatmul.mubr.f32.gmra.mrb[0].mxu0 %v1123
      %v1125 = vpop.f32.mrb[0].mxu0
      %v1126 = vadd.f32 %v841, %v1125
      %v1127 = vpop.f32.mrb[0].mxu0
      %1128 = vmatprep.mubr.f32.mxu0 0.0
      %v1129 = vand.u32 %v470, 4294901760
      %1130 = vmatmul.mubr.f32.gmra.mrb[0].mxu0 %v1129
      %v1131 = vpop.f32.mrb[0].mxu0
      %v1132 = vadd.f32 %v851, %v1131
      %v1133 = vpop.f32.mrb[0].mxu0
      %1134 = vmatprep.mubr.f32.mxu0 0.0
      %v1135 = vand.u32 %v473, 4294901760
      %1136 = vmatmul.mubr.f32.gmra.mrb[0].mxu0 %v1135
      %v1137 = vpop.f32.mrb[0].mxu0
      %v1138 = vadd.f32 %v861, %v1137
      %v1139 = vpop.f32.mrb[0].mxu0
      %1140 = vdwg.mxu0
      %1141 = vmatprep.subr.mxu0 0.0
      %v1142 = vand.u32 %v374, 4294901760
      %v1143 = vsub.f32 %v374, %v1142
      %1144 = vmatpush1.msra.mxu0 %v1143
      %1145 = vmatprep.subr.mxu0 0.0
      %v1146 = vand.u32 %v375, 4294901760
      %v1147 = vsub.f32 %v375, %v1146
      %1148 = vmatpush1.msra.mxu0 %v1147
      %1149 = vmatprep.subr.mxu0 0.0
      %v1150 = vand.u32 %v376, 4294901760
      %v1151 = vsub.f32 %v376, %v1150
      %1152 = vmatpush1.msra.mxu0 %v1151
      %1153 = vmatprep.subr.mxu0 0.0
      %v1154 = vand.u32 %v377, 4294901760
      %v1155 = vsub.f32 %v377, %v1154
      %1156 = vmatpush1.msra.mxu0 %v1155
      %1157 = vmatprep.subr.mxu0 0.0
      %1158 = vmatpush1.msra.mxu0 0.0
      %1159 = vmatprep.subr.mxu0 0.0
      %1160 = vmatpush1.msra.mxu0 0.0
      %1161 = vmatprep.subr.mxu0 0.0
      %1162 = vmatpush1.msra.mxu0 0.0
      %1163 = vmatprep.subr.mxu0 0.0
      %1164 = vmatpush1.msra.mxu0 0.0
      %1165 = vmatprep.subr.mxu0 0.0
      %1166 = vmatpush1.msra.mxu0 0.0
      %1167 = vmatprep.subr.mxu0 0.0
      %1168 = vmatpush1.msra.mxu0 0.0
      %1169 = vmatprep.subr.mxu0 0.0
      %1170 = vmatpush1.msra.mxu0 0.0
      %1171 = vmatprep.subr.mxu0 0.0
      %1172 = vmatpush1.msra.mxu0 0.0
      %1173 = vmatprep.subr.mxu0 0.0
      %1174 = vmatpush1.msra.mxu0 0.0
      %1175 = vmatprep.subr.mxu0 0.0
      %1176 = vmatpush1.msra.mxu0 0.0
      %1177 = vmatprep.subr.mxu0 0.0
      %1178 = vmatpush1.msra.mxu0 0.0
      %1179 = vmatprep.subr.mxu0 0.0
      %1180 = vmatpush1.msra.mxu0 0.0
      %1181 = vmatprep.subr.mxu0 0.0
      %1182 = vmatpush1.msra.mxu0 0.0
      %1183 = vmatprep.subr.mxu0 0.0
      %1184 = vmatpush1.msra.mxu0 0.0
      %1185 = vmatprep.subr.mxu0 0.0
      %1186 = vmatpush1.msra.mxu0 0.0
      %1187 = vmatprep.subr.mxu0 0.0
      %1188 = vmatpush1.msra.mxu0 0.0
      %1189 = vmatprep.subr.mxu0 0.0
      %1190 = vmatpush1.msra.mxu0 0.0
      %1191 = vmatprep.subr.mxu0 0.0
      %1192 = vmatpush1.msra.mxu0 0.0
      %1193 = vmatprep.subr.mxu0 0.0
      %1194 = vmatpush1.msra.mxu0 0.0
      %1195 = vmatprep.subr.mxu0 0.0
      %1196 = vmatpush1.msra.mxu0 0.0
      %1197 = vmatprep.subr.mxu0 0.0
      %1198 = vmatpush1.msra.mxu0 0.0
      %1199 = vmatprep.subr.mxu0 0.0
      %1200 = vmatpush1.msra.mxu0 0.0
      %1201 = vmatprep.subr.mxu0 0.0
      %1202 = vmatpush1.msra.mxu0 0.0
      %1203 = vmatprep.subr.mxu0 0.0
      %1204 = vmatpush1.msra.mxu0 0.0
      %1205 = vmatprep.subr.mxu0 0.0
      %1206 = vmatpush1.msra.mxu0 0.0
      %1207 = vmatprep.subr.mxu0 0.0
      %1208 = vmatpush1.msra.mxu0 0.0
      %1209 = vmatprep.subr.mxu0 0.0
      %1210 = vmatpush1.msra.mxu0 0.0
      %1211 = vmatprep.subr.mxu0 0.0
      %1212 = vmatpush1.msra.mxu0 0.0
      %1213 = vmatprep.mubr.f32.mxu0 0.0
      %v1214 = vand.u32 %v380, 4294901760
      %v1215 = vsub.f32 %v380, %v1214
      %1216 = vmatmul.mubr.f32.gmra.mrb[0].mxu0 %v1215
      %v1217 = vpop.f32.mrb[0].mxu0
      %v1218 = vadd.f32 %v952, %v1217
      %v1219 = vpop.f32.mrb[0].mxu0
      %1220 = vmatprep.mubr.f32.mxu0 0.0
      %v1221 = vand.u32 %v383, 4294901760
      %v1222 = vsub.f32 %v383, %v1221
      %1223 = vmatmul.mubr.f32.gmra.mrb[0].mxu0 %v1222
      %v1224 = vpop.f32.mrb[0].mxu0
      %v1225 = vadd.f32 %v958, %v1224
      %v1226 = vpop.f32.mrb[0].mxu0
      %1227 = vmatprep.mubr.f32.mxu0 0.0
      %v1228 = vand.u32 %v386, 4294901760
      %v1229 = vsub.f32 %v386, %v1228
      %1230 = vmatmul.mubr.f32.gmra.mrb[0].mxu0 %v1229
      %v1231 = vpop.f32.mrb[0].mxu0
      %v1232 = vadd.f32 %v964, %v1231
      %v1233 = vpop.f32.mrb[0].mxu0
      %1234 = vmatprep.mubr.f32.mxu0 0.0
      %v1235 = vand.u32 %v389, 4294901760
      %v1236 = vsub.f32 %v389, %v1235
      %1237 = vmatmul.mubr.f32.gmra.mrb[0].mxu0 %v1236
      %v1238 = vpop.f32.mrb[0].mxu0
      %v1239 = vadd.f32 %v970, %v1238
      %v1240 = vpop.f32.mrb[0].mxu0
      %1241 = vmatprep.mubr.f32.mxu0 0.0
      %v1242 = vand.u32 %v392, 4294901760
      %v1243 = vsub.f32 %v392, %v1242
      %1244 = vmatmul.mubr.f32.gmra.mrb[0].mxu0 %v1243
      %v1245 = vpop.f32.mrb[0].mxu0
      %v1246 = vadd.f32 %v976, %v1245
      %v1247 = vpop.f32.mrb[0].mxu0
      %1248 = vmatprep.mubr.f32.mxu0 0.0
      %v1249 = vand.u32 %v395, 4294901760
      %v1250 = vsub.f32 %v395, %v1249
      %1251 = vmatmul.mubr.f32.gmra.mrb[0].mxu0 %v1250
      %v1252 = vpop.f32.mrb[0].mxu0
      %v1253 = vadd.f32 %v982, %v1252
      %v1254 = vpop.f32.mrb[0].mxu0
      %1255 = vmatprep.mubr.f32.mxu0 0.0
      %v1256 = vand.u32 %v398, 4294901760
      %v1257 = vsub.f32 %v398, %v1256
      %1258 = vmatmul.mubr.f32.gmra.mrb[0].mxu0 %v1257
      %v1259 = vpop.f32.mrb[0].mxu0
      %v1260 = vadd.f32 %v988, %v1259
      %v1261 = vpop.f32.mrb[0].mxu0
      %1262 = vmatprep.mubr.f32.mxu0 0.0
      %v1263 = vand.u32 %v401, 4294901760
      %v1264 = vsub.f32 %v401, %v1263
      %1265 = vmatmul.mubr.f32.gmra.mrb[0].mxu0 %v1264
      %v1266 = vpop.f32.mrb[0].mxu0
      %v1267 = vadd.f32 %v994, %v1266
      %v1268 = vpop.f32.mrb[0].mxu0
      %1269 = vmatprep.mubr.f32.mxu0 0.0
      %v1270 = vand.u32 %v404, 4294901760
      %v1271 = vsub.f32 %v404, %v1270
      %1272 = vmatmul.mubr.f32.gmra.mrb[0].mxu0 %v1271
      %v1273 = vpop.f32.mrb[0].mxu0
      %v1274 = vadd.f32 %v1000, %v1273
      %v1275 = vpop.f32.mrb[0].mxu0
      %1276 = vmatprep.mubr.f32.mxu0 0.0
      %v1277 = vand.u32 %v407, 4294901760
      %v1278 = vsub.f32 %v407, %v1277
      %1279 = vmatmul.mubr.f32.gmra.mrb[0].mxu0 %v1278
      %v1280 = vpop.f32.mrb[0].mxu0
      %v1281 = vadd.f32 %v1006, %v1280
      %v1282 = vpop.f32.mrb[0].mxu0
      %1283 = vmatprep.mubr.f32.mxu0 0.0
      %v1284 = vand.u32 %v410, 4294901760
      %v1285 = vsub.f32 %v410, %v1284
      %1286 = vmatmul.mubr.f32.gmra.mrb[0].mxu0 %v1285
      %v1287 = vpop.f32.mrb[0].mxu0
      %v1288 = vadd.f32 %v1012, %v1287
      %v1289 = vpop.f32.mrb[0].mxu0
      %1290 = vmatprep.mubr.f32.mxu0 0.0
      %v1291 = vand.u32 %v413, 4294901760
      %v1292 = vsub.f32 %v413, %v1291
      %1293 = vmatmul.mubr.f32.gmra.mrb[0].mxu0 %v1292
      %v1294 = vpop.f32.mrb[0].mxu0
      %v1295 = vadd.f32 %v1018, %v1294
      %v1296 = vpop.f32.mrb[0].mxu0
      %1297 = vmatprep.mubr.f32.mxu0 0.0
      %v1298 = vand.u32 %v416, 4294901760
      %v1299 = vsub.f32 %v416, %v1298
      %1300 = vmatmul.mubr.f32.gmra.mrb[0].mxu0 %v1299
      %v1301 = vpop.f32.mrb[0].mxu0
      %v1302 = vadd.f32 %v1024, %v1301
      %v1303 = vpop.f32.mrb[0].mxu0
      %1304 = vmatprep.mubr.f32.mxu0 0.0
      %v1305 = vand.u32 %v419, 4294901760
      %v1306 = vsub.f32 %v419, %v1305
      %1307 = vmatmul.mubr.f32.gmra.mrb[0].mxu0 %v1306
      %v1308 = vpop.f32.mrb[0].mxu0
      %v1309 = vadd.f32 %v1030, %v1308
      %v1310 = vpop.f32.mrb[0].mxu0
      %1311 = vmatprep.mubr.f32.mxu0 0.0
      %v1312 = vand.u32 %v422, 4294901760
      %v1313 = vsub.f32 %v422, %v1312
      %1314 = vmatmul.mubr.f32.gmra.mrb[0].mxu0 %v1313
      %v1315 = vpop.f32.mrb[0].mxu0
      %v1316 = vadd.f32 %v1036, %v1315
      %v1317 = vpop.f32.mrb[0].mxu0
      %1318 = vmatprep.mubr.f32.mxu0 0.0
      %v1319 = vand.u32 %v425, 4294901760
      %v1320 = vsub.f32 %v425, %v1319
      %1321 = vmatmul.mubr.f32.gmra.mrb[0].mxu0 %v1320
      %v1322 = vpop.f32.mrb[0].mxu0
      %v1323 = vadd.f32 %v1042, %v1322
      %v1324 = vpop.f32.mrb[0].mxu0
      %1325 = vmatprep.mubr.f32.mxu0 0.0
      %v1326 = vand.u32 %v428, 4294901760
      %v1327 = vsub.f32 %v428, %v1326
      %1328 = vmatmul.mubr.f32.gmra.mrb[0].mxu0 %v1327
      %v1329 = vpop.f32.mrb[0].mxu0
      %v1330 = vadd.f32 %v1048, %v1329
      %v1331 = vpop.f32.mrb[0].mxu0
      %1332 = vmatprep.mubr.f32.mxu0 0.0
      %v1333 = vand.u32 %v431, 4294901760
      %v1334 = vsub.f32 %v431, %v1333
      %1335 = vmatmul.mubr.f32.gmra.mrb[0].mxu0 %v1334
      %v1336 = vpop.f32.mrb[0].mxu0
      %v1337 = vadd.f32 %v1054, %v1336
      %v1338 = vpop.f32.mrb[0].mxu0
      %1339 = vmatprep.mubr.f32.mxu0 0.0
      %v1340 = vand.u32 %v434, 4294901760
      %v1341 = vsub.f32 %v434, %v1340
      %1342 = vmatmul.mubr.f32.gmra.mrb[0].mxu0 %v1341
      %v1343 = vpop.f32.mrb[0].mxu0
      %v1344 = vadd.f32 %v1060, %v1343
      %v1345 = vpop.f32.mrb[0].mxu0
      %1346 = vmatprep.mubr.f32.mxu0 0.0
      %v1347 = vand.u32 %v437, 4294901760
      %v1348 = vsub.f32 %v437, %v1347
      %1349 = vmatmul.mubr.f32.gmra.mrb[0].mxu0 %v1348
      %v1350 = vpop.f32.mrb[0].mxu0
      %v1351 = vadd.f32 %v1066, %v1350
      %v1352 = vpop.f32.mrb[0].mxu0
      %1353 = vmatprep.mubr.f32.mxu0 0.0
      %v1354 = vand.u32 %v440, 4294901760
      %v1355 = vsub.f32 %v440, %v1354
      %1356 = vmatmul.mubr.f32.gmra.mrb[0].mxu0 %v1355
      %v1357 = vpop.f32.mrb[0].mxu0
      %v1358 = vadd.f32 %v1072, %v1357
      %v1359 = vpop.f32.mrb[0].mxu0
      %1360 = vmatprep.mubr.f32.mxu0 0.0
      %v1361 = vand.u32 %v443, 4294901760
      %v1362 = vsub.f32 %v443, %v1361
      %1363 = vmatmul.mubr.f32.gmra.mrb[0].mxu0 %v1362
      %v1364 = vpop.f32.mrb[0].mxu0
      %v1365 = vadd.f32 %v1078, %v1364
      %v1366 = vpop.f32.mrb[0].mxu0
      %1367 = vmatprep.mubr.f32.mxu0 0.0
      %v1368 = vand.u32 %v446, 4294901760
      %v1369 = vsub.f32 %v446, %v1368
      %1370 = vmatmul.mubr.f32.gmra.mrb[0].mxu0 %v1369
      %v1371 = vpop.f32.mrb[0].mxu0
      %v1372 = vadd.f32 %v1084, %v1371
      %v1373 = vpop.f32.mrb[0].mxu0
      %1374 = vmatprep.mubr.f32.mxu0 0.0
      %v1375 = vand.u32 %v449, 4294901760
      %v1376 = vsub.f32 %v449, %v1375
      %1377 = vmatmul.mubr.f32.gmra.mrb[0].mxu0 %v1376
      %v1378 = vpop.f32.mrb[0].mxu0
      %v1379 = vadd.f32 %v1090, %v1378
      %v1380 = vpop.f32.mrb[0].mxu0
      %1381 = vmatprep.mubr.f32.mxu0 0.0
      %v1382 = vand.u32 %v452, 4294901760
      %v1383 = vsub.f32 %v452, %v1382
      %1384 = vmatmul.mubr.f32.gmra.mrb[0].mxu0 %v1383
      %v1385 = vpop.f32.mrb[0].mxu0
      %v1386 = vadd.f32 %v1096, %v1385
      %v1387 = vpop.f32.mrb[0].mxu0
      %1388 = vmatprep.mubr.f32.mxu0 0.0
      %v1389 = vand.u32 %v455, 4294901760
      %v1390 = vsub.f32 %v455, %v1389
      %1391 = vmatmul.mubr.f32.gmra.mrb[0].mxu0 %v1390
      %v1392 = vpop.f32.mrb[0].mxu0
      %v1393 = vadd.f32 %v1102, %v1392
      %v1394 = vpop.f32.mrb[0].mxu0
      %1395 = vmatprep.mubr.f32.mxu0 0.0
      %v1396 = vand.u32 %v458, 4294901760
      %v1397 = vsub.f32 %v458, %v1396
      %1398 = vmatmul.mubr.f32.gmra.mrb[0].mxu0 %v1397
      %v1399 = vpop.f32.mrb[0].mxu0
      %v1400 = vadd.f32 %v1108, %v1399
      %v1401 = vpop.f32.mrb[0].mxu0
      %1402 = vmatprep.mubr.f32.mxu0 0.0
      %v1403 = vand.u32 %v461, 4294901760
      %v1404 = vsub.f32 %v461, %v1403
      %1405 = vmatmul.mubr.f32.gmra.mrb[0].mxu0 %v1404
      %v1406 = vpop.f32.mrb[0].mxu0
      %v1407 = vadd.f32 %v1114, %v1406
      %v1408 = vpop.f32.mrb[0].mxu0
      %1409 = vmatprep.mubr.f32.mxu0 0.0
      %v1410 = vand.u32 %v464, 4294901760
      %v1411 = vsub.f32 %v464, %v1410
      %1412 = vmatmul.mubr.f32.gmra.mrb[0].mxu0 %v1411
      %v1413 = vpop.f32.mrb[0].mxu0
      %v1414 = vadd.f32 %v1120, %v1413
      %v1415 = vpop.f32.mrb[0].mxu0
      %1416 = vmatprep.mubr.f32.mxu0 0.0
      %v1417 = vand.u32 %v467, 4294901760
      %v1418 = vsub.f32 %v467, %v1417
      %1419 = vmatmul.mubr.f32.gmra.mrb[0].mxu0 %v1418
      %v1420 = vpop.f32.mrb[0].mxu0
      %v1421 = vadd.f32 %v1126, %v1420
      %v1422 = vpop.f32.mrb[0].mxu0
      %1423 = vmatprep.mubr.f32.mxu0 0.0
      %v1424 = vand.u32 %v470, 4294901760
      %v1425 = vsub.f32 %v470, %v1424
      %1426 = vmatmul.mubr.f32.gmra.mrb[0].mxu0 %v1425
      %v1427 = vpop.f32.mrb[0].mxu0
      %v1428 = vadd.f32 %v1132, %v1427
      %v1429 = vpop.f32.mrb[0].mxu0
      %1430 = vmatprep.mubr.f32.mxu0 0.0
      %v1431 = vand.u32 %v473, 4294901760
      %v1432 = vsub.f32 %v473, %v1431
      %1433 = vmatmul.mubr.f32.gmra.mrb[0].mxu0 %v1432
      %v1434 = vpop.f32.mrb[0].mxu0
      %v1435 = vadd.f32 %v1138, %v1434
      %v1436 = vpop.f32.mrb[0].mxu0
      %1437 = vdwg.mxu0
      %1438 = vmatprep.subr.mxu0 0.0
      %v1439 = vand.u32 %v374, 4294901760
      %1440 = vmatpush1.msra.mxu0 %v1439
      %1441 = vmatprep.subr.mxu0 0.0
      %v1442 = vand.u32 %v375, 4294901760
      %1443 = vmatpush1.msra.mxu0 %v1442
      %1444 = vmatprep.subr.mxu0 0.0
      %v1445 = vand.u32 %v376, 4294901760
      %1446 = vmatpush1.msra.mxu0 %v1445
      %1447 = vmatprep.subr.mxu0 0.0
      %v1448 = vand.u32 %v377, 4294901760
      %1449 = vmatpush1.msra.mxu0 %v1448
      %1450 = vmatprep.subr.mxu0 0.0
      %1451 = vmatpush1.msra.mxu0 0.0
      %1452 = vmatprep.subr.mxu0 0.0
      %1453 = vmatpush1.msra.mxu0 0.0
      %1454 = vmatprep.subr.mxu0 0.0
      %1455 = vmatpush1.msra.mxu0 0.0
      %1456 = vmatprep.subr.mxu0 0.0
      %1457 = vmatpush1.msra.mxu0 0.0
      %1458 = vmatprep.subr.mxu0 0.0
      %1459 = vmatpush1.msra.mxu0 0.0
      %1460 = vmatprep.subr.mxu0 0.0
      %1461 = vmatpush1.msra.mxu0 0.0
      %1462 = vmatprep.subr.mxu0 0.0
      %1463 = vmatpush1.msra.mxu0 0.0
      %1464 = vmatprep.subr.mxu0 0.0
      %1465 = vmatpush1.msra.mxu0 0.0
      %1466 = vmatprep.subr.mxu0 0.0
      %1467 = vmatpush1.msra.mxu0 0.0
      %1468 = vmatprep.subr.mxu0 0.0
      %1469 = vmatpush1.msra.mxu0 0.0
      %1470 = vmatprep.subr.mxu0 0.0
      %1471 = vmatpush1.msra.mxu0 0.0
      %1472 = vmatprep.subr.mxu0 0.0
      %1473 = vmatpush1.msra.mxu0 0.0
      %1474 = vmatprep.subr.mxu0 0.0
      %1475 = vmatpush1.msra.mxu0 0.0
      %1476 = vmatprep.subr.mxu0 0.0
      %1477 = vmatpush1.msra.mxu0 0.0
      %1478 = vmatprep.subr.mxu0 0.0
      %1479 = vmatpush1.msra.mxu0 0.0
      %1480 = vmatprep.subr.mxu0 0.0
      %1481 = vmatpush1.msra.mxu0 0.0
      %1482 = vmatprep.subr.mxu0 0.0
      %1483 = vmatpush1.msra.mxu0 0.0
      %1484 = vmatprep.subr.mxu0 0.0
      %1485 = vmatpush1.msra.mxu0 0.0
      %1486 = vmatprep.subr.mxu0 0.0
      %1487 = vmatpush1.msra.mxu0 0.0
      %1488 = vmatprep.subr.mxu0 0.0
      %1489 = vmatpush1.msra.mxu0 0.0
      %1490 = vmatprep.subr.mxu0 0.0
      %1491 = vmatpush1.msra.mxu0 0.0
      %1492 = vmatprep.subr.mxu0 0.0
      %1493 = vmatpush1.msra.mxu0 0.0
      %1494 = vmatprep.subr.mxu0 0.0
      %1495 = vmatpush1.msra.mxu0 0.0
      %1496 = vmatprep.subr.mxu0 0.0
      %1497 = vmatpush1.msra.mxu0 0.0
      %1498 = vmatprep.subr.mxu0 0.0
      %1499 = vmatpush1.msra.mxu0 0.0
      %1500 = vmatprep.subr.mxu0 0.0
      %1501 = vmatpush1.msra.mxu0 0.0
      %1502 = vmatprep.subr.mxu0 0.0
      %1503 = vmatpush1.msra.mxu0 0.0
      %1504 = vmatprep.subr.mxu0 0.0
      %1505 = vmatpush1.msra.mxu0 0.0
      %1506 = vmatprep.mubr.f32.mxu0 0.0
      %v1507 = vand.u32 %v380, 4294901760
      %v1508 = vsub.f32 %v380, %v1507
      %v1509 = vand.u32 %v1508, 4294901760
      %1510 = vmatmul.mubr.f32.gmra.mrb[0].mxu0 %v1509
      %v1511 = vpop.f32.mrb[0].mxu0
      %v1512 = vadd.f32 %v1218, %v1511
      %v1513 = vpop.f32.mrb[0].mxu0
      %1514 = vmatprep.mubr.f32.mxu0 0.0
      %v1515 = vand.u32 %v383, 4294901760
      %v1516 = vsub.f32 %v383, %v1515
      %v1517 = vand.u32 %v1516, 4294901760
      %1518 = vmatmul.mubr.f32.gmra.mrb[0].mxu0 %v1517
      %v1519 = vpop.f32.mrb[0].mxu0
      %v1520 = vadd.f32 %v1225, %v1519
      %v1521 = vpop.f32.mrb[0].mxu0
      %1522 = vmatprep.mubr.f32.mxu0 0.0
      %v1523 = vand.u32 %v386, 4294901760
      %v1524 = vsub.f32 %v386, %v1523
      %v1525 = vand.u32 %v1524, 4294901760
      %1526 = vmatmul.mubr.f32.gmra.mrb[0].mxu0 %v1525
      %v1527 = vpop.f32.mrb[0].mxu0
      %v1528 = vadd.f32 %v1232, %v1527
      %v1529 = vpop.f32.mrb[0].mxu0
      %1530 = vmatprep.mubr.f32.mxu0 0.0
      %v1531 = vand.u32 %v389, 4294901760
      %v1532 = vsub.f32 %v389, %v1531
      %v1533 = vand.u32 %v1532, 4294901760
      %1534 = vmatmul.mubr.f32.gmra.mrb[0].mxu0 %v1533
      %v1535 = vpop.f32.mrb[0].mxu0
      %v1536 = vadd.f32 %v1239, %v1535
      %v1537 = vpop.f32.mrb[0].mxu0
      %1538 = vmatprep.mubr.f32.mxu0 0.0
      %v1539 = vand.u32 %v392, 4294901760
      %v1540 = vsub.f32 %v392, %v1539
      %v1541 = vand.u32 %v1540, 4294901760
      %1542 = vmatmul.mubr.f32.gmra.mrb[0].mxu0 %v1541
      %v1543 = vpop.f32.mrb[0].mxu0
      %v1544 = vadd.f32 %v1246, %v1543
      %v1545 = vpop.f32.mrb[0].mxu0
      %1546 = vmatprep.mubr.f32.mxu0 0.0
      %v1547 = vand.u32 %v395, 4294901760
      %v1548 = vsub.f32 %v395, %v1547
      %v1549 = vand.u32 %v1548, 4294901760
      %1550 = vmatmul.mubr.f32.gmra.mrb[0].mxu0 %v1549
      %v1551 = vpop.f32.mrb[0].mxu0
      %v1552 = vadd.f32 %v1253, %v1551
      %v1553 = vpop.f32.mrb[0].mxu0
      %1554 = vmatprep.mubr.f32.mxu0 0.0
      %v1555 = vand.u32 %v398, 4294901760
      %v1556 = vsub.f32 %v398, %v1555
      %v1557 = vand.u32 %v1556, 4294901760
      %1558 = vmatmul.mubr.f32.gmra.mrb[0].mxu0 %v1557
      %v1559 = vpop.f32.mrb[0].mxu0
      %v1560 = vadd.f32 %v1260, %v1559
      %v1561 = vpop.f32.mrb[0].mxu0
      %1562 = vmatprep.mubr.f32.mxu0 0.0
      %v1563 = vand.u32 %v401, 4294901760
      %v1564 = vsub.f32 %v401, %v1563
      %v1565 = vand.u32 %v1564, 4294901760
      %1566 = vmatmul.mubr.f32.gmra.mrb[0].mxu0 %v1565
      %v1567 = vpop.f32.mrb[0].mxu0
      %v1568 = vadd.f32 %v1267, %v1567
      %v1569 = vpop.f32.mrb[0].mxu0
      %1570 = vmatprep.mubr.f32.mxu0 0.0
      %v1571 = vand.u32 %v404, 4294901760
      %v1572 = vsub.f32 %v404, %v1571
      %v1573 = vand.u32 %v1572, 4294901760
      %1574 = vmatmul.mubr.f32.gmra.mrb[0].mxu0 %v1573
      %v1575 = vpop.f32.mrb[0].mxu0
      %v1576 = vadd.f32 %v1274, %v1575
      %v1577 = vpop.f32.mrb[0].mxu0
      %1578 = vmatprep.mubr.f32.mxu0 0.0
      %v1579 = vand.u32 %v407, 4294901760
      %v1580 = vsub.f32 %v407, %v1579
      %v1581 = vand.u32 %v1580, 4294901760
      %1582 = vmatmul.mubr.f32.gmra.mrb[0].mxu0 %v1581
      %v1583 = vpop.f32.mrb[0].mxu0
      %v1584 = vadd.f32 %v1281, %v1583
      %v1585 = vpop.f32.mrb[0].mxu0
      %1586 = vmatprep.mubr.f32.mxu0 0.0
      %v1587 = vand.u32 %v410, 4294901760
      %v1588 = vsub.f32 %v410, %v1587
      %v1589 = vand.u32 %v1588, 4294901760
      %1590 = vmatmul.mubr.f32.gmra.mrb[0].mxu0 %v1589
      %v1591 = vpop.f32.mrb[0].mxu0
      %v1592 = vadd.f32 %v1288, %v1591
      %v1593 = vpop.f32.mrb[0].mxu0
      %1594 = vmatprep.mubr.f32.mxu0 0.0
      %v1595 = vand.u32 %v413, 4294901760
      %v1596 = vsub.f32 %v413, %v1595
      %v1597 = vand.u32 %v1596, 4294901760
      %1598 = vmatmul.mubr.f32.gmra.mrb[0].mxu0 %v1597
      %v1599 = vpop.f32.mrb[0].mxu0
      %v1600 = vadd.f32 %v1295, %v1599
      %v1601 = vpop.f32.mrb[0].mxu0
      %1602 = vmatprep.mubr.f32.mxu0 0.0
      %v1603 = vand.u32 %v416, 4294901760
      %v1604 = vsub.f32 %v416, %v1603
      %v1605 = vand.u32 %v1604, 4294901760
      %1606 = vmatmul.mubr.f32.gmra.mrb[0].mxu0 %v1605
      %v1607 = vpop.f32.mrb[0].mxu0
      %v1608 = vadd.f32 %v1302, %v1607
      %v1609 = vpop.f32.mrb[0].mxu0
      %1610 = vmatprep.mubr.f32.mxu0 0.0
      %v1611 = vand.u32 %v419, 4294901760
      %v1612 = vsub.f32 %v419, %v1611
      %v1613 = vand.u32 %v1612, 4294901760
      %1614 = vmatmul.mubr.f32.gmra.mrb[0].mxu0 %v1613
      %v1615 = vpop.f32.mrb[0].mxu0
      %v1616 = vadd.f32 %v1309, %v1615
      %v1617 = vpop.f32.mrb[0].mxu0
      %1618 = vmatprep.mubr.f32.mxu0 0.0
      %v1619 = vand.u32 %v422, 4294901760
      %v1620 = vsub.f32 %v422, %v1619
      %v1621 = vand.u32 %v1620, 4294901760
      %1622 = vmatmul.mubr.f32.gmra.mrb[0].mxu0 %v1621
      %v1623 = vpop.f32.mrb[0].mxu0
      %v1624 = vadd.f32 %v1316, %v1623
      %v1625 = vpop.f32.mrb[0].mxu0
      %1626 = vmatprep.mubr.f32.mxu0 0.0
      %v1627 = vand.u32 %v425, 4294901760
      %v1628 = vsub.f32 %v425, %v1627
      %v1629 = vand.u32 %v1628, 4294901760
      %1630 = vmatmul.mubr.f32.gmra.mrb[0].mxu0 %v1629
      %v1631 = vpop.f32.mrb[0].mxu0
      %v1632 = vadd.f32 %v1323, %v1631
      %v1633 = vpop.f32.mrb[0].mxu0
      %1634 = vmatprep.mubr.f32.mxu0 0.0
      %v1635 = vand.u32 %v428, 4294901760
      %v1636 = vsub.f32 %v428, %v1635
      %v1637 = vand.u32 %v1636, 4294901760
      %1638 = vmatmul.mubr.f32.gmra.mrb[0].mxu0 %v1637
      %v1639 = vpop.f32.mrb[0].mxu0
      %v1640 = vadd.f32 %v1330, %v1639
      %v1641 = vpop.f32.mrb[0].mxu0
      %1642 = vmatprep.mubr.f32.mxu0 0.0
      %v1643 = vand.u32 %v431, 4294901760
      %v1644 = vsub.f32 %v431, %v1643
      %v1645 = vand.u32 %v1644, 4294901760
      %1646 = vmatmul.mubr.f32.gmra.mrb[0].mxu0 %v1645
      %v1647 = vpop.f32.mrb[0].mxu0
      %v1648 = vadd.f32 %v1337, %v1647
      %v1649 = vpop.f32.mrb[0].mxu0
      %1650 = vmatprep.mubr.f32.mxu0 0.0
      %v1651 = vand.u32 %v434, 4294901760
      %v1652 = vsub.f32 %v434, %v1651
      %v1653 = vand.u32 %v1652, 4294901760
      %1654 = vmatmul.mubr.f32.gmra.mrb[0].mxu0 %v1653
      %v1655 = vpop.f32.mrb[0].mxu0
      %v1656 = vadd.f32 %v1344, %v1655
      %v1657 = vpop.f32.mrb[0].mxu0
      %1658 = vmatprep.mubr.f32.mxu0 0.0
      %v1659 = vand.u32 %v437, 4294901760
      %v1660 = vsub.f32 %v437, %v1659
      %v1661 = vand.u32 %v1660, 4294901760
      %1662 = vmatmul.mubr.f32.gmra.mrb[0].mxu0 %v1661
      %v1663 = vpop.f32.mrb[0].mxu0
      %v1664 = vadd.f32 %v1351, %v1663
      %v1665 = vpop.f32.mrb[0].mxu0
      %1666 = vmatprep.mubr.f32.mxu0 0.0
      %v1667 = vand.u32 %v440, 4294901760
      %v1668 = vsub.f32 %v440, %v1667
      %v1669 = vand.u32 %v1668, 4294901760
      %1670 = vmatmul.mubr.f32.gmra.mrb[0].mxu0 %v1669
      %v1671 = vpop.f32.mrb[0].mxu0
      %v1672 = vadd.f32 %v1358, %v1671
      %v1673 = vpop.f32.mrb[0].mxu0
      %1674 = vmatprep.mubr.f32.mxu0 0.0
      %v1675 = vand.u32 %v443, 4294901760
      %v1676 = vsub.f32 %v443, %v1675
      %v1677 = vand.u32 %v1676, 4294901760
      %1678 = vmatmul.mubr.f32.gmra.mrb[0].mxu0 %v1677
      %v1679 = vpop.f32.mrb[0].mxu0
      %v1680 = vadd.f32 %v1365, %v1679
      %v1681 = vpop.f32.mrb[0].mxu0
      %1682 = vmatprep.mubr.f32.mxu0 0.0
      %v1683 = vand.u32 %v446, 4294901760
      %v1684 = vsub.f32 %v446, %v1683
      %v1685 = vand.u32 %v1684, 4294901760
      %1686 = vmatmul.mubr.f32.gmra.mrb[0].mxu0 %v1685
      %v1687 = vpop.f32.mrb[0].mxu0
      %v1688 = vadd.f32 %v1372, %v1687
      %v1689 = vpop.f32.mrb[0].mxu0
      %1690 = vmatprep.mubr.f32.mxu0 0.0
      %v1691 = vand.u32 %v449, 4294901760
      %v1692 = vsub.f32 %v449, %v1691
      %v1693 = vand.u32 %v1692, 4294901760
      %1694 = vmatmul.mubr.f32.gmra.mrb[0].mxu0 %v1693
      %v1695 = vpop.f32.mrb[0].mxu0
      %v1696 = vadd.f32 %v1379, %v1695
      %v1697 = vpop.f32.mrb[0].mxu0
      %1698 = vmatprep.mubr.f32.mxu0 0.0
      %v1699 = vand.u32 %v452, 4294901760
      %v1700 = vsub.f32 %v452, %v1699
      %v1701 = vand.u32 %v1700, 4294901760
      %1702 = vmatmul.mubr.f32.gmra.mrb[0].mxu0 %v1701
      %v1703 = vpop.f32.mrb[0].mxu0
      %v1704 = vadd.f32 %v1386, %v1703
      %v1705 = vpop.f32.mrb[0].mxu0
      %1706 = vmatprep.mubr.f32.mxu0 0.0
      %v1707 = vand.u32 %v455, 4294901760
      %v1708 = vsub.f32 %v455, %v1707
      %v1709 = vand.u32 %v1708, 4294901760
      %1710 = vmatmul.mubr.f32.gmra.mrb[0].mxu0 %v1709
      %v1711 = vpop.f32.mrb[0].mxu0
      %v1712 = vadd.f32 %v1393, %v1711
      %v1713 = vpop.f32.mrb[0].mxu0
      %1714 = vmatprep.mubr.f32.mxu0 0.0
      %v1715 = vand.u32 %v458, 4294901760
      %v1716 = vsub.f32 %v458, %v1715
      %v1717 = vand.u32 %v1716, 4294901760
      %1718 = vmatmul.mubr.f32.gmra.mrb[0].mxu0 %v1717
      %v1719 = vpop.f32.mrb[0].mxu0
      %v1720 = vadd.f32 %v1400, %v1719
      %v1721 = vpop.f32.mrb[0].mxu0
      %1722 = vmatprep.mubr.f32.mxu0 0.0
      %v1723 = vand.u32 %v461, 4294901760
      %v1724 = vsub.f32 %v461, %v1723
      %v1725 = vand.u32 %v1724, 4294901760
      %1726 = vmatmul.mubr.f32.gmra.mrb[0].mxu0 %v1725
      %v1727 = vpop.f32.mrb[0].mxu0
      %v1728 = vadd.f32 %v1407, %v1727
      %v1729 = vpop.f32.mrb[0].mxu0
      %1730 = vmatprep.mubr.f32.mxu0 0.0
      %v1731 = vand.u32 %v464, 4294901760
      %v1732 = vsub.f32 %v464, %v1731
      %v1733 = vand.u32 %v1732, 4294901760
      %1734 = vmatmul.mubr.f32.gmra.mrb[0].mxu0 %v1733
      %v1735 = vpop.f32.mrb[0].mxu0
      %v1736 = vadd.f32 %v1414, %v1735
      %v1737 = vpop.f32.mrb[0].mxu0
      %1738 = vmatprep.mubr.f32.mxu0 0.0
      %v1739 = vand.u32 %v467, 4294901760
      %v1740 = vsub.f32 %v467, %v1739
      %v1741 = vand.u32 %v1740, 4294901760
      %1742 = vmatmul.mubr.f32.gmra.mrb[0].mxu0 %v1741
      %v1743 = vpop.f32.mrb[0].mxu0
      %v1744 = vadd.f32 %v1421, %v1743
      %v1745 = vpop.f32.mrb[0].mxu0
      %1746 = vmatprep.mubr.f32.mxu0 0.0
      %v1747 = vand.u32 %v470, 4294901760
      %v1748 = vsub.f32 %v470, %v1747
      %v1749 = vand.u32 %v1748, 4294901760
      %1750 = vmatmul.mubr.f32.gmra.mrb[0].mxu0 %v1749
      %v1751 = vpop.f32.mrb[0].mxu0
      %v1752 = vadd.f32 %v1428, %v1751
      %v1753 = vpop.f32.mrb[0].mxu0
      %1754 = vmatprep.mubr.f32.mxu0 0.0
      %v1755 = vand.u32 %v473, 4294901760
      %v1756 = vsub.f32 %v473, %v1755
      %v1757 = vand.u32 %v1756, 4294901760
      %1758 = vmatmul.mubr.f32.gmra.mrb[0].mxu0 %v1757
      %v1759 = vpop.f32.mrb[0].mxu0
      %v1760 = vadd.f32 %v1435, %v1759
      %v1761 = vpop.f32.mrb[0].mxu0
      %1762 = vdwg.mxu0
      %1763 = vmatprep.subr.mxu0 0.0
      %v1764 = vand.u32 %v374, 4294901760
      %v1765 = vsub.f32 %v374, %v1764
      %v1766 = vand.u32 %v1765, 4294901760
      %1767 = vmatpush1.msra.mxu0 %v1766
      %1768 = vmatprep.subr.mxu0 0.0
      %v1769 = vand.u32 %v375, 4294901760
      %v1770 = vsub.f32 %v375, %v1769
      %v1771 = vand.u32 %v1770, 4294901760
      %1772 = vmatpush1.msra.mxu0 %v1771
      %1773 = vmatprep.subr.mxu0 0.0
      %v1774 = vand.u32 %v376, 4294901760
      %v1775 = vsub.f32 %v376, %v1774
      %v1776 = vand.u32 %v1775, 4294901760
      %1777 = vmatpush1.msra.mxu0 %v1776
      %1778 = vmatprep.subr.mxu0 0.0
      %v1779 = vand.u32 %v377, 4294901760
      %v1780 = vsub.f32 %v377, %v1779
      %v1781 = vand.u32 %v1780, 4294901760
      %1782 = vmatpush1.msra.mxu0 %v1781
      %1783 = vmatprep.subr.mxu0 0.0
      %1784 = vmatpush1.msra.mxu0 0.0
      %1785 = vmatprep.subr.mxu0 0.0
      %1786 = vmatpush1.msra.mxu0 0.0
      %1787 = vmatprep.subr.mxu0 0.0
      %1788 = vmatpush1.msra.mxu0 0.0
      %1789 = vmatprep.subr.mxu0 0.0
      %1790 = vmatpush1.msra.mxu0 0.0
      %1791 = vmatprep.subr.mxu0 0.0
      %1792 = vmatpush1.msra.mxu0 0.0
      %1793 = vmatprep.subr.mxu0 0.0
      %1794 = vmatpush1.msra.mxu0 0.0
      %1795 = vmatprep.subr.mxu0 0.0
      %1796 = vmatpush1.msra.mxu0 0.0
      %1797 = vmatprep.subr.mxu0 0.0
      %1798 = vmatpush1.msra.mxu0 0.0
      %1799 = vmatprep.subr.mxu0 0.0
      %1800 = vmatpush1.msra.mxu0 0.0
      %1801 = vmatprep.subr.mxu0 0.0
      %1802 = vmatpush1.msra.mxu0 0.0
      %1803 = vmatprep.subr.mxu0 0.0
      %1804 = vmatpush1.msra.mxu0 0.0
      %1805 = vmatprep.subr.mxu0 0.0
      %1806 = vmatpush1.msra.mxu0 0.0
      %1807 = vmatprep.subr.mxu0 0.0
      %1808 = vmatpush1.msra.mxu0 0.0
      %1809 = vmatprep.subr.mxu0 0.0
      %1810 = vmatpush1.msra.mxu0 0.0
      %1811 = vmatprep.subr.mxu0 0.0
      %1812 = vmatpush1.msra.mxu0 0.0
      %1813 = vmatprep.subr.mxu0 0.0
      %1814 = vmatpush1.msra.mxu0 0.0
      %1815 = vmatprep.subr.mxu0 0.0
      %1816 = vmatpush1.msra.mxu0 0.0
      %1817 = vmatprep.subr.mxu0 0.0
      %1818 = vmatpush1.msra.mxu0 0.0
      %1819 = vmatprep.subr.mxu0 0.0
      %1820 = vmatpush1.msra.mxu0 0.0
      %1821 = vmatprep.subr.mxu0 0.0
      %1822 = vmatpush1.msra.mxu0 0.0
      %1823 = vmatprep.subr.mxu0 0.0
      %1824 = vmatpush1.msra.mxu0 0.0
      %1825 = vmatprep.subr.mxu0 0.0
      %1826 = vmatpush1.msra.mxu0 0.0
      %1827 = vmatprep.subr.mxu0 0.0
      %1828 = vmatpush1.msra.mxu0 0.0
      %1829 = vmatprep.subr.mxu0 0.0
      %1830 = vmatpush1.msra.mxu0 0.0
      %1831 = vmatprep.subr.mxu0 0.0
      %1832 = vmatpush1.msra.mxu0 0.0
      %1833 = vmatprep.subr.mxu0 0.0
      %1834 = vmatpush1.msra.mxu0 0.0
      %1835 = vmatprep.subr.mxu0 0.0
      %1836 = vmatpush1.msra.mxu0 0.0
      %1837 = vmatprep.subr.mxu0 0.0
      %1838 = vmatpush1.msra.mxu0 0.0
      %1839 = vmatprep.mubr.f32.mxu0 0.0
      %v1840 = vand.u32 %v380, 4294901760
      %1841 = vmatmul.mubr.f32.gmra.mrb[0].mxu0 %v1840
      %v1842 = vpop.f32.mrb[0].mxu0
      %v1843 = vadd.f32 %v1512, %v1842
      %v1844 = vpop.f32.mrb[0].mxu0
      %1845 = vmatprep.mubr.f32.mxu0 0.0
      %v1846 = vand.u32 %v383, 4294901760
      %1847 = vmatmul.mubr.f32.gmra.mrb[0].mxu0 %v1846
      %v1848 = vpop.f32.mrb[0].mxu0
      %v1849 = vadd.f32 %v1520, %v1848
      %v1850 = vpop.f32.mrb[0].mxu0
      %1851 = vmatprep.mubr.f32.mxu0 0.0
      %v1852 = vand.u32 %v386, 4294901760
      %1853 = vmatmul.mubr.f32.gmra.mrb[0].mxu0 %v1852
      %v1854 = vpop.f32.mrb[0].mxu0
      %v1855 = vadd.f32 %v1528, %v1854
      %v1856 = vpop.f32.mrb[0].mxu0
      %1857 = vmatprep.mubr.f32.mxu0 0.0
      %v1858 = vand.u32 %v389, 4294901760
      %1859 = vmatmul.mubr.f32.gmra.mrb[0].mxu0 %v1858
      %v1860 = vpop.f32.mrb[0].mxu0
      %v1861 = vadd.f32 %v1536, %v1860
      %v1862 = vpop.f32.mrb[0].mxu0
      %1863 = vmatprep.mubr.f32.mxu0 0.0
      %v1864 = vand.u32 %v392, 4294901760
      %1865 = vmatmul.mubr.f32.gmra.mrb[0].mxu0 %v1864
      %v1866 = vpop.f32.mrb[0].mxu0
      %v1867 = vadd.f32 %v1544, %v1866
      %v1868 = vpop.f32.mrb[0].mxu0
      %1869 = vmatprep.mubr.f32.mxu0 0.0
      %v1870 = vand.u32 %v395, 4294901760
      %1871 = vmatmul.mubr.f32.gmra.mrb[0].mxu0 %v1870
      %v1872 = vpop.f32.mrb[0].mxu0
      %v1873 = vadd.f32 %v1552, %v1872
      %v1874 = vpop.f32.mrb[0].mxu0
      %1875 = vmatprep.mubr.f32.mxu0 0.0
      %v1876 = vand.u32 %v398, 4294901760
      %1877 = vmatmul.mubr.f32.gmra.mrb[0].mxu0 %v1876
      %v1878 = vpop.f32.mrb[0].mxu0
      %v1879 = vadd.f32 %v1560, %v1878
      %v1880 = vpop.f32.mrb[0].mxu0
      %1881 = vmatprep.mubr.f32.mxu0 0.0
      %v1882 = vand.u32 %v401, 4294901760
      %1883 = vmatmul.mubr.f32.gmra.mrb[0].mxu0 %v1882
      %v1884 = vpop.f32.mrb[0].mxu0
      %v1885 = vadd.f32 %v1568, %v1884
      %v1886 = vpop.f32.mrb[0].mxu0
      %1887 = vmatprep.mubr.f32.mxu0 0.0
      %v1888 = vand.u32 %v404, 4294901760
      %1889 = vmatmul.mubr.f32.gmra.mrb[0].mxu0 %v1888
      %v1890 = vpop.f32.mrb[0].mxu0
      %v1891 = vadd.f32 %v1576, %v1890
      %v1892 = vpop.f32.mrb[0].mxu0
      %1893 = vmatprep.mubr.f32.mxu0 0.0
      %v1894 = vand.u32 %v407, 4294901760
      %1895 = vmatmul.mubr.f32.gmra.mrb[0].mxu0 %v1894
      %v1896 = vpop.f32.mrb[0].mxu0
      %v1897 = vadd.f32 %v1584, %v1896
      %v1898 = vpop.f32.mrb[0].mxu0
      %1899 = vmatprep.mubr.f32.mxu0 0.0
      %v1900 = vand.u32 %v410, 4294901760
      %1901 = vmatmul.mubr.f32.gmra.mrb[0].mxu0 %v1900
      %v1902 = vpop.f32.mrb[0].mxu0
      %v1903 = vadd.f32 %v1592, %v1902
      %v1904 = vpop.f32.mrb[0].mxu0
      %1905 = vmatprep.mubr.f32.mxu0 0.0
      %v1906 = vand.u32 %v413, 4294901760
      %1907 = vmatmul.mubr.f32.gmra.mrb[0].mxu0 %v1906
      %v1908 = vpop.f32.mrb[0].mxu0
      %v1909 = vadd.f32 %v1600, %v1908
      %v1910 = vpop.f32.mrb[0].mxu0
      %1911 = vmatprep.mubr.f32.mxu0 0.0
      %v1912 = vand.u32 %v416, 4294901760
      %1913 = vmatmul.mubr.f32.gmra.mrb[0].mxu0 %v1912
      %v1914 = vpop.f32.mrb[0].mxu0
      %v1915 = vadd.f32 %v1608, %v1914
      %v1916 = vpop.f32.mrb[0].mxu0
      %1917 = vmatprep.mubr.f32.mxu0 0.0
      %v1918 = vand.u32 %v419, 4294901760
      %1919 = vmatmul.mubr.f32.gmra.mrb[0].mxu0 %v1918
      %v1920 = vpop.f32.mrb[0].mxu0
      %v1921 = vadd.f32 %v1616, %v1920
      %v1922 = vpop.f32.mrb[0].mxu0
      %1923 = vmatprep.mubr.f32.mxu0 0.0
      %v1924 = vand.u32 %v422, 4294901760
      %1925 = vmatmul.mubr.f32.gmra.mrb[0].mxu0 %v1924
      %v1926 = vpop.f32.mrb[0].mxu0
      %v1927 = vadd.f32 %v1624, %v1926
      %v1928 = vpop.f32.mrb[0].mxu0
      %1929 = vmatprep.mubr.f32.mxu0 0.0
      %v1930 = vand.u32 %v425, 4294901760
      %1931 = vmatmul.mubr.f32.gmra.mrb[0].mxu0 %v1930
      %v1932 = vpop.f32.mrb[0].mxu0
      %v1933 = vadd.f32 %v1632, %v1932
      %v1934 = vpop.f32.mrb[0].mxu0
      %1935 = vmatprep.mubr.f32.mxu0 0.0
      %v1936 = vand.u32 %v428, 4294901760
      %1937 = vmatmul.mubr.f32.gmra.mrb[0].mxu0 %v1936
      %v1938 = vpop.f32.mrb[0].mxu0
      %v1939 = vadd.f32 %v1640, %v1938
      %v1940 = vpop.f32.mrb[0].mxu0
      %1941 = vmatprep.mubr.f32.mxu0 0.0
      %v1942 = vand.u32 %v431, 4294901760
      %1943 = vmatmul.mubr.f32.gmra.mrb[0].mxu0 %v1942
      %v1944 = vpop.f32.mrb[0].mxu0
      %v1945 = vadd.f32 %v1648, %v1944
      %v1946 = vpop.f32.mrb[0].mxu0
      %1947 = vmatprep.mubr.f32.mxu0 0.0
      %v1948 = vand.u32 %v434, 4294901760
      %1949 = vmatmul.mubr.f32.gmra.mrb[0].mxu0 %v1948
      %v1950 = vpop.f32.mrb[0].mxu0
      %v1951 = vadd.f32 %v1656, %v1950
      %v1952 = vpop.f32.mrb[0].mxu0
      %1953 = vmatprep.mubr.f32.mxu0 0.0
      %v1954 = vand.u32 %v437, 4294901760
      %1955 = vmatmul.mubr.f32.gmra.mrb[0].mxu0 %v1954
      %v1956 = vpop.f32.mrb[0].mxu0
      %v1957 = vadd.f32 %v1664, %v1956
      %v1958 = vpop.f32.mrb[0].mxu0
      %1959 = vmatprep.mubr.f32.mxu0 0.0
      %v1960 = vand.u32 %v440, 4294901760
      %1961 = vmatmul.mubr.f32.gmra.mrb[0].mxu0 %v1960
      %v1962 = vpop.f32.mrb[0].mxu0
      %v1963 = vadd.f32 %v1672, %v1962
      %v1964 = vpop.f32.mrb[0].mxu0
      %1965 = vmatprep.mubr.f32.mxu0 0.0
      %v1966 = vand.u32 %v443, 4294901760
      %1967 = vmatmul.mubr.f32.gmra.mrb[0].mxu0 %v1966
      %v1968 = vpop.f32.mrb[0].mxu0
      %v1969 = vadd.f32 %v1680, %v1968
      %v1970 = vpop.f32.mrb[0].mxu0
      %1971 = vmatprep.mubr.f32.mxu0 0.0
      %v1972 = vand.u32 %v446, 4294901760
      %1973 = vmatmul.mubr.f32.gmra.mrb[0].mxu0 %v1972
      %v1974 = vpop.f32.mrb[0].mxu0
      %v1975 = vadd.f32 %v1688, %v1974
      %v1976 = vpop.f32.mrb[0].mxu0
      %1977 = vmatprep.mubr.f32.mxu0 0.0
      %v1978 = vand.u32 %v449, 4294901760
      %1979 = vmatmul.mubr.f32.gmra.mrb[0].mxu0 %v1978
      %v1980 = vpop.f32.mrb[0].mxu0
      %v1981 = vadd.f32 %v1696, %v1980
      %v1982 = vpop.f32.mrb[0].mxu0
      %1983 = vmatprep.mubr.f32.mxu0 0.0
      %v1984 = vand.u32 %v452, 4294901760
      %1985 = vmatmul.mubr.f32.gmra.mrb[0].mxu0 %v1984
      %v1986 = vpop.f32.mrb[0].mxu0
      %v1987 = vadd.f32 %v1704, %v1986
      %v1988 = vpop.f32.mrb[0].mxu0
      %1989 = vmatprep.mubr.f32.mxu0 0.0
      %v1990 = vand.u32 %v455, 4294901760
      %1991 = vmatmul.mubr.f32.gmra.mrb[0].mxu0 %v1990
      %v1992 = vpop.f32.mrb[0].mxu0
      %v1993 = vadd.f32 %v1712, %v1992
      %v1994 = vpop.f32.mrb[0].mxu0
      %1995 = vmatprep.mubr.f32.mxu0 0.0
      %v1996 = vand.u32 %v458, 4294901760
      %1997 = vmatmul.mubr.f32.gmra.mrb[0].mxu0 %v1996
      %v1998 = vpop.f32.mrb[0].mxu0
      %v1999 = vadd.f32 %v1720, %v1998
      %v2000 = vpop.f32.mrb[0].mxu0
      %2001 = vmatprep.mubr.f32.mxu0 0.0
      %v2002 = vand.u32 %v461, 4294901760
      %2003 = vmatmul.mubr.f32.gmra.mrb[0].mxu0 %v2002
      %v2004 = vpop.f32.mrb[0].mxu0
      %v2005 = vadd.f32 %v1728, %v2004
      %v2006 = vpop.f32.mrb[0].mxu0
      %2007 = vmatprep.mubr.f32.mxu0 0.0
      %v2008 = vand.u32 %v464, 4294901760
      %2009 = vmatmul.mubr.f32.gmra.mrb[0].mxu0 %v2008
      %v2010 = vpop.f32.mrb[0].mxu0
      %v2011 = vadd.f32 %v1736, %v2010
      %v2012 = vpop.f32.mrb[0].mxu0
      %2013 = vmatprep.mubr.f32.mxu0 0.0
      %v2014 = vand.u32 %v467, 4294901760
      %2015 = vmatmul.mubr.f32.gmra.mrb[0].mxu0 %v2014
      %v2016 = vpop.f32.mrb[0].mxu0
      %v2017 = vadd.f32 %v1744, %v2016
      %v2018 = vpop.f32.mrb[0].mxu0
      %2019 = vmatprep.mubr.f32.mxu0 0.0
      %v2020 = vand.u32 %v470, 4294901760
      %2021 = vmatmul.mubr.f32.gmra.mrb[0].mxu0 %v2020
      %v2022 = vpop.f32.mrb[0].mxu0
      %v2023 = vadd.f32 %v1752, %v2022
      %v2024 = vpop.f32.mrb[0].mxu0
      %2025 = vmatprep.mubr.f32.mxu0 0.0
      %v2026 = vand.u32 %v473, 4294901760
      %2027 = vmatmul.mubr.f32.gmra.mrb[0].mxu0 %v2026
      %v2028 = vpop.f32.mrb[0].mxu0
      %v2029 = vadd.f32 %v1760, %v2028
      %v2030 = vpop.f32.mrb[0].mxu0
      %2031 = vdwg.mxu0
      %2032 = vmatprep.subr.mxu0 0.0
      %v2033 = vand.u32 %v374, 4294901760
      %2034 = vmatpush1.msra.mxu0 %v2033
      %2035 = vmatprep.subr.mxu0 0.0
      %v2036 = vand.u32 %v375, 4294901760
      %2037 = vmatpush1.msra.mxu0 %v2036
      %2038 = vmatprep.subr.mxu0 0.0
      %v2039 = vand.u32 %v376, 4294901760
      %2040 = vmatpush1.msra.mxu0 %v2039
      %2041 = vmatprep.subr.mxu0 0.0
      %v2042 = vand.u32 %v377, 4294901760
      %2043 = vmatpush1.msra.mxu0 %v2042
      %2044 = vmatprep.subr.mxu0 0.0
      %2045 = vmatpush1.msra.mxu0 0.0
      %2046 = vmatprep.subr.mxu0 0.0
      %2047 = vmatpush1.msra.mxu0 0.0
      %2048 = vmatprep.subr.mxu0 0.0
      %2049 = vmatpush1.msra.mxu0 0.0
      %2050 = vmatprep.subr.mxu0 0.0
      %2051 = vmatpush1.msra.mxu0 0.0
      %2052 = vmatprep.subr.mxu0 0.0
      %2053 = vmatpush1.msra.mxu0 0.0
      %2054 = vmatprep.subr.mxu0 0.0
      %2055 = vmatpush1.msra.mxu0 0.0
      %2056 = vmatprep.subr.mxu0 0.0
      %2057 = vmatpush1.msra.mxu0 0.0
      %2058 = vmatprep.subr.mxu0 0.0
      %2059 = vmatpush1.msra.mxu0 0.0
      %2060 = vmatprep.subr.mxu0 0.0
      %2061 = vmatpush1.msra.mxu0 0.0
      %2062 = vmatprep.subr.mxu0 0.0
      %2063 = vmatpush1.msra.mxu0 0.0
      %2064 = vmatprep.subr.mxu0 0.0
      %2065 = vmatpush1.msra.mxu0 0.0
      %2066 = vmatprep.subr.mxu0 0.0
      %2067 = vmatpush1.msra.mxu0 0.0
      %2068 = vmatprep.subr.mxu0 0.0
      %2069 = vmatpush1.msra.mxu0 0.0
      %2070 = vmatprep.subr.mxu0 0.0
      %2071 = vmatpush1.msra.mxu0 0.0
      %2072 = vmatprep.subr.mxu0 0.0
      %2073 = vmatpush1.msra.mxu0 0.0
      %2074 = vmatprep.subr.mxu0 0.0
      %2075 = vmatpush1.msra.mxu0 0.0
      %2076 = vmatprep.subr.mxu0 0.0
      %2077 = vmatpush1.msra.mxu0 0.0
      %2078 = vmatprep.subr.mxu0 0.0
      %2079 = vmatpush1.msra.mxu0 0.0
      %2080 = vmatprep.subr.mxu0 0.0
      %2081 = vmatpush1.msra.mxu0 0.0
      %2082 = vmatprep.subr.mxu0 0.0
      %2083 = vmatpush1.msra.mxu0 0.0
      %2084 = vmatprep.subr.mxu0 0.0
      %2085 = vmatpush1.msra.mxu0 0.0
      %2086 = vmatprep.subr.mxu0 0.0
      %2087 = vmatpush1.msra.mxu0 0.0
      %2088 = vmatprep.subr.mxu0 0.0
      %2089 = vmatpush1.msra.mxu0 0.0
      %2090 = vmatprep.subr.mxu0 0.0
      %2091 = vmatpush1.msra.mxu0 0.0
      %2092 = vmatprep.subr.mxu0 0.0
      %2093 = vmatpush1.msra.mxu0 0.0
      %2094 = vmatprep.subr.mxu0 0.0
      %2095 = vmatpush1.msra.mxu0 0.0
      %2096 = vmatprep.subr.mxu0 0.0
      %2097 = vmatpush1.msra.mxu0 0.0
      %2098 = vmatprep.subr.mxu0 0.0
      %2099 = vmatpush1.msra.mxu0 0.0
      %2100 = vmatprep.mubr.f32.mxu0 0.0
      %v2101 = vand.u32 %v380, 4294901760
      %2102 = vmatmul.mubr.f32.gmra.mrb[0].mxu0 %v2101
      %v2103 = vpop.f32.mrb[0].mxu0
      %v2104 = vadd.f32 %v1843, %v2103
      %v2105 = vpop.f32.mrb[0].mxu0
      %2106 = vmatprep.mubr.f32.mxu0 0.0
      %v2107 = vand.u32 %v383, 4294901760
      %2108 = vmatmul.mubr.f32.gmra.mrb[0].mxu0 %v2107
      %v2109 = vpop.f32.mrb[0].mxu0
      %v2110 = vadd.f32 %v1849, %v2109
      %v2111 = vpop.f32.mrb[0].mxu0
      %2112 = vmatprep.mubr.f32.mxu0 0.0
      %v2113 = vand.u32 %v386, 4294901760
      %2114 = vmatmul.mubr.f32.gmra.mrb[0].mxu0 %v2113
      %v2115 = vpop.f32.mrb[0].mxu0
      %v2116 = vadd.f32 %v1855, %v2115
      %v2117 = vpop.f32.mrb[0].mxu0
      %2118 = vmatprep.mubr.f32.mxu0 0.0
      %v2119 = vand.u32 %v389, 4294901760
      %2120 = vmatmul.mubr.f32.gmra.mrb[0].mxu0 %v2119
      %v2121 = vpop.f32.mrb[0].mxu0
      %v2122 = vadd.f32 %v1861, %v2121
      %v2123 = vpop.f32.mrb[0].mxu0
      %2124 = vmatprep.mubr.f32.mxu0 0.0
      %v2125 = vand.u32 %v392, 4294901760
      %2126 = vmatmul.mubr.f32.gmra.mrb[0].mxu0 %v2125
      %v2127 = vpop.f32.mrb[0].mxu0
      %v2128 = vadd.f32 %v1867, %v2127
      %v2129 = vpop.f32.mrb[0].mxu0
      %2130 = vmatprep.mubr.f32.mxu0 0.0
      %v2131 = vand.u32 %v395, 4294901760
      %2132 = vmatmul.mubr.f32.gmra.mrb[0].mxu0 %v2131
      %v2133 = vpop.f32.mrb[0].mxu0
      %v2134 = vadd.f32 %v1873, %v2133
      %v2135 = vpop.f32.mrb[0].mxu0
      %2136 = vmatprep.mubr.f32.mxu0 0.0
      %v2137 = vand.u32 %v398, 4294901760
      %2138 = vmatmul.mubr.f32.gmra.mrb[0].mxu0 %v2137
      %v2139 = vpop.f32.mrb[0].mxu0
      %v2140 = vadd.f32 %v1879, %v2139
      %v2141 = vpop.f32.mrb[0].mxu0
      %2142 = vmatprep.mubr.f32.mxu0 0.0
      %v2143 = vand.u32 %v401, 4294901760
      %2144 = vmatmul.mubr.f32.gmra.mrb[0].mxu0 %v2143
      %v2145 = vpop.f32.mrb[0].mxu0
      %v2146 = vadd.f32 %v1885, %v2145
      %v2147 = vpop.f32.mrb[0].mxu0
      %2148 = vmatprep.mubr.f32.mxu0 0.0
      %v2149 = vand.u32 %v404, 4294901760
      %2150 = vmatmul.mubr.f32.gmra.mrb[0].mxu0 %v2149
      %v2151 = vpop.f32.mrb[0].mxu0
      %v2152 = vadd.f32 %v1891, %v2151
      %v2153 = vpop.f32.mrb[0].mxu0
      %2154 = vmatprep.mubr.f32.mxu0 0.0
      %v2155 = vand.u32 %v407, 4294901760
      %2156 = vmatmul.mubr.f32.gmra.mrb[0].mxu0 %v2155
      %v2157 = vpop.f32.mrb[0].mxu0
      %v2158 = vadd.f32 %v1897, %v2157
      %v2159 = vpop.f32.mrb[0].mxu0
      %2160 = vmatprep.mubr.f32.mxu0 0.0
      %v2161 = vand.u32 %v410, 4294901760
      %2162 = vmatmul.mubr.f32.gmra.mrb[0].mxu0 %v2161
      %v2163 = vpop.f32.mrb[0].mxu0
      %v2164 = vadd.f32 %v1903, %v2163
      %v2165 = vpop.f32.mrb[0].mxu0
      %2166 = vmatprep.mubr.f32.mxu0 0.0
      %v2167 = vand.u32 %v413, 4294901760
      %2168 = vmatmul.mubr.f32.gmra.mrb[0].mxu0 %v2167
      %v2169 = vpop.f32.mrb[0].mxu0
      %v2170 = vadd.f32 %v1909, %v2169
      %v2171 = vpop.f32.mrb[0].mxu0
      %2172 = vmatprep.mubr.f32.mxu0 0.0
      %v2173 = vand.u32 %v416, 4294901760
      %2174 = vmatmul.mubr.f32.gmra.mrb[0].mxu0 %v2173
      %v2175 = vpop.f32.mrb[0].mxu0
      %v2176 = vadd.f32 %v1915, %v2175
      %v2177 = vpop.f32.mrb[0].mxu0
      %2178 = vmatprep.mubr.f32.mxu0 0.0
      %v2179 = vand.u32 %v419, 4294901760
      %2180 = vmatmul.mubr.f32.gmra.mrb[0].mxu0 %v2179
      %v2181 = vpop.f32.mrb[0].mxu0
      %v2182 = vadd.f32 %v1921, %v2181
      %v2183 = vpop.f32.mrb[0].mxu0
      %2184 = vmatprep.mubr.f32.mxu0 0.0
      %v2185 = vand.u32 %v422, 4294901760
      %2186 = vmatmul.mubr.f32.gmra.mrb[0].mxu0 %v2185
      %v2187 = vpop.f32.mrb[0].mxu0
      %v2188 = vadd.f32 %v1927, %v2187
      %v2189 = vpop.f32.mrb[0].mxu0
      %2190 = vmatprep.mubr.f32.mxu0 0.0
      %v2191 = vand.u32 %v425, 4294901760
      %2192 = vmatmul.mubr.f32.gmra.mrb[0].mxu0 %v2191
      %v2193 = vpop.f32.mrb[0].mxu0
      %v2194 = vadd.f32 %v1933, %v2193
      %v2195 = vpop.f32.mrb[0].mxu0
      %2196 = vmatprep.mubr.f32.mxu0 0.0
      %v2197 = vand.u32 %v428, 4294901760
      %2198 = vmatmul.mubr.f32.gmra.mrb[0].mxu0 %v2197
      %v2199 = vpop.f32.mrb[0].mxu0
      %v2200 = vadd.f32 %v1939, %v2199
      %v2201 = vpop.f32.mrb[0].mxu0
      %2202 = vmatprep.mubr.f32.mxu0 0.0
      %v2203 = vand.u32 %v431, 4294901760
      %2204 = vmatmul.mubr.f32.gmra.mrb[0].mxu0 %v2203
      %v2205 = vpop.f32.mrb[0].mxu0
      %v2206 = vadd.f32 %v1945, %v2205
      %v2207 = vpop.f32.mrb[0].mxu0
      %2208 = vmatprep.mubr.f32.mxu0 0.0
      %v2209 = vand.u32 %v434, 4294901760
      %2210 = vmatmul.mubr.f32.gmra.mrb[0].mxu0 %v2209
      %v2211 = vpop.f32.mrb[0].mxu0
      %v2212 = vadd.f32 %v1951, %v2211
      %v2213 = vpop.f32.mrb[0].mxu0
      %2214 = vmatprep.mubr.f32.mxu0 0.0
      %v2215 = vand.u32 %v437, 4294901760
      %2216 = vmatmul.mubr.f32.gmra.mrb[0].mxu0 %v2215
      %v2217 = vpop.f32.mrb[0].mxu0
      %v2218 = vadd.f32 %v1957, %v2217
      %v2219 = vpop.f32.mrb[0].mxu0
      %2220 = vmatprep.mubr.f32.mxu0 0.0
      %v2221 = vand.u32 %v440, 4294901760
      %2222 = vmatmul.mubr.f32.gmra.mrb[0].mxu0 %v2221
      %v2223 = vpop.f32.mrb[0].mxu0
      %v2224 = vadd.f32 %v1963, %v2223
      %v2225 = vpop.f32.mrb[0].mxu0
      %2226 = vmatprep.mubr.f32.mxu0 0.0
      %v2227 = vand.u32 %v443, 4294901760
      %2228 = vmatmul.mubr.f32.gmra.mrb[0].mxu0 %v2227
      %v2229 = vpop.f32.mrb[0].mxu0
      %v2230 = vadd.f32 %v1969, %v2229
      %v2231 = vpop.f32.mrb[0].mxu0
      %2232 = vmatprep.mubr.f32.mxu0 0.0
      %v2233 = vand.u32 %v446, 4294901760
      %2234 = vmatmul.mubr.f32.gmra.mrb[0].mxu0 %v2233
      %v2235 = vpop.f32.mrb[0].mxu0
      %v2236 = vadd.f32 %v1975, %v2235
      %v2237 = vpop.f32.mrb[0].mxu0
      %2238 = vmatprep.mubr.f32.mxu0 0.0
      %v2239 = vand.u32 %v449, 4294901760
      %2240 = vmatmul.mubr.f32.gmra.mrb[0].mxu0 %v2239
      %v2241 = vpop.f32.mrb[0].mxu0
      %v2242 = vadd.f32 %v1981, %v2241
      %v2243 = vpop.f32.mrb[0].mxu0
      %2244 = vmatprep.mubr.f32.mxu0 0.0
      %v2245 = vand.u32 %v452, 4294901760
      %2246 = vmatmul.mubr.f32.gmra.mrb[0].mxu0 %v2245
      %v2247 = vpop.f32.mrb[0].mxu0
      %v2248 = vadd.f32 %v1987, %v2247
      %v2249 = vpop.f32.mrb[0].mxu0
      %2250 = vmatprep.mubr.f32.mxu0 0.0
      %v2251 = vand.u32 %v455, 4294901760
      %2252 = vmatmul.mubr.f32.gmra.mrb[0].mxu0 %v2251
      %v2253 = vpop.f32.mrb[0].mxu0
      %v2254 = vadd.f32 %v1993, %v2253
      %v2255 = vpop.f32.mrb[0].mxu0
      %2256 = vmatprep.mubr.f32.mxu0 0.0
      %v2257 = vand.u32 %v458, 4294901760
      %2258 = vmatmul.mubr.f32.gmra.mrb[0].mxu0 %v2257
      %v2259 = vpop.f32.mrb[0].mxu0
      %v2260 = vadd.f32 %v1999, %v2259
      %v2261 = vpop.f32.mrb[0].mxu0
      %2262 = vmatprep.mubr.f32.mxu0 0.0
      %v2263 = vand.u32 %v461, 4294901760
      %2264 = vmatmul.mubr.f32.gmra.mrb[0].mxu0 %v2263
      %v2265 = vpop.f32.mrb[0].mxu0
      %v2266 = vadd.f32 %v2005, %v2265
      %v2267 = vpop.f32.mrb[0].mxu0
      %2268 = vmatprep.mubr.f32.mxu0 0.0
      %v2269 = vand.u32 %v464, 4294901760
      %2270 = vmatmul.mubr.f32.gmra.mrb[0].mxu0 %v2269
      %v2271 = vpop.f32.mrb[0].mxu0
      %v2272 = vadd.f32 %v2011, %v2271
      %v2273 = vpop.f32.mrb[0].mxu0
      %2274 = vmatprep.mubr.f32.mxu0 0.0
      %v2275 = vand.u32 %v467, 4294901760
      %2276 = vmatmul.mubr.f32.gmra.mrb[0].mxu0 %v2275
      %v2277 = vpop.f32.mrb[0].mxu0
      %v2278 = vadd.f32 %v2017, %v2277
      %v2279 = vpop.f32.mrb[0].mxu0
      %2280 = vmatprep.mubr.f32.mxu0 0.0
      %v2281 = vand.u32 %v470, 4294901760
      %2282 = vmatmul.mubr.f32.gmra.mrb[0].mxu0 %v2281
      %v2283 = vpop.f32.mrb[0].mxu0
      %v2284 = vadd.f32 %v2023, %v2283
      %v2285 = vpop.f32.mrb[0].mxu0
      %2286 = vmatprep.mubr.f32.mxu0 0.0
      %v2287 = vand.u32 %v473, 4294901760
      %2288 = vmatmul.mubr.f32.gmra.mrb[0].mxu0 %v2287
      %v2289 = vpop.f32.mrb[0].mxu0
      %v2290 = vadd.f32 %v2029, %v2289
      %v2291 = vpop.f32.mrb[0].mxu0
      %2292 = vdwg.mxu0
      %v2294 = vsel %vm378, %v306, 0
      %v2297 = vsel %vm378, %v307, 0
      %v2300 = vsel %vm378, %v308, 0
      %v2303 = vsel %vm378, %v309, 0
      %v2306 = vsel %vm378, %v310, 0
      %v2309 = vsel %vm378, %v311, 0
      %v2312 = vsel %vm378, %v312, 0
      %v2315 = vsel %vm378, %v313, 0
      %v2318 = vsel %vm378, %v314, 0
      %v2321 = vsel %vm378, %v315, 0
      %v2324 = vsel %vm378, %v316, 0
      %v2327 = vsel %vm378, %v317, 0
      %v2330 = vsel %vm378, %v318, 0
      %v2333 = vsel %vm378, %v319, 0
      %v2336 = vsel %vm378, %v320, 0
      %v2339 = vsel %vm378, %v321, 0
      %v2342 = vsel %vm378, %v322, 0
      %v2345 = vsel %vm378, %v323, 0
      %v2348 = vsel %vm378, %v324, 0
      %v2351 = vsel %vm378, %v325, 0
      %v2354 = vsel %vm378, %v326, 0
      %v2357 = vsel %vm378, %v327, 0
      %v2360 = vsel %vm378, %v328, 0
      %v2363 = vsel %vm378, %v329, 0
      %v2366 = vsel %vm378, %v330, 0
      %v2369 = vsel %vm378, %v331, 0
      %v2372 = vsel %vm378, %v332, 0
      %v2375 = vsel %vm378, %v333, 0
      %v2378 = vsel %vm378, %v334, 0
      %v2381 = vsel %vm378, %v335, 0
      %v2384 = vsel %vm378, %v336, 0
      %v2387 = vsel %vm378, %v337, 0
      %2389 = vmatprep.subr.mxu0 0.0
      %v2390 = vand.u32 %v338, 4294901760
      %2391 = vmatpush1.msra.mxu0 %v2390
      %2392 = vmatprep.subr.mxu0 0.0
      %v2393 = vand.u32 %v339, 4294901760
      %2394 = vmatpush1.msra.mxu0 %v2393
      %2395 = vmatprep.subr.mxu0 0.0
      %v2396 = vand.u32 %v340, 4294901760
      %2397 = vmatpush1.msra.mxu0 %v2396
      %2398 = vmatprep.subr.mxu0 0.0
      %v2399 = vand.u32 %v341, 4294901760
      %2400 = vmatpush1.msra.mxu0 %v2399
      %2401 = vmatprep.subr.mxu0 0.0
      %2402 = vmatpush1.msra.mxu0 0.0
      %2403 = vmatprep.subr.mxu0 0.0
      %2404 = vmatpush1.msra.mxu0 0.0
      %2405 = vmatprep.subr.mxu0 0.0
      %2406 = vmatpush1.msra.mxu0 0.0
      %2407 = vmatprep.subr.mxu0 0.0
      %2408 = vmatpush1.msra.mxu0 0.0
      %2409 = vmatprep.subr.mxu0 0.0
      %2410 = vmatpush1.msra.mxu0 0.0
      %2411 = vmatprep.subr.mxu0 0.0
      %2412 = vmatpush1.msra.mxu0 0.0
      %2413 = vmatprep.subr.mxu0 0.0
      %2414 = vmatpush1.msra.mxu0 0.0
      %2415 = vmatprep.subr.mxu0 0.0
      %2416 = vmatpush1.msra.mxu0 0.0
      %2417 = vmatprep.subr.mxu0 0.0
      %2418 = vmatpush1.msra.mxu0 0.0
      %2419 = vmatprep.subr.mxu0 0.0
      %2420 = vmatpush1.msra.mxu0 0.0
      %2421 = vmatprep.subr.mxu0 0.0
      %2422 = vmatpush1.msra.mxu0 0.0
      %2423 = vmatprep.subr.mxu0 0.0
      %2424 = vmatpush1.msra.mxu0 0.0
      %2425 = vmatprep.subr.mxu0 0.0
      %2426 = vmatpush1.msra.mxu0 0.0
      %2427 = vmatprep.subr.mxu0 0.0
      %2428 = vmatpush1.msra.mxu0 0.0
      %2429 = vmatprep.subr.mxu0 0.0
      %2430 = vmatpush1.msra.mxu0 0.0
      %2431 = vmatprep.subr.mxu0 0.0
      %2432 = vmatpush1.msra.mxu0 0.0
      %2433 = vmatprep.subr.mxu0 0.0
      %2434 = vmatpush1.msra.mxu0 0.0
      %2435 = vmatprep.subr.mxu0 0.0
      %2436 = vmatpush1.msra.mxu0 0.0
      %2437 = vmatprep.subr.mxu0 0.0
      %2438 = vmatpush1.msra.mxu0 0.0
      %2439 = vmatprep.subr.mxu0 0.0
      %2440 = vmatpush1.msra.mxu0 0.0
      %2441 = vmatprep.subr.mxu0 0.0
      %2442 = vmatpush1.msra.mxu0 0.0
      %2443 = vmatprep.subr.mxu0 0.0
      %2444 = vmatpush1.msra.mxu0 0.0
      %2445 = vmatprep.subr.mxu0 0.0
      %2446 = vmatpush1.msra.mxu0 0.0
      %2447 = vmatprep.subr.mxu0 0.0
      %2448 = vmatpush1.msra.mxu0 0.0
      %2449 = vmatprep.subr.mxu0 0.0
      %2450 = vmatpush1.msra.mxu0 0.0
      %2451 = vmatprep.subr.mxu0 0.0
      %2452 = vmatpush1.msra.mxu0 0.0
      %2453 = vmatprep.subr.mxu0 0.0
      %2454 = vmatpush1.msra.mxu0 0.0
      %2455 = vmatprep.subr.mxu0 0.0
      %2456 = vmatpush1.msra.mxu0 0.0
      %2457 = vmatprep.mubr.f32.mxu0 0.0
      %v2458 = vand.u32 %v2294, 4294901760
      %v2459 = vsub.f32 %v2294, %v2458
      %v2460 = vand.u32 %v2459, 4294901760
      %v2461 = vsub.f32 %v2459, %v2460
      %v2462 = vand.u32 %v2461, 4294901760
      %2463 = vmatmul.mubr.f32.gmra.mrb[0].mxu0 %v2462
      %v2464 = vpop.f32.mrb[0].mxu0
      %v2465 = vadd.f32 %v2104, %v2464
      %v2466 = vpop.f32.mrb[0].mxu0
      %2467 = vmatprep.mubr.f32.mxu0 0.0
      %v2468 = vand.u32 %v2297, 4294901760
      %v2469 = vsub.f32 %v2297, %v2468
      %v2470 = vand.u32 %v2469, 4294901760
      %v2471 = vsub.f32 %v2469, %v2470
      %v2472 = vand.u32 %v2471, 4294901760
      %2473 = vmatmul.mubr.f32.gmra.mrb[0].mxu0 %v2472
      %v2474 = vpop.f32.mrb[0].mxu0
      %v2475 = vadd.f32 %v2110, %v2474
      %v2476 = vpop.f32.mrb[0].mxu0
      %2477 = vmatprep.mubr.f32.mxu0 0.0
      %v2478 = vand.u32 %v2300, 4294901760
      %v2479 = vsub.f32 %v2300, %v2478
      %v2480 = vand.u32 %v2479, 4294901760
      %v2481 = vsub.f32 %v2479, %v2480
      %v2482 = vand.u32 %v2481, 4294901760
      %2483 = vmatmul.mubr.f32.gmra.mrb[0].mxu0 %v2482
      %v2484 = vpop.f32.mrb[0].mxu0
      %v2485 = vadd.f32 %v2116, %v2484
      %v2486 = vpop.f32.mrb[0].mxu0
      %2487 = vmatprep.mubr.f32.mxu0 0.0
      %v2488 = vand.u32 %v2303, 4294901760
      %v2489 = vsub.f32 %v2303, %v2488
      %v2490 = vand.u32 %v2489, 4294901760
      %v2491 = vsub.f32 %v2489, %v2490
      %v2492 = vand.u32 %v2491, 4294901760
      %2493 = vmatmul.mubr.f32.gmra.mrb[0].mxu0 %v2492
      %v2494 = vpop.f32.mrb[0].mxu0
      %v2495 = vadd.f32 %v2122, %v2494
      %v2496 = vpop.f32.mrb[0].mxu0
      %2497 = vmatprep.mubr.f32.mxu0 0.0
      %v2498 = vand.u32 %v2306, 4294901760
      %v2499 = vsub.f32 %v2306, %v2498
      %v2500 = vand.u32 %v2499, 4294901760
      %v2501 = vsub.f32 %v2499, %v2500
      %v2502 = vand.u32 %v2501, 4294901760
      %2503 = vmatmul.mubr.f32.gmra.mrb[0].mxu0 %v2502
      %v2504 = vpop.f32.mrb[0].mxu0
      %v2505 = vadd.f32 %v2128, %v2504
      %v2506 = vpop.f32.mrb[0].mxu0
      %2507 = vmatprep.mubr.f32.mxu0 0.0
      %v2508 = vand.u32 %v2309, 4294901760
      %v2509 = vsub.f32 %v2309, %v2508
      %v2510 = vand.u32 %v2509, 4294901760
      %v2511 = vsub.f32 %v2509, %v2510
      %v2512 = vand.u32 %v2511, 4294901760
      %2513 = vmatmul.mubr.f32.gmra.mrb[0].mxu0 %v2512
      %v2514 = vpop.f32.mrb[0].mxu0
      %v2515 = vadd.f32 %v2134, %v2514
      %v2516 = vpop.f32.mrb[0].mxu0
      %2517 = vmatprep.mubr.f32.mxu0 0.0
      %v2518 = vand.u32 %v2312, 4294901760
      %v2519 = vsub.f32 %v2312, %v2518
      %v2520 = vand.u32 %v2519, 4294901760
      %v2521 = vsub.f32 %v2519, %v2520
      %v2522 = vand.u32 %v2521, 4294901760
      %2523 = vmatmul.mubr.f32.gmra.mrb[0].mxu0 %v2522
      %v2524 = vpop.f32.mrb[0].mxu0
      %v2525 = vadd.f32 %v2140, %v2524
      %v2526 = vpop.f32.mrb[0].mxu0
      %2527 = vmatprep.mubr.f32.mxu0 0.0
      %v2528 = vand.u32 %v2315, 4294901760
      %v2529 = vsub.f32 %v2315, %v2528
      %v2530 = vand.u32 %v2529, 4294901760
      %v2531 = vsub.f32 %v2529, %v2530
      %v2532 = vand.u32 %v2531, 4294901760
      %2533 = vmatmul.mubr.f32.gmra.mrb[0].mxu0 %v2532
      %v2534 = vpop.f32.mrb[0].mxu0
      %v2535 = vadd.f32 %v2146, %v2534
      %v2536 = vpop.f32.mrb[0].mxu0
      %2537 = vmatprep.mubr.f32.mxu0 0.0
      %v2538 = vand.u32 %v2318, 4294901760
      %v2539 = vsub.f32 %v2318, %v2538
      %v2540 = vand.u32 %v2539, 4294901760
      %v2541 = vsub.f32 %v2539, %v2540
      %v2542 = vand.u32 %v2541, 4294901760
      %2543 = vmatmul.mubr.f32.gmra.mrb[0].mxu0 %v2542
      %v2544 = vpop.f32.mrb[0].mxu0
      %v2545 = vadd.f32 %v2152, %v2544
      %v2546 = vpop.f32.mrb[0].mxu0
      %2547 = vmatprep.mubr.f32.mxu0 0.0
      %v2548 = vand.u32 %v2321, 4294901760
      %v2549 = vsub.f32 %v2321, %v2548
      %v2550 = vand.u32 %v2549, 4294901760
      %v2551 = vsub.f32 %v2549, %v2550
      %v2552 = vand.u32 %v2551, 4294901760
      %2553 = vmatmul.mubr.f32.gmra.mrb[0].mxu0 %v2552
      %v2554 = vpop.f32.mrb[0].mxu0
      %v2555 = vadd.f32 %v2158, %v2554
      %v2556 = vpop.f32.mrb[0].mxu0
      %2557 = vmatprep.mubr.f32.mxu0 0.0
      %v2558 = vand.u32 %v2324, 4294901760
      %v2559 = vsub.f32 %v2324, %v2558
      %v2560 = vand.u32 %v2559, 4294901760
      %v2561 = vsub.f32 %v2559, %v2560
      %v2562 = vand.u32 %v2561, 4294901760
      %2563 = vmatmul.mubr.f32.gmra.mrb[0].mxu0 %v2562
      %v2564 = vpop.f32.mrb[0].mxu0
      %v2565 = vadd.f32 %v2164, %v2564
      %v2566 = vpop.f32.mrb[0].mxu0
      %2567 = vmatprep.mubr.f32.mxu0 0.0
      %v2568 = vand.u32 %v2327, 4294901760
      %v2569 = vsub.f32 %v2327, %v2568
      %v2570 = vand.u32 %v2569, 4294901760
      %v2571 = vsub.f32 %v2569, %v2570
      %v2572 = vand.u32 %v2571, 4294901760
      %2573 = vmatmul.mubr.f32.gmra.mrb[0].mxu0 %v2572
      %v2574 = vpop.f32.mrb[0].mxu0
      %v2575 = vadd.f32 %v2170, %v2574
      %v2576 = vpop.f32.mrb[0].mxu0
      %2577 = vmatprep.mubr.f32.mxu0 0.0
      %v2578 = vand.u32 %v2330, 4294901760
      %v2579 = vsub.f32 %v2330, %v2578
      %v2580 = vand.u32 %v2579, 4294901760
      %v2581 = vsub.f32 %v2579, %v2580
      %v2582 = vand.u32 %v2581, 4294901760
      %2583 = vmatmul.mubr.f32.gmra.mrb[0].mxu0 %v2582
      %v2584 = vpop.f32.mrb[0].mxu0
      %v2585 = vadd.f32 %v2176, %v2584
      %v2586 = vpop.f32.mrb[0].mxu0
      %2587 = vmatprep.mubr.f32.mxu0 0.0
      %v2588 = vand.u32 %v2333, 4294901760
      %v2589 = vsub.f32 %v2333, %v2588
      %v2590 = vand.u32 %v2589, 4294901760
      %v2591 = vsub.f32 %v2589, %v2590
      %v2592 = vand.u32 %v2591, 4294901760
      %2593 = vmatmul.mubr.f32.gmra.mrb[0].mxu0 %v2592
      %v2594 = vpop.f32.mrb[0].mxu0
      %v2595 = vadd.f32 %v2182, %v2594
      %v2596 = vpop.f32.mrb[0].mxu0
      %2597 = vmatprep.mubr.f32.mxu0 0.0
      %v2598 = vand.u32 %v2336, 4294901760
      %v2599 = vsub.f32 %v2336, %v2598
      %v2600 = vand.u32 %v2599, 4294901760
      %v2601 = vsub.f32 %v2599, %v2600
      %v2602 = vand.u32 %v2601, 4294901760
      %2603 = vmatmul.mubr.f32.gmra.mrb[0].mxu0 %v2602
      %v2604 = vpop.f32.mrb[0].mxu0
      %v2605 = vadd.f32 %v2188, %v2604
      %v2606 = vpop.f32.mrb[0].mxu0
      %2607 = vmatprep.mubr.f32.mxu0 0.0
      %v2608 = vand.u32 %v2339, 4294901760
      %v2609 = vsub.f32 %v2339, %v2608
      %v2610 = vand.u32 %v2609, 4294901760
      %v2611 = vsub.f32 %v2609, %v2610
      %v2612 = vand.u32 %v2611, 4294901760
      %2613 = vmatmul.mubr.f32.gmra.mrb[0].mxu0 %v2612
      %v2614 = vpop.f32.mrb[0].mxu0
      %v2615 = vadd.f32 %v2194, %v2614
      %v2616 = vpop.f32.mrb[0].mxu0
      %2617 = vmatprep.mubr.f32.mxu0 0.0
      %v2618 = vand.u32 %v2342, 4294901760
      %v2619 = vsub.f32 %v2342, %v2618
      %v2620 = vand.u32 %v2619, 4294901760
      %v2621 = vsub.f32 %v2619, %v2620
      %v2622 = vand.u32 %v2621, 4294901760
      %2623 = vmatmul.mubr.f32.gmra.mrb[0].mxu0 %v2622
      %v2624 = vpop.f32.mrb[0].mxu0
      %v2625 = vadd.f32 %v2200, %v2624
      %v2626 = vpop.f32.mrb[0].mxu0
      %2627 = vmatprep.mubr.f32.mxu0 0.0
      %v2628 = vand.u32 %v2345, 4294901760
      %v2629 = vsub.f32 %v2345, %v2628
      %v2630 = vand.u32 %v2629, 4294901760
      %v2631 = vsub.f32 %v2629, %v2630
      %v2632 = vand.u32 %v2631, 4294901760
      %2633 = vmatmul.mubr.f32.gmra.mrb[0].mxu0 %v2632
      %v2634 = vpop.f32.mrb[0].mxu0
      %v2635 = vadd.f32 %v2206, %v2634
      %v2636 = vpop.f32.mrb[0].mxu0
      %2637 = vmatprep.mubr.f32.mxu0 0.0
      %v2638 = vand.u32 %v2348, 4294901760
      %v2639 = vsub.f32 %v2348, %v2638
      %v2640 = vand.u32 %v2639, 4294901760
      %v2641 = vsub.f32 %v2639, %v2640
      %v2642 = vand.u32 %v2641, 4294901760
      %2643 = vmatmul.mubr.f32.gmra.mrb[0].mxu0 %v2642
      %v2644 = vpop.f32.mrb[0].mxu0
      %v2645 = vadd.f32 %v2212, %v2644
      %v2646 = vpop.f32.mrb[0].mxu0
      %2647 = vmatprep.mubr.f32.mxu0 0.0
      %v2648 = vand.u32 %v2351, 4294901760
      %v2649 = vsub.f32 %v2351, %v2648
      %v2650 = vand.u32 %v2649, 4294901760
      %v2651 = vsub.f32 %v2649, %v2650
      %v2652 = vand.u32 %v2651, 4294901760
      %2653 = vmatmul.mubr.f32.gmra.mrb[0].mxu0 %v2652
      %v2654 = vpop.f32.mrb[0].mxu0
      %v2655 = vadd.f32 %v2218, %v2654
      %v2656 = vpop.f32.mrb[0].mxu0
      %2657 = vmatprep.mubr.f32.mxu0 0.0
      %v2658 = vand.u32 %v2354, 4294901760
      %v2659 = vsub.f32 %v2354, %v2658
      %v2660 = vand.u32 %v2659, 4294901760
      %v2661 = vsub.f32 %v2659, %v2660
      %v2662 = vand.u32 %v2661, 4294901760
      %2663 = vmatmul.mubr.f32.gmra.mrb[0].mxu0 %v2662
      %v2664 = vpop.f32.mrb[0].mxu0
      %v2665 = vadd.f32 %v2224, %v2664
      %v2666 = vpop.f32.mrb[0].mxu0
      %2667 = vmatprep.mubr.f32.mxu0 0.0
      %v2668 = vand.u32 %v2357, 4294901760
      %v2669 = vsub.f32 %v2357, %v2668
      %v2670 = vand.u32 %v2669, 4294901760
      %v2671 = vsub.f32 %v2669, %v2670
      %v2672 = vand.u32 %v2671, 4294901760
      %2673 = vmatmul.mubr.f32.gmra.mrb[0].mxu0 %v2672
      %v2674 = vpop.f32.mrb[0].mxu0
      %v2675 = vadd.f32 %v2230, %v2674
      %v2676 = vpop.f32.mrb[0].mxu0
      %2677 = vmatprep.mubr.f32.mxu0 0.0
      %v2678 = vand.u32 %v2360, 4294901760
      %v2679 = vsub.f32 %v2360, %v2678
      %v2680 = vand.u32 %v2679, 4294901760
      %v2681 = vsub.f32 %v2679, %v2680
      %v2682 = vand.u32 %v2681, 4294901760
      %2683 = vmatmul.mubr.f32.gmra.mrb[0].mxu0 %v2682
      %v2684 = vpop.f32.mrb[0].mxu0
      %v2685 = vadd.f32 %v2236, %v2684
      %v2686 = vpop.f32.mrb[0].mxu0
      %2687 = vmatprep.mubr.f32.mxu0 0.0
      %v2688 = vand.u32 %v2363, 4294901760
      %v2689 = vsub.f32 %v2363, %v2688
      %v2690 = vand.u32 %v2689, 4294901760
      %v2691 = vsub.f32 %v2689, %v2690
      %v2692 = vand.u32 %v2691, 4294901760
      %2693 = vmatmul.mubr.f32.gmra.mrb[0].mxu0 %v2692
      %v2694 = vpop.f32.mrb[0].mxu0
      %v2695 = vadd.f32 %v2242, %v2694
      %v2696 = vpop.f32.mrb[0].mxu0
      %2697 = vmatprep.mubr.f32.mxu0 0.0
      %v2698 = vand.u32 %v2366, 4294901760
      %v2699 = vsub.f32 %v2366, %v2698
      %v2700 = vand.u32 %v2699, 4294901760
      %v2701 = vsub.f32 %v2699, %v2700
      %v2702 = vand.u32 %v2701, 4294901760
      %2703 = vmatmul.mubr.f32.gmra.mrb[0].mxu0 %v2702
      %v2704 = vpop.f32.mrb[0].mxu0
      %v2705 = vadd.f32 %v2248, %v2704
      %v2706 = vpop.f32.mrb[0].mxu0
      %2707 = vmatprep.mubr.f32.mxu0 0.0
      %v2708 = vand.u32 %v2369, 4294901760
      %v2709 = vsub.f32 %v2369, %v2708
      %v2710 = vand.u32 %v2709, 4294901760
      %v2711 = vsub.f32 %v2709, %v2710
      %v2712 = vand.u32 %v2711, 4294901760
      %2713 = vmatmul.mubr.f32.gmra.mrb[0].mxu0 %v2712
      %v2714 = vpop.f32.mrb[0].mxu0
      %v2715 = vadd.f32 %v2254, %v2714
      %v2716 = vpop.f32.mrb[0].mxu0
      %2717 = vmatprep.mubr.f32.mxu0 0.0
      %v2718 = vand.u32 %v2372, 4294901760
      %v2719 = vsub.f32 %v2372, %v2718
      %v2720 = vand.u32 %v2719, 4294901760
      %v2721 = vsub.f32 %v2719, %v2720
      %v2722 = vand.u32 %v2721, 4294901760
      %2723 = vmatmul.mubr.f32.gmra.mrb[0].mxu0 %v2722
      %v2724 = vpop.f32.mrb[0].mxu0
      %v2725 = vadd.f32 %v2260, %v2724
      %v2726 = vpop.f32.mrb[0].mxu0
      %2727 = vmatprep.mubr.f32.mxu0 0.0
      %v2728 = vand.u32 %v2375, 4294901760
      %v2729 = vsub.f32 %v2375, %v2728
      %v2730 = vand.u32 %v2729, 4294901760
      %v2731 = vsub.f32 %v2729, %v2730
      %v2732 = vand.u32 %v2731, 4294901760
      %2733 = vmatmul.mubr.f32.gmra.mrb[0].mxu0 %v2732
      %v2734 = vpop.f32.mrb[0].mxu0
      %v2735 = vadd.f32 %v2266, %v2734
      %v2736 = vpop.f32.mrb[0].mxu0
      %2737 = vmatprep.mubr.f32.mxu0 0.0
      %v2738 = vand.u32 %v2378, 4294901760
      %v2739 = vsub.f32 %v2378, %v2738
      %v2740 = vand.u32 %v2739, 4294901760
      %v2741 = vsub.f32 %v2739, %v2740
      %v2742 = vand.u32 %v2741, 4294901760
      %2743 = vmatmul.mubr.f32.gmra.mrb[0].mxu0 %v2742
      %v2744 = vpop.f32.mrb[0].mxu0
      %v2745 = vadd.f32 %v2272, %v2744
      %v2746 = vpop.f32.mrb[0].mxu0
      %2747 = vmatprep.mubr.f32.mxu0 0.0
      %v2748 = vand.u32 %v2381, 4294901760
      %v2749 = vsub.f32 %v2381, %v2748
      %v2750 = vand.u32 %v2749, 4294901760
      %v2751 = vsub.f32 %v2749, %v2750
      %v2752 = vand.u32 %v2751, 4294901760
      %2753 = vmatmul.mubr.f32.gmra.mrb[0].mxu0 %v2752
      %v2754 = vpop.f32.mrb[0].mxu0
      %v2755 = vadd.f32 %v2278, %v2754
      %v2756 = vpop.f32.mrb[0].mxu0
      %2757 = vmatprep.mubr.f32.mxu0 0.0
      %v2758 = vand.u32 %v2384, 4294901760
      %v2759 = vsub.f32 %v2384, %v2758
      %v2760 = vand.u32 %v2759, 4294901760
      %v2761 = vsub.f32 %v2759, %v2760
      %v2762 = vand.u32 %v2761, 4294901760
      %2763 = vmatmul.mubr.f32.gmra.mrb[0].mxu0 %v2762
      %v2764 = vpop.f32.mrb[0].mxu0
      %v2765 = vadd.f32 %v2284, %v2764
      %v2766 = vpop.f32.mrb[0].mxu0
      %2767 = vmatprep.mubr.f32.mxu0 0.0
      %v2768 = vand.u32 %v2387, 4294901760
      %v2769 = vsub.f32 %v2387, %v2768
      %v2770 = vand.u32 %v2769, 4294901760
      %v2771 = vsub.f32 %v2769, %v2770
      %v2772 = vand.u32 %v2771, 4294901760
      %2773 = vmatmul.mubr.f32.gmra.mrb[0].mxu0 %v2772
      %v2774 = vpop.f32.mrb[0].mxu0
      %v2775 = vadd.f32 %v2290, %v2774
      %v2776 = vpop.f32.mrb[0].mxu0
      %2777 = vdwg.mxu0
      %2778 = vmatprep.subr.mxu0 0.0
      %v2779 = vand.u32 %v338, 4294901760
      %v2780 = vsub.f32 %v338, %v2779
      %v2781 = vand.u32 %v2780, 4294901760
      %v2782 = vsub.f32 %v2780, %v2781
      %v2783 = vand.u32 %v2782, 4294901760
      %2784 = vmatpush1.msra.mxu0 %v2783
      %2785 = vmatprep.subr.mxu0 0.0
      %v2786 = vand.u32 %v339, 4294901760
      %v2787 = vsub.f32 %v339, %v2786
      %v2788 = vand.u32 %v2787, 4294901760
      %v2789 = vsub.f32 %v2787, %v2788
      %v2790 = vand.u32 %v2789, 4294901760
      %2791 = vmatpush1.msra.mxu0 %v2790
      %2792 = vmatprep.subr.mxu0 0.0
      %v2793 = vand.u32 %v340, 4294901760
      %v2794 = vsub.f32 %v340, %v2793
      %v2795 = vand.u32 %v2794, 4294901760
      %v2796 = vsub.f32 %v2794, %v2795
      %v2797 = vand.u32 %v2796, 4294901760
      %2798 = vmatpush1.msra.mxu0 %v2797
      %2799 = vmatprep.subr.mxu0 0.0
      %v2800 = vand.u32 %v341, 4294901760
      %v2801 = vsub.f32 %v341, %v2800
      %v2802 = vand.u32 %v2801, 4294901760
      %v2803 = vsub.f32 %v2801, %v2802
      %v2804 = vand.u32 %v2803, 4294901760
      %2805 = vmatpush1.msra.mxu0 %v2804
      %2806 = vmatprep.subr.mxu0 0.0
      %2807 = vmatpush1.msra.mxu0 0.0
      %2808 = vmatprep.subr.mxu0 0.0
      %2809 = vmatpush1.msra.mxu0 0.0
      %2810 = vmatprep.subr.mxu0 0.0
      %2811 = vmatpush1.msra.mxu0 0.0
      %2812 = vmatprep.subr.mxu0 0.0
      %2813 = vmatpush1.msra.mxu0 0.0
      %2814 = vmatprep.subr.mxu0 0.0
      %2815 = vmatpush1.msra.mxu0 0.0
      %2816 = vmatprep.subr.mxu0 0.0
      %2817 = vmatpush1.msra.mxu0 0.0
      %2818 = vmatprep.subr.mxu0 0.0
      %2819 = vmatpush1.msra.mxu0 0.0
      %2820 = vmatprep.subr.mxu0 0.0
      %2821 = vmatpush1.msra.mxu0 0.0
      %2822 = vmatprep.subr.mxu0 0.0
      %2823 = vmatpush1.msra.mxu0 0.0
      %2824 = vmatprep.subr.mxu0 0.0
      %2825 = vmatpush1.msra.mxu0 0.0
      %2826 = vmatprep.subr.mxu0 0.0
      %2827 = vmatpush1.msra.mxu0 0.0
      %2828 = vmatprep.subr.mxu0 0.0
      %2829 = vmatpush1.msra.mxu0 0.0
      %2830 = vmatprep.subr.mxu0 0.0
      %2831 = vmatpush1.msra.mxu0 0.0
      %2832 = vmatprep.subr.mxu0 0.0
      %2833 = vmatpush1.msra.mxu0 0.0
      %2834 = vmatprep.subr.mxu0 0.0
      %2835 = vmatpush1.msra.mxu0 0.0
      %2836 = vmatprep.subr.mxu0 0.0
      %2837 = vmatpush1.msra.mxu0 0.0
      %2838 = vmatprep.subr.mxu0 0.0
      %2839 = vmatpush1.msra.mxu0 0.0
      %2840 = vmatprep.subr.mxu0 0.0
      %2841 = vmatpush1.msra.mxu0 0.0
      %2842 = vmatprep.subr.mxu0 0.0
      %2843 = vmatpush1.msra.mxu0 0.0
      %2844 = vmatprep.subr.mxu0 0.0
      %2845 = vmatpush1.msra.mxu0 0.0
      %2846 = vmatprep.subr.mxu0 0.0
      %2847 = vmatpush1.msra.mxu0 0.0
      %2848 = vmatprep.subr.mxu0 0.0
      %2849 = vmatpush1.msra.mxu0 0.0
      %2850 = vmatprep.subr.mxu0 0.0
      %2851 = vmatpush1.msra.mxu0 0.0
      %2852 = vmatprep.subr.mxu0 0.0
      %2853 = vmatpush1.msra.mxu0 0.0
      %2854 = vmatprep.subr.mxu0 0.0
      %2855 = vmatpush1.msra.mxu0 0.0
      %2856 = vmatprep.subr.mxu0 0.0
      %2857 = vmatpush1.msra.mxu0 0.0
      %2858 = vmatprep.subr.mxu0 0.0
      %2859 = vmatpush1.msra.mxu0 0.0
      %2860 = vmatprep.subr.mxu0 0.0
      %2861 = vmatpush1.msra.mxu0 0.0
      %2862 = vmatprep.mubr.f32.mxu0 0.0
      %v2863 = vand.u32 %v2294, 4294901760
      %2864 = vmatmul.mubr.f32.gmra.mrb[0].mxu0 %v2863
      %v2865 = vpop.f32.mrb[0].mxu0
      %v2866 = vadd.f32 %v2465, %v2865
      %v2867 = vpop.f32.mrb[0].mxu0
      %2868 = vmatprep.mubr.f32.mxu0 0.0
      %v2869 = vand.u32 %v2297, 4294901760
      %2870 = vmatmul.mubr.f32.gmra.mrb[0].mxu0 %v2869
      %v2871 = vpop.f32.mrb[0].mxu0
      %v2872 = vadd.f32 %v2475, %v2871
      %v2873 = vpop.f32.mrb[0].mxu0
      %2874 = vmatprep.mubr.f32.mxu0 0.0
      %v2875 = vand.u32 %v2300, 4294901760
      %2876 = vmatmul.mubr.f32.gmra.mrb[0].mxu0 %v2875
      %v2877 = vpop.f32.mrb[0].mxu0
      %v2878 = vadd.f32 %v2485, %v2877
      %v2879 = vpop.f32.mrb[0].mxu0
      %2880 = vmatprep.mubr.f32.mxu0 0.0
      %v2881 = vand.u32 %v2303, 4294901760
      %2882 = vmatmul.mubr.f32.gmra.mrb[0].mxu0 %v2881
      %v2883 = vpop.f32.mrb[0].mxu0
      %v2884 = vadd.f32 %v2495, %v2883
      %v2885 = vpop.f32.mrb[0].mxu0
      %2886 = vmatprep.mubr.f32.mxu0 0.0
      %v2887 = vand.u32 %v2306, 4294901760
      %2888 = vmatmul.mubr.f32.gmra.mrb[0].mxu0 %v2887
      %v2889 = vpop.f32.mrb[0].mxu0
      %v2890 = vadd.f32 %v2505, %v2889
      %v2891 = vpop.f32.mrb[0].mxu0
      %2892 = vmatprep.mubr.f32.mxu0 0.0
      %v2893 = vand.u32 %v2309, 4294901760
      %2894 = vmatmul.mubr.f32.gmra.mrb[0].mxu0 %v2893
      %v2895 = vpop.f32.mrb[0].mxu0
      %v2896 = vadd.f32 %v2515, %v2895
      %v2897 = vpop.f32.mrb[0].mxu0
      %2898 = vmatprep.mubr.f32.mxu0 0.0
      %v2899 = vand.u32 %v2312, 4294901760
      %2900 = vmatmul.mubr.f32.gmra.mrb[0].mxu0 %v2899
      %v2901 = vpop.f32.mrb[0].mxu0
      %v2902 = vadd.f32 %v2525, %v2901
      %v2903 = vpop.f32.mrb[0].mxu0
      %2904 = vmatprep.mubr.f32.mxu0 0.0
      %v2905 = vand.u32 %v2315, 4294901760
      %2906 = vmatmul.mubr.f32.gmra.mrb[0].mxu0 %v2905
      %v2907 = vpop.f32.mrb[0].mxu0
      %v2908 = vadd.f32 %v2535, %v2907
      %v2909 = vpop.f32.mrb[0].mxu0
      %2910 = vmatprep.mubr.f32.mxu0 0.0
      %v2911 = vand.u32 %v2318, 4294901760
      %2912 = vmatmul.mubr.f32.gmra.mrb[0].mxu0 %v2911
      %v2913 = vpop.f32.mrb[0].mxu0
      %v2914 = vadd.f32 %v2545, %v2913
      %v2915 = vpop.f32.mrb[0].mxu0
      %2916 = vmatprep.mubr.f32.mxu0 0.0
      %v2917 = vand.u32 %v2321, 4294901760
      %2918 = vmatmul.mubr.f32.gmra.mrb[0].mxu0 %v2917
      %v2919 = vpop.f32.mrb[0].mxu0
      %v2920 = vadd.f32 %v2555, %v2919
      %v2921 = vpop.f32.mrb[0].mxu0
      %2922 = vmatprep.mubr.f32.mxu0 0.0
      %v2923 = vand.u32 %v2324, 4294901760
      %2924 = vmatmul.mubr.f32.gmra.mrb[0].mxu0 %v2923
      %v2925 = vpop.f32.mrb[0].mxu0
      %v2926 = vadd.f32 %v2565, %v2925
      %v2927 = vpop.f32.mrb[0].mxu0
      %2928 = vmatprep.mubr.f32.mxu0 0.0
      %v2929 = vand.u32 %v2327, 4294901760
      %2930 = vmatmul.mubr.f32.gmra.mrb[0].mxu0 %v2929
      %v2931 = vpop.f32.mrb[0].mxu0
      %v2932 = vadd.f32 %v2575, %v2931
      %v2933 = vpop.f32.mrb[0].mxu0
      %2934 = vmatprep.mubr.f32.mxu0 0.0
      %v2935 = vand.u32 %v2330, 4294901760
      %2936 = vmatmul.mubr.f32.gmra.mrb[0].mxu0 %v2935
      %v2937 = vpop.f32.mrb[0].mxu0
      %v2938 = vadd.f32 %v2585, %v2937
      %v2939 = vpop.f32.mrb[0].mxu0
      %2940 = vmatprep.mubr.f32.mxu0 0.0
      %v2941 = vand.u32 %v2333, 4294901760
      %2942 = vmatmul.mubr.f32.gmra.mrb[0].mxu0 %v2941
      %v2943 = vpop.f32.mrb[0].mxu0
      %v2944 = vadd.f32 %v2595, %v2943
      %v2945 = vpop.f32.mrb[0].mxu0
      %2946 = vmatprep.mubr.f32.mxu0 0.0
      %v2947 = vand.u32 %v2336, 4294901760
      %2948 = vmatmul.mubr.f32.gmra.mrb[0].mxu0 %v2947
      %v2949 = vpop.f32.mrb[0].mxu0
      %v2950 = vadd.f32 %v2605, %v2949
      %v2951 = vpop.f32.mrb[0].mxu0
      %2952 = vmatprep.mubr.f32.mxu0 0.0
      %v2953 = vand.u32 %v2339, 4294901760
      %2954 = vmatmul.mubr.f32.gmra.mrb[0].mxu0 %v2953
      %v2955 = vpop.f32.mrb[0].mxu0
      %v2956 = vadd.f32 %v2615, %v2955
      %v2957 = vpop.f32.mrb[0].mxu0
      %2958 = vmatprep.mubr.f32.mxu0 0.0
      %v2959 = vand.u32 %v2342, 4294901760
      %2960 = vmatmul.mubr.f32.gmra.mrb[0].mxu0 %v2959
      %v2961 = vpop.f32.mrb[0].mxu0
      %v2962 = vadd.f32 %v2625, %v2961
      %v2963 = vpop.f32.mrb[0].mxu0
      %2964 = vmatprep.mubr.f32.mxu0 0.0
      %v2965 = vand.u32 %v2345, 4294901760
      %2966 = vmatmul.mubr.f32.gmra.mrb[0].mxu0 %v2965
      %v2967 = vpop.f32.mrb[0].mxu0
      %v2968 = vadd.f32 %v2635, %v2967
      %v2969 = vpop.f32.mrb[0].mxu0
      %2970 = vmatprep.mubr.f32.mxu0 0.0
      %v2971 = vand.u32 %v2348, 4294901760
      %2972 = vmatmul.mubr.f32.gmra.mrb[0].mxu0 %v2971
      %v2973 = vpop.f32.mrb[0].mxu0
      %v2974 = vadd.f32 %v2645, %v2973
      %v2975 = vpop.f32.mrb[0].mxu0
      %2976 = vmatprep.mubr.f32.mxu0 0.0
      %v2977 = vand.u32 %v2351, 4294901760
      %2978 = vmatmul.mubr.f32.gmra.mrb[0].mxu0 %v2977
      %v2979 = vpop.f32.mrb[0].mxu0
      %v2980 = vadd.f32 %v2655, %v2979
      %v2981 = vpop.f32.mrb[0].mxu0
      %2982 = vmatprep.mubr.f32.mxu0 0.0
      %v2983 = vand.u32 %v2354, 4294901760
      %2984 = vmatmul.mubr.f32.gmra.mrb[0].mxu0 %v2983
      %v2985 = vpop.f32.mrb[0].mxu0
      %v2986 = vadd.f32 %v2665, %v2985
      %v2987 = vpop.f32.mrb[0].mxu0
      %2988 = vmatprep.mubr.f32.mxu0 0.0
      %v2989 = vand.u32 %v2357, 4294901760
      %2990 = vmatmul.mubr.f32.gmra.mrb[0].mxu0 %v2989
      %v2991 = vpop.f32.mrb[0].mxu0
      %v2992 = vadd.f32 %v2675, %v2991
      %v2993 = vpop.f32.mrb[0].mxu0
      %2994 = vmatprep.mubr.f32.mxu0 0.0
      %v2995 = vand.u32 %v2360, 4294901760
      %2996 = vmatmul.mubr.f32.gmra.mrb[0].mxu0 %v2995
      %v2997 = vpop.f32.mrb[0].mxu0
      %v2998 = vadd.f32 %v2685, %v2997
      %v2999 = vpop.f32.mrb[0].mxu0
      %3000 = vmatprep.mubr.f32.mxu0 0.0
      %v3001 = vand.u32 %v2363, 4294901760
      %3002 = vmatmul.mubr.f32.gmra.mrb[0].mxu0 %v3001
      %v3003 = vpop.f32.mrb[0].mxu0
      %v3004 = vadd.f32 %v2695, %v3003
      %v3005 = vpop.f32.mrb[0].mxu0
      %3006 = vmatprep.mubr.f32.mxu0 0.0
      %v3007 = vand.u32 %v2366, 4294901760
      %3008 = vmatmul.mubr.f32.gmra.mrb[0].mxu0 %v3007
      %v3009 = vpop.f32.mrb[0].mxu0
      %v3010 = vadd.f32 %v2705, %v3009
      %v3011 = vpop.f32.mrb[0].mxu0
      %3012 = vmatprep.mubr.f32.mxu0 0.0
      %v3013 = vand.u32 %v2369, 4294901760
      %3014 = vmatmul.mubr.f32.gmra.mrb[0].mxu0 %v3013
      %v3015 = vpop.f32.mrb[0].mxu0
      %v3016 = vadd.f32 %v2715, %v3015
      %v3017 = vpop.f32.mrb[0].mxu0
      %3018 = vmatprep.mubr.f32.mxu0 0.0
      %v3019 = vand.u32 %v2372, 4294901760
      %3020 = vmatmul.mubr.f32.gmra.mrb[0].mxu0 %v3019
      %v3021 = vpop.f32.mrb[0].mxu0
      %v3022 = vadd.f32 %v2725, %v3021
      %v3023 = vpop.f32.mrb[0].mxu0
      %3024 = vmatprep.mubr.f32.mxu0 0.0
      %v3025 = vand.u32 %v2375, 4294901760
      %3026 = vmatmul.mubr.f32.gmra.mrb[0].mxu0 %v3025
      %v3027 = vpop.f32.mrb[0].mxu0
      %v3028 = vadd.f32 %v2735, %v3027
      %v3029 = vpop.f32.mrb[0].mxu0
      %3030 = vmatprep.mubr.f32.mxu0 0.0
      %v3031 = vand.u32 %v2378, 4294901760
      %3032 = vmatmul.mubr.f32.gmra.mrb[0].mxu0 %v3031
      %v3033 = vpop.f32.mrb[0].mxu0
      %v3034 = vadd.f32 %v2745, %v3033
      %v3035 = vpop.f32.mrb[0].mxu0
      %3036 = vmatprep.mubr.f32.mxu0 0.0
      %v3037 = vand.u32 %v2381, 4294901760
      %3038 = vmatmul.mubr.f32.gmra.mrb[0].mxu0 %v3037
      %v3039 = vpop.f32.mrb[0].mxu0
      %v3040 = vadd.f32 %v2755, %v3039
      %v3041 = vpop.f32.mrb[0].mxu0
      %3042 = vmatprep.mubr.f32.mxu0 0.0
      %v3043 = vand.u32 %v2384, 4294901760
      %3044 = vmatmul.mubr.f32.gmra.mrb[0].mxu0 %v3043
      %v3045 = vpop.f32.mrb[0].mxu0
      %v3046 = vadd.f32 %v2765, %v3045
      %v3047 = vpop.f32.mrb[0].mxu0
      %3048 = vmatprep.mubr.f32.mxu0 0.0
      %v3049 = vand.u32 %v2387, 4294901760
      %3050 = vmatmul.mubr.f32.gmra.mrb[0].mxu0 %v3049
      %v3051 = vpop.f32.mrb[0].mxu0
      %v3052 = vadd.f32 %v2775, %v3051
      %v3053 = vpop.f32.mrb[0].mxu0
      %3054 = vdwg.mxu0
      %3055 = vmatprep.subr.mxu0 0.0
      %v3056 = vand.u32 %v338, 4294901760
      %v3057 = vsub.f32 %v338, %v3056
      %3058 = vmatpush1.msra.mxu0 %v3057
      %3059 = vmatprep.subr.mxu0 0.0
      %v3060 = vand.u32 %v339, 4294901760
      %v3061 = vsub.f32 %v339, %v3060
      %3062 = vmatpush1.msra.mxu0 %v3061
      %3063 = vmatprep.subr.mxu0 0.0
      %v3064 = vand.u32 %v340, 4294901760
      %v3065 = vsub.f32 %v340, %v3064
      %3066 = vmatpush1.msra.mxu0 %v3065
      %3067 = vmatprep.subr.mxu0 0.0
      %v3068 = vand.u32 %v341, 4294901760
      %v3069 = vsub.f32 %v341, %v3068
      %3070 = vmatpush1.msra.mxu0 %v3069
      %3071 = vmatprep.subr.mxu0 0.0
      %3072 = vmatpush1.msra.mxu0 0.0
      %3073 = vmatprep.subr.mxu0 0.0
      %3074 = vmatpush1.msra.mxu0 0.0
      %3075 = vmatprep.subr.mxu0 0.0
      %3076 = vmatpush1.msra.mxu0 0.0
      %3077 = vmatprep.subr.mxu0 0.0
      %3078 = vmatpush1.msra.mxu0 0.0
      %3079 = vmatprep.subr.mxu0 0.0
      %3080 = vmatpush1.msra.mxu0 0.0
      %3081 = vmatprep.subr.mxu0 0.0
      %3082 = vmatpush1.msra.mxu0 0.0
      %3083 = vmatprep.subr.mxu0 0.0
      %3084 = vmatpush1.msra.mxu0 0.0
      %3085 = vmatprep.subr.mxu0 0.0
      %3086 = vmatpush1.msra.mxu0 0.0
      %3087 = vmatprep.subr.mxu0 0.0
      %3088 = vmatpush1.msra.mxu0 0.0
      %3089 = vmatprep.subr.mxu0 0.0
      %3090 = vmatpush1.msra.mxu0 0.0
      %3091 = vmatprep.subr.mxu0 0.0
      %3092 = vmatpush1.msra.mxu0 0.0
      %3093 = vmatprep.subr.mxu0 0.0
      %3094 = vmatpush1.msra.mxu0 0.0
      %3095 = vmatprep.subr.mxu0 0.0
      %3096 = vmatpush1.msra.mxu0 0.0
      %3097 = vmatprep.subr.mxu0 0.0
      %3098 = vmatpush1.msra.mxu0 0.0
      %3099 = vmatprep.subr.mxu0 0.0
      %3100 = vmatpush1.msra.mxu0 0.0
      %3101 = vmatprep.subr.mxu0 0.0
      %3102 = vmatpush1.msra.mxu0 0.0
      %3103 = vmatprep.subr.mxu0 0.0
      %3104 = vmatpush1.msra.mxu0 0.0
      %3105 = vmatprep.subr.mxu0 0.0
      %3106 = vmatpush1.msra.mxu0 0.0
      %3107 = vmatprep.subr.mxu0 0.0
      %3108 = vmatpush1.msra.mxu0 0.0
      %3109 = vmatprep.subr.mxu0 0.0
      %3110 = vmatpush1.msra.mxu0 0.0
      %3111 = vmatprep.subr.mxu0 0.0
      %3112 = vmatpush1.msra.mxu0 0.0
      %3113 = vmatprep.subr.mxu0 0.0
      %3114 = vmatpush1.msra.mxu0 0.0
      %3115 = vmatprep.subr.mxu0 0.0
      %3116 = vmatpush1.msra.mxu0 0.0
      %3117 = vmatprep.subr.mxu0 0.0
      %3118 = vmatpush1.msra.mxu0 0.0
      %3119 = vmatprep.subr.mxu0 0.0
      %3120 = vmatpush1.msra.mxu0 0.0
      %3121 = vmatprep.subr.mxu0 0.0
      %3122 = vmatpush1.msra.mxu0 0.0
      %3123 = vmatprep.subr.mxu0 0.0
      %3124 = vmatpush1.msra.mxu0 0.0
      %3125 = vmatprep.subr.mxu0 0.0
      %3126 = vmatpush1.msra.mxu0 0.0
      %3127 = vmatprep.mubr.f32.mxu0 0.0
      %v3128 = vand.u32 %v2294, 4294901760
      %v3129 = vsub.f32 %v2294, %v3128
      %3130 = vmatmul.mubr.f32.gmra.mrb[0].mxu0 %v3129
      %v3131 = vpop.f32.mrb[0].mxu0
      %v3132 = vadd.f32 %v2866, %v3131
      %v3133 = vpop.f32.mrb[0].mxu0
      %3134 = vmatprep.mubr.f32.mxu0 0.0
      %v3135 = vand.u32 %v2297, 4294901760
      %v3136 = vsub.f32 %v2297, %v3135
      %3137 = vmatmul.mubr.f32.gmra.mrb[0].mxu0 %v3136
      %v3138 = vpop.f32.mrb[0].mxu0
      %v3139 = vadd.f32 %v2872, %v3138
      %v3140 = vpop.f32.mrb[0].mxu0
      %3141 = vmatprep.mubr.f32.mxu0 0.0
      %v3142 = vand.u32 %v2300, 4294901760
      %v3143 = vsub.f32 %v2300, %v3142
      %3144 = vmatmul.mubr.f32.gmra.mrb[0].mxu0 %v3143
      %v3145 = vpop.f32.mrb[0].mxu0
      %v3146 = vadd.f32 %v2878, %v3145
      %v3147 = vpop.f32.mrb[0].mxu0
      %3148 = vmatprep.mubr.f32.mxu0 0.0
      %v3149 = vand.u32 %v2303, 4294901760
      %v3150 = vsub.f32 %v2303, %v3149
      %3151 = vmatmul.mubr.f32.gmra.mrb[0].mxu0 %v3150
      %v3152 = vpop.f32.mrb[0].mxu0
      %v3153 = vadd.f32 %v2884, %v3152
      %v3154 = vpop.f32.mrb[0].mxu0
      %3155 = vmatprep.mubr.f32.mxu0 0.0
      %v3156 = vand.u32 %v2306, 4294901760
      %v3157 = vsub.f32 %v2306, %v3156
      %3158 = vmatmul.mubr.f32.gmra.mrb[0].mxu0 %v3157
      %v3159 = vpop.f32.mrb[0].mxu0
      %v3160 = vadd.f32 %v2890, %v3159
      %v3161 = vpop.f32.mrb[0].mxu0
      %3162 = vmatprep.mubr.f32.mxu0 0.0
      %v3163 = vand.u32 %v2309, 4294901760
      %v3164 = vsub.f32 %v2309, %v3163
      %3165 = vmatmul.mubr.f32.gmra.mrb[0].mxu0 %v3164
      %v3166 = vpop.f32.mrb[0].mxu0
      %v3167 = vadd.f32 %v2896, %v3166
      %v3168 = vpop.f32.mrb[0].mxu0
      %3169 = vmatprep.mubr.f32.mxu0 0.0
      %v3170 = vand.u32 %v2312, 4294901760
      %v3171 = vsub.f32 %v2312, %v3170
      %3172 = vmatmul.mubr.f32.gmra.mrb[0].mxu0 %v3171
      %v3173 = vpop.f32.mrb[0].mxu0
      %v3174 = vadd.f32 %v2902, %v3173
      %v3175 = vpop.f32.mrb[0].mxu0
      %3176 = vmatprep.mubr.f32.mxu0 0.0
      %v3177 = vand.u32 %v2315, 4294901760
      %v3178 = vsub.f32 %v2315, %v3177
      %3179 = vmatmul.mubr.f32.gmra.mrb[0].mxu0 %v3178
      %v3180 = vpop.f32.mrb[0].mxu0
      %v3181 = vadd.f32 %v2908, %v3180
      %v3182 = vpop.f32.mrb[0].mxu0
      %3183 = vmatprep.mubr.f32.mxu0 0.0
      %v3184 = vand.u32 %v2318, 4294901760
      %v3185 = vsub.f32 %v2318, %v3184
      %3186 = vmatmul.mubr.f32.gmra.mrb[0].mxu0 %v3185
      %v3187 = vpop.f32.mrb[0].mxu0
      %v3188 = vadd.f32 %v2914, %v3187
      %v3189 = vpop.f32.mrb[0].mxu0
      %3190 = vmatprep.mubr.f32.mxu0 0.0
      %v3191 = vand.u32 %v2321, 4294901760
      %v3192 = vsub.f32 %v2321, %v3191
      %3193 = vmatmul.mubr.f32.gmra.mrb[0].mxu0 %v3192
      %v3194 = vpop.f32.mrb[0].mxu0
      %v3195 = vadd.f32 %v2920, %v3194
      %v3196 = vpop.f32.mrb[0].mxu0
      %3197 = vmatprep.mubr.f32.mxu0 0.0
      %v3198 = vand.u32 %v2324, 4294901760
      %v3199 = vsub.f32 %v2324, %v3198
      %3200 = vmatmul.mubr.f32.gmra.mrb[0].mxu0 %v3199
      %v3201 = vpop.f32.mrb[0].mxu0
      %v3202 = vadd.f32 %v2926, %v3201
      %v3203 = vpop.f32.mrb[0].mxu0
      %3204 = vmatprep.mubr.f32.mxu0 0.0
      %v3205 = vand.u32 %v2327, 4294901760
      %v3206 = vsub.f32 %v2327, %v3205
      %3207 = vmatmul.mubr.f32.gmra.mrb[0].mxu0 %v3206
      %v3208 = vpop.f32.mrb[0].mxu0
      %v3209 = vadd.f32 %v2932, %v3208
      %v3210 = vpop.f32.mrb[0].mxu0
      %3211 = vmatprep.mubr.f32.mxu0 0.0
      %v3212 = vand.u32 %v2330, 4294901760
      %v3213 = vsub.f32 %v2330, %v3212
      %3214 = vmatmul.mubr.f32.gmra.mrb[0].mxu0 %v3213
      %v3215 = vpop.f32.mrb[0].mxu0
      %v3216 = vadd.f32 %v2938, %v3215
      %v3217 = vpop.f32.mrb[0].mxu0
      %3218 = vmatprep.mubr.f32.mxu0 0.0
      %v3219 = vand.u32 %v2333, 4294901760
      %v3220 = vsub.f32 %v2333, %v3219
      %3221 = vmatmul.mubr.f32.gmra.mrb[0].mxu0 %v3220
      %v3222 = vpop.f32.mrb[0].mxu0
      %v3223 = vadd.f32 %v2944, %v3222
      %v3224 = vpop.f32.mrb[0].mxu0
      %3225 = vmatprep.mubr.f32.mxu0 0.0
      %v3226 = vand.u32 %v2336, 4294901760
      %v3227 = vsub.f32 %v2336, %v3226
      %3228 = vmatmul.mubr.f32.gmra.mrb[0].mxu0 %v3227
      %v3229 = vpop.f32.mrb[0].mxu0
      %v3230 = vadd.f32 %v2950, %v3229
      %v3231 = vpop.f32.mrb[0].mxu0
      %3232 = vmatprep.mubr.f32.mxu0 0.0
      %v3233 = vand.u32 %v2339, 4294901760
      %v3234 = vsub.f32 %v2339, %v3233
      %3235 = vmatmul.mubr.f32.gmra.mrb[0].mxu0 %v3234
      %v3236 = vpop.f32.mrb[0].mxu0
      %v3237 = vadd.f32 %v2956, %v3236
      %v3238 = vpop.f32.mrb[0].mxu0
      %3239 = vmatprep.mubr.f32.mxu0 0.0
      %v3240 = vand.u32 %v2342, 4294901760
      %v3241 = vsub.f32 %v2342, %v3240
      %3242 = vmatmul.mubr.f32.gmra.mrb[0].mxu0 %v3241
      %v3243 = vpop.f32.mrb[0].mxu0
      %v3244 = vadd.f32 %v2962, %v3243
      %v3245 = vpop.f32.mrb[0].mxu0
      %3246 = vmatprep.mubr.f32.mxu0 0.0
      %v3247 = vand.u32 %v2345, 4294901760
      %v3248 = vsub.f32 %v2345, %v3247
      %3249 = vmatmul.mubr.f32.gmra.mrb[0].mxu0 %v3248
      %v3250 = vpop.f32.mrb[0].mxu0
      %v3251 = vadd.f32 %v2968, %v3250
      %v3252 = vpop.f32.mrb[0].mxu0
      %3253 = vmatprep.mubr.f32.mxu0 0.0
      %v3254 = vand.u32 %v2348, 4294901760
      %v3255 = vsub.f32 %v2348, %v3254
      %3256 = vmatmul.mubr.f32.gmra.mrb[0].mxu0 %v3255
      %v3257 = vpop.f32.mrb[0].mxu0
      %v3258 = vadd.f32 %v2974, %v3257
      %v3259 = vpop.f32.mrb[0].mxu0
      %3260 = vmatprep.mubr.f32.mxu0 0.0
      %v3261 = vand.u32 %v2351, 4294901760
      %v3262 = vsub.f32 %v2351, %v3261
      %3263 = vmatmul.mubr.f32.gmra.mrb[0].mxu0 %v3262
      %v3264 = vpop.f32.mrb[0].mxu0
      %v3265 = vadd.f32 %v2980, %v3264
      %v3266 = vpop.f32.mrb[0].mxu0
      %3267 = vmatprep.mubr.f32.mxu0 0.0
      %v3268 = vand.u32 %v2354, 4294901760
      %v3269 = vsub.f32 %v2354, %v3268
      %3270 = vmatmul.mubr.f32.gmra.mrb[0].mxu0 %v3269
      %v3271 = vpop.f32.mrb[0].mxu0
      %v3272 = vadd.f32 %v2986, %v3271
      %v3273 = vpop.f32.mrb[0].mxu0
      %3274 = vmatprep.mubr.f32.mxu0 0.0
      %v3275 = vand.u32 %v2357, 4294901760
      %v3276 = vsub.f32 %v2357, %v3275
      %3277 = vmatmul.mubr.f32.gmra.mrb[0].mxu0 %v3276
      %v3278 = vpop.f32.mrb[0].mxu0
      %v3279 = vadd.f32 %v2992, %v3278
      %v3280 = vpop.f32.mrb[0].mxu0
      %3281 = vmatprep.mubr.f32.mxu0 0.0
      %v3282 = vand.u32 %v2360, 4294901760
      %v3283 = vsub.f32 %v2360, %v3282
      %3284 = vmatmul.mubr.f32.gmra.mrb[0].mxu0 %v3283
      %v3285 = vpop.f32.mrb[0].mxu0
      %v3286 = vadd.f32 %v2998, %v3285
      %v3287 = vpop.f32.mrb[0].mxu0
      %3288 = vmatprep.mubr.f32.mxu0 0.0
      %v3289 = vand.u32 %v2363, 4294901760
      %v3290 = vsub.f32 %v2363, %v3289
      %3291 = vmatmul.mubr.f32.gmra.mrb[0].mxu0 %v3290
      %v3292 = vpop.f32.mrb[0].mxu0
      %v3293 = vadd.f32 %v3004, %v3292
      %v3294 = vpop.f32.mrb[0].mxu0
      %3295 = vmatprep.mubr.f32.mxu0 0.0
      %v3296 = vand.u32 %v2366, 4294901760
      %v3297 = vsub.f32 %v2366, %v3296
      %3298 = vmatmul.mubr.f32.gmra.mrb[0].mxu0 %v3297
      %v3299 = vpop.f32.mrb[0].mxu0
      %v3300 = vadd.f32 %v3010, %v3299
      %v3301 = vpop.f32.mrb[0].mxu0
      %3302 = vmatprep.mubr.f32.mxu0 0.0
      %v3303 = vand.u32 %v2369, 4294901760
      %v3304 = vsub.f32 %v2369, %v3303
      %3305 = vmatmul.mubr.f32.gmra.mrb[0].mxu0 %v3304
      %v3306 = vpop.f32.mrb[0].mxu0
      %v3307 = vadd.f32 %v3016, %v3306
      %v3308 = vpop.f32.mrb[0].mxu0
      %3309 = vmatprep.mubr.f32.mxu0 0.0
      %v3310 = vand.u32 %v2372, 4294901760
      %v3311 = vsub.f32 %v2372, %v3310
      %3312 = vmatmul.mubr.f32.gmra.mrb[0].mxu0 %v3311
      %v3313 = vpop.f32.mrb[0].mxu0
      %v3314 = vadd.f32 %v3022, %v3313
      %v3315 = vpop.f32.mrb[0].mxu0
      %3316 = vmatprep.mubr.f32.mxu0 0.0
      %v3317 = vand.u32 %v2375, 4294901760
      %v3318 = vsub.f32 %v2375, %v3317
      %3319 = vmatmul.mubr.f32.gmra.mrb[0].mxu0 %v3318
      %v3320 = vpop.f32.mrb[0].mxu0
      %v3321 = vadd.f32 %v3028, %v3320
      %v3322 = vpop.f32.mrb[0].mxu0
      %3323 = vmatprep.mubr.f32.mxu0 0.0
      %v3324 = vand.u32 %v2378, 4294901760
      %v3325 = vsub.f32 %v2378, %v3324
      %3326 = vmatmul.mubr.f32.gmra.mrb[0].mxu0 %v3325
      %v3327 = vpop.f32.mrb[0].mxu0
      %v3328 = vadd.f32 %v3034, %v3327
      %v3329 = vpop.f32.mrb[0].mxu0
      %3330 = vmatprep.mubr.f32.mxu0 0.0
      %v3331 = vand.u32 %v2381, 4294901760
      %v3332 = vsub.f32 %v2381, %v3331
      %3333 = vmatmul.mubr.f32.gmra.mrb[0].mxu0 %v3332
      %v3334 = vpop.f32.mrb[0].mxu0
      %v3335 = vadd.f32 %v3040, %v3334
      %v3336 = vpop.f32.mrb[0].mxu0
      %3337 = vmatprep.mubr.f32.mxu0 0.0
      %v3338 = vand.u32 %v2384, 4294901760
      %v3339 = vsub.f32 %v2384, %v3338
      %3340 = vmatmul.mubr.f32.gmra.mrb[0].mxu0 %v3339
      %v3341 = vpop.f32.mrb[0].mxu0
      %v3342 = vadd.f32 %v3046, %v3341
      %v3343 = vpop.f32.mrb[0].mxu0
      %3344 = vmatprep.mubr.f32.mxu0 0.0
      %v3345 = vand.u32 %v2387, 4294901760
      %v3346 = vsub.f32 %v2387, %v3345
      %3347 = vmatmul.mubr.f32.gmra.mrb[0].mxu0 %v3346
      %v3348 = vpop.f32.mrb[0].mxu0
      %v3349 = vadd.f32 %v3052, %v3348
      %v3350 = vpop.f32.mrb[0].mxu0
      %3351 = vdwg.mxu0
      %3352 = vmatprep.subr.mxu0 0.0
      %v3353 = vand.u32 %v338, 4294901760
      %3354 = vmatpush1.msra.mxu0 %v3353
      %3355 = vmatprep.subr.mxu0 0.0
      %v3356 = vand.u32 %v339, 4294901760
      %3357 = vmatpush1.msra.mxu0 %v3356
      %3358 = vmatprep.subr.mxu0 0.0
      %v3359 = vand.u32 %v340, 4294901760
      %3360 = vmatpush1.msra.mxu0 %v3359
      %3361 = vmatprep.subr.mxu0 0.0
      %v3362 = vand.u32 %v341, 4294901760
      %3363 = vmatpush1.msra.mxu0 %v3362
      %3364 = vmatprep.subr.mxu0 0.0
      %3365 = vmatpush1.msra.mxu0 0.0
      %3366 = vmatprep.subr.mxu0 0.0
      %3367 = vmatpush1.msra.mxu0 0.0
      %3368 = vmatprep.subr.mxu0 0.0
      %3369 = vmatpush1.msra.mxu0 0.0
      %3370 = vmatprep.subr.mxu0 0.0
      %3371 = vmatpush1.msra.mxu0 0.0
      %3372 = vmatprep.subr.mxu0 0.0
      %3373 = vmatpush1.msra.mxu0 0.0
      %3374 = vmatprep.subr.mxu0 0.0
      %3375 = vmatpush1.msra.mxu0 0.0
      %3376 = vmatprep.subr.mxu0 0.0
      %3377 = vmatpush1.msra.mxu0 0.0
      %3378 = vmatprep.subr.mxu0 0.0
      %3379 = vmatpush1.msra.mxu0 0.0
      %3380 = vmatprep.subr.mxu0 0.0
      %3381 = vmatpush1.msra.mxu0 0.0
      %3382 = vmatprep.subr.mxu0 0.0
      %3383 = vmatpush1.msra.mxu0 0.0
      %3384 = vmatprep.subr.mxu0 0.0
      %3385 = vmatpush1.msra.mxu0 0.0
      %3386 = vmatprep.subr.mxu0 0.0
      %3387 = vmatpush1.msra.mxu0 0.0
      %3388 = vmatprep.subr.mxu0 0.0
      %3389 = vmatpush1.msra.mxu0 0.0
      %3390 = vmatprep.subr.mxu0 0.0
      %3391 = vmatpush1.msra.mxu0 0.0
      %3392 = vmatprep.subr.mxu0 0.0
      %3393 = vmatpush1.msra.mxu0 0.0
      %3394 = vmatprep.subr.mxu0 0.0
      %3395 = vmatpush1.msra.mxu0 0.0
      %3396 = vmatprep.subr.mxu0 0.0
      %3397 = vmatpush1.msra.mxu0 0.0
      %3398 = vmatprep.subr.mxu0 0.0
      %3399 = vmatpush1.msra.mxu0 0.0
      %3400 = vmatprep.subr.mxu0 0.0
      %3401 = vmatpush1.msra.mxu0 0.0
      %3402 = vmatprep.subr.mxu0 0.0
      %3403 = vmatpush1.msra.mxu0 0.0
      %3404 = vmatprep.subr.mxu0 0.0
      %3405 = vmatpush1.msra.mxu0 0.0
      %3406 = vmatprep.subr.mxu0 0.0
      %3407 = vmatpush1.msra.mxu0 0.0
      %3408 = vmatprep.subr.mxu0 0.0
      %3409 = vmatpush1.msra.mxu0 0.0
      %3410 = vmatprep.subr.mxu0 0.0
      %3411 = vmatpush1.msra.mxu0 0.0
      %3412 = vmatprep.subr.mxu0 0.0
      %3413 = vmatpush1.msra.mxu0 0.0
      %3414 = vmatprep.subr.mxu0 0.0
      %3415 = vmatpush1.msra.mxu0 0.0
      %3416 = vmatprep.subr.mxu0 0.0
      %3417 = vmatpush1.msra.mxu0 0.0
      %3418 = vmatprep.subr.mxu0 0.0
      %3419 = vmatpush1.msra.mxu0 0.0
      %3420 = vmatprep.mubr.f32.mxu0 0.0
      %v3421 = vand.u32 %v2294, 4294901760
      %v3422 = vsub.f32 %v2294, %v3421
      %v3423 = vand.u32 %v3422, 4294901760
      %3424 = vmatmul.mubr.f32.gmra.mrb[0].mxu0 %v3423
      %v3425 = vpop.f32.mrb[0].mxu0
      %v3426 = vadd.f32 %v3132, %v3425
      %v3427 = vpop.f32.mrb[0].mxu0
      %3428 = vmatprep.mubr.f32.mxu0 0.0
      %v3429 = vand.u32 %v2297, 4294901760
      %v3430 = vsub.f32 %v2297, %v3429
      %v3431 = vand.u32 %v3430, 4294901760
      %3432 = vmatmul.mubr.f32.gmra.mrb[0].mxu0 %v3431
      %v3433 = vpop.f32.mrb[0].mxu0
      %v3434 = vadd.f32 %v3139, %v3433
      %v3435 = vpop.f32.mrb[0].mxu0
      %3436 = vmatprep.mubr.f32.mxu0 0.0
      %v3437 = vand.u32 %v2300, 4294901760
      %v3438 = vsub.f32 %v2300, %v3437
      %v3439 = vand.u32 %v3438, 4294901760
      %3440 = vmatmul.mubr.f32.gmra.mrb[0].mxu0 %v3439
      %v3441 = vpop.f32.mrb[0].mxu0
      %v3442 = vadd.f32 %v3146, %v3441
      %v3443 = vpop.f32.mrb[0].mxu0
      %3444 = vmatprep.mubr.f32.mxu0 0.0
      %v3445 = vand.u32 %v2303, 4294901760
      %v3446 = vsub.f32 %v2303, %v3445
      %v3447 = vand.u32 %v3446, 4294901760
      %3448 = vmatmul.mubr.f32.gmra.mrb[0].mxu0 %v3447
      %v3449 = vpop.f32.mrb[0].mxu0
      %v3450 = vadd.f32 %v3153, %v3449
      %v3451 = vpop.f32.mrb[0].mxu0
      %3452 = vmatprep.mubr.f32.mxu0 0.0
      %v3453 = vand.u32 %v2306, 4294901760
      %v3454 = vsub.f32 %v2306, %v3453
      %v3455 = vand.u32 %v3454, 4294901760
      %3456 = vmatmul.mubr.f32.gmra.mrb[0].mxu0 %v3455
      %v3457 = vpop.f32.mrb[0].mxu0
      %v3458 = vadd.f32 %v3160, %v3457
      %v3459 = vpop.f32.mrb[0].mxu0
      %3460 = vmatprep.mubr.f32.mxu0 0.0
      %v3461 = vand.u32 %v2309, 4294901760
      %v3462 = vsub.f32 %v2309, %v3461
      %v3463 = vand.u32 %v3462, 4294901760
      %3464 = vmatmul.mubr.f32.gmra.mrb[0].mxu0 %v3463
      %v3465 = vpop.f32.mrb[0].mxu0
      %v3466 = vadd.f32 %v3167, %v3465
      %v3467 = vpop.f32.mrb[0].mxu0
      %3468 = vmatprep.mubr.f32.mxu0 0.0
      %v3469 = vand.u32 %v2312, 4294901760
      %v3470 = vsub.f32 %v2312, %v3469
      %v3471 = vand.u32 %v3470, 4294901760
      %3472 = vmatmul.mubr.f32.gmra.mrb[0].mxu0 %v3471
      %v3473 = vpop.f32.mrb[0].mxu0
      %v3474 = vadd.f32 %v3174, %v3473
      %v3475 = vpop.f32.mrb[0].mxu0
      %3476 = vmatprep.mubr.f32.mxu0 0.0
      %v3477 = vand.u32 %v2315, 4294901760
      %v3478 = vsub.f32 %v2315, %v3477
      %v3479 = vand.u32 %v3478, 4294901760
      %3480 = vmatmul.mubr.f32.gmra.mrb[0].mxu0 %v3479
      %v3481 = vpop.f32.mrb[0].mxu0
      %v3482 = vadd.f32 %v3181, %v3481
      %v3483 = vpop.f32.mrb[0].mxu0
      %3484 = vmatprep.mubr.f32.mxu0 0.0
      %v3485 = vand.u32 %v2318, 4294901760
      %v3486 = vsub.f32 %v2318, %v3485
      %v3487 = vand.u32 %v3486, 4294901760
      %3488 = vmatmul.mubr.f32.gmra.mrb[0].mxu0 %v3487
      %v3489 = vpop.f32.mrb[0].mxu0
      %v3490 = vadd.f32 %v3188, %v3489
      %v3491 = vpop.f32.mrb[0].mxu0
      %3492 = vmatprep.mubr.f32.mxu0 0.0
      %v3493 = vand.u32 %v2321, 4294901760
      %v3494 = vsub.f32 %v2321, %v3493
      %v3495 = vand.u32 %v3494, 4294901760
      %3496 = vmatmul.mubr.f32.gmra.mrb[0].mxu0 %v3495
      %v3497 = vpop.f32.mrb[0].mxu0
      %v3498 = vadd.f32 %v3195, %v3497
      %v3499 = vpop.f32.mrb[0].mxu0
      %3500 = vmatprep.mubr.f32.mxu0 0.0
      %v3501 = vand.u32 %v2324, 4294901760
      %v3502 = vsub.f32 %v2324, %v3501
      %v3503 = vand.u32 %v3502, 4294901760
      %3504 = vmatmul.mubr.f32.gmra.mrb[0].mxu0 %v3503
      %v3505 = vpop.f32.mrb[0].mxu0
      %v3506 = vadd.f32 %v3202, %v3505
      %v3507 = vpop.f32.mrb[0].mxu0
      %3508 = vmatprep.mubr.f32.mxu0 0.0
      %v3509 = vand.u32 %v2327, 4294901760
      %v3510 = vsub.f32 %v2327, %v3509
      %v3511 = vand.u32 %v3510, 4294901760
      %3512 = vmatmul.mubr.f32.gmra.mrb[0].mxu0 %v3511
      %v3513 = vpop.f32.mrb[0].mxu0
      %v3514 = vadd.f32 %v3209, %v3513
      %v3515 = vpop.f32.mrb[0].mxu0
      %3516 = vmatprep.mubr.f32.mxu0 0.0
      %v3517 = vand.u32 %v2330, 4294901760
      %v3518 = vsub.f32 %v2330, %v3517
      %v3519 = vand.u32 %v3518, 4294901760
      %3520 = vmatmul.mubr.f32.gmra.mrb[0].mxu0 %v3519
      %v3521 = vpop.f32.mrb[0].mxu0
      %v3522 = vadd.f32 %v3216, %v3521
      %v3523 = vpop.f32.mrb[0].mxu0
      %3524 = vmatprep.mubr.f32.mxu0 0.0
      %v3525 = vand.u32 %v2333, 4294901760
      %v3526 = vsub.f32 %v2333, %v3525
      %v3527 = vand.u32 %v3526, 4294901760
      %3528 = vmatmul.mubr.f32.gmra.mrb[0].mxu0 %v3527
      %v3529 = vpop.f32.mrb[0].mxu0
      %v3530 = vadd.f32 %v3223, %v3529
      %v3531 = vpop.f32.mrb[0].mxu0
      %3532 = vmatprep.mubr.f32.mxu0 0.0
      %v3533 = vand.u32 %v2336, 4294901760
      %v3534 = vsub.f32 %v2336, %v3533
      %v3535 = vand.u32 %v3534, 4294901760
      %3536 = vmatmul.mubr.f32.gmra.mrb[0].mxu0 %v3535
      %v3537 = vpop.f32.mrb[0].mxu0
      %v3538 = vadd.f32 %v3230, %v3537
      %v3539 = vpop.f32.mrb[0].mxu0
      %3540 = vmatprep.mubr.f32.mxu0 0.0
      %v3541 = vand.u32 %v2339, 4294901760
      %v3542 = vsub.f32 %v2339, %v3541
      %v3543 = vand.u32 %v3542, 4294901760
      %3544 = vmatmul.mubr.f32.gmra.mrb[0].mxu0 %v3543
      %v3545 = vpop.f32.mrb[0].mxu0
      %v3546 = vadd.f32 %v3237, %v3545
      %v3547 = vpop.f32.mrb[0].mxu0
      %3548 = vmatprep.mubr.f32.mxu0 0.0
      %v3549 = vand.u32 %v2342, 4294901760
      %v3550 = vsub.f32 %v2342, %v3549
      %v3551 = vand.u32 %v3550, 4294901760
      %3552 = vmatmul.mubr.f32.gmra.mrb[0].mxu0 %v3551
      %v3553 = vpop.f32.mrb[0].mxu0
      %v3554 = vadd.f32 %v3244, %v3553
      %v3555 = vpop.f32.mrb[0].mxu0
      %3556 = vmatprep.mubr.f32.mxu0 0.0
      %v3557 = vand.u32 %v2345, 4294901760
      %v3558 = vsub.f32 %v2345, %v3557
      %v3559 = vand.u32 %v3558, 4294901760
      %3560 = vmatmul.mubr.f32.gmra.mrb[0].mxu0 %v3559
      %v3561 = vpop.f32.mrb[0].mxu0
      %v3562 = vadd.f32 %v3251, %v3561
      %v3563 = vpop.f32.mrb[0].mxu0
      %3564 = vmatprep.mubr.f32.mxu0 0.0
      %v3565 = vand.u32 %v2348, 4294901760
      %v3566 = vsub.f32 %v2348, %v3565
      %v3567 = vand.u32 %v3566, 4294901760
      %3568 = vmatmul.mubr.f32.gmra.mrb[0].mxu0 %v3567
      %v3569 = vpop.f32.mrb[0].mxu0
      %v3570 = vadd.f32 %v3258, %v3569
      %v3571 = vpop.f32.mrb[0].mxu0
      %3572 = vmatprep.mubr.f32.mxu0 0.0
      %v3573 = vand.u32 %v2351, 4294901760
      %v3574 = vsub.f32 %v2351, %v3573
      %v3575 = vand.u32 %v3574, 4294901760
      %3576 = vmatmul.mubr.f32.gmra.mrb[0].mxu0 %v3575
      %v3577 = vpop.f32.mrb[0].mxu0
      %v3578 = vadd.f32 %v3265, %v3577
      %v3579 = vpop.f32.mrb[0].mxu0
      %3580 = vmatprep.mubr.f32.mxu0 0.0
      %v3581 = vand.u32 %v2354, 4294901760
      %v3582 = vsub.f32 %v2354, %v3581
      %v3583 = vand.u32 %v3582, 4294901760
      %3584 = vmatmul.mubr.f32.gmra.mrb[0].mxu0 %v3583
      %v3585 = vpop.f32.mrb[0].mxu0
      %v3586 = vadd.f32 %v3272, %v3585
      %v3587 = vpop.f32.mrb[0].mxu0
      %3588 = vmatprep.mubr.f32.mxu0 0.0
      %v3589 = vand.u32 %v2357, 4294901760
      %v3590 = vsub.f32 %v2357, %v3589
      %v3591 = vand.u32 %v3590, 4294901760
      %3592 = vmatmul.mubr.f32.gmra.mrb[0].mxu0 %v3591
      %v3593 = vpop.f32.mrb[0].mxu0
      %v3594 = vadd.f32 %v3279, %v3593
      %v3595 = vpop.f32.mrb[0].mxu0
      %3596 = vmatprep.mubr.f32.mxu0 0.0
      %v3597 = vand.u32 %v2360, 4294901760
      %v3598 = vsub.f32 %v2360, %v3597
      %v3599 = vand.u32 %v3598, 4294901760
      %3600 = vmatmul.mubr.f32.gmra.mrb[0].mxu0 %v3599
      %v3601 = vpop.f32.mrb[0].mxu0
      %v3602 = vadd.f32 %v3286, %v3601
      %v3603 = vpop.f32.mrb[0].mxu0
      %3604 = vmatprep.mubr.f32.mxu0 0.0
      %v3605 = vand.u32 %v2363, 4294901760
      %v3606 = vsub.f32 %v2363, %v3605
      %v3607 = vand.u32 %v3606, 4294901760
      %3608 = vmatmul.mubr.f32.gmra.mrb[0].mxu0 %v3607
      %v3609 = vpop.f32.mrb[0].mxu0
      %v3610 = vadd.f32 %v3293, %v3609
      %v3611 = vpop.f32.mrb[0].mxu0
      %3612 = vmatprep.mubr.f32.mxu0 0.0
      %v3613 = vand.u32 %v2366, 4294901760
      %v3614 = vsub.f32 %v2366, %v3613
      %v3615 = vand.u32 %v3614, 4294901760
      %3616 = vmatmul.mubr.f32.gmra.mrb[0].mxu0 %v3615
      %v3617 = vpop.f32.mrb[0].mxu0
      %v3618 = vadd.f32 %v3300, %v3617
      %v3619 = vpop.f32.mrb[0].mxu0
      %3620 = vmatprep.mubr.f32.mxu0 0.0
      %v3621 = vand.u32 %v2369, 4294901760
      %v3622 = vsub.f32 %v2369, %v3621
      %v3623 = vand.u32 %v3622, 4294901760
      %3624 = vmatmul.mubr.f32.gmra.mrb[0].mxu0 %v3623
      %v3625 = vpop.f32.mrb[0].mxu0
      %v3626 = vadd.f32 %v3307, %v3625
      %v3627 = vpop.f32.mrb[0].mxu0
      %3628 = vmatprep.mubr.f32.mxu0 0.0
      %v3629 = vand.u32 %v2372, 4294901760
      %v3630 = vsub.f32 %v2372, %v3629
      %v3631 = vand.u32 %v3630, 4294901760
      %3632 = vmatmul.mubr.f32.gmra.mrb[0].mxu0 %v3631
      %v3633 = vpop.f32.mrb[0].mxu0
      %v3634 = vadd.f32 %v3314, %v3633
      %v3635 = vpop.f32.mrb[0].mxu0
      %3636 = vmatprep.mubr.f32.mxu0 0.0
      %v3637 = vand.u32 %v2375, 4294901760
      %v3638 = vsub.f32 %v2375, %v3637
      %v3639 = vand.u32 %v3638, 4294901760
      %3640 = vmatmul.mubr.f32.gmra.mrb[0].mxu0 %v3639
      %v3641 = vpop.f32.mrb[0].mxu0
      %v3642 = vadd.f32 %v3321, %v3641
      %v3643 = vpop.f32.mrb[0].mxu0
      %3644 = vmatprep.mubr.f32.mxu0 0.0
      %v3645 = vand.u32 %v2378, 4294901760
      %v3646 = vsub.f32 %v2378, %v3645
      %v3647 = vand.u32 %v3646, 4294901760
      %3648 = vmatmul.mubr.f32.gmra.mrb[0].mxu0 %v3647
      %v3649 = vpop.f32.mrb[0].mxu0
      %v3650 = vadd.f32 %v3328, %v3649
      %v3651 = vpop.f32.mrb[0].mxu0
      %3652 = vmatprep.mubr.f32.mxu0 0.0
      %v3653 = vand.u32 %v2381, 4294901760
      %v3654 = vsub.f32 %v2381, %v3653
      %v3655 = vand.u32 %v3654, 4294901760
      %3656 = vmatmul.mubr.f32.gmra.mrb[0].mxu0 %v3655
      %v3657 = vpop.f32.mrb[0].mxu0
      %v3658 = vadd.f32 %v3335, %v3657
      %v3659 = vpop.f32.mrb[0].mxu0
      %3660 = vmatprep.mubr.f32.mxu0 0.0
      %v3661 = vand.u32 %v2384, 4294901760
      %v3662 = vsub.f32 %v2384, %v3661
      %v3663 = vand.u32 %v3662, 4294901760
      %3664 = vmatmul.mubr.f32.gmra.mrb[0].mxu0 %v3663
      %v3665 = vpop.f32.mrb[0].mxu0
      %v3666 = vadd.f32 %v3342, %v3665
      %v3667 = vpop.f32.mrb[0].mxu0
      %3668 = vmatprep.mubr.f32.mxu0 0.0
      %v3669 = vand.u32 %v2387, 4294901760
      %v3670 = vsub.f32 %v2387, %v3669
      %v3671 = vand.u32 %v3670, 4294901760
      %3672 = vmatmul.mubr.f32.gmra.mrb[0].mxu0 %v3671
      %v3673 = vpop.f32.mrb[0].mxu0
      %v3674 = vadd.f32 %v3349, %v3673
      %v3675 = vpop.f32.mrb[0].mxu0
      %3676 = vdwg.mxu0
      %3677 = vmatprep.subr.mxu0 0.0
      %v3678 = vand.u32 %v338, 4294901760
      %v3679 = vsub.f32 %v338, %v3678
      %v3680 = vand.u32 %v3679, 4294901760
      %3681 = vmatpush1.msra.mxu0 %v3680
      %3682 = vmatprep.subr.mxu0 0.0
      %v3683 = vand.u32 %v339, 4294901760
      %v3684 = vsub.f32 %v339, %v3683
      %v3685 = vand.u32 %v3684, 4294901760
      %3686 = vmatpush1.msra.mxu0 %v3685
      %3687 = vmatprep.subr.mxu0 0.0
      %v3688 = vand.u32 %v340, 4294901760
      %v3689 = vsub.f32 %v340, %v3688
      %v3690 = vand.u32 %v3689, 4294901760
      %3691 = vmatpush1.msra.mxu0 %v3690
      %3692 = vmatprep.subr.mxu0 0.0
      %v3693 = vand.u32 %v341, 4294901760
      %v3694 = vsub.f32 %v341, %v3693
      %v3695 = vand.u32 %v3694, 4294901760
      %3696 = vmatpush1.msra.mxu0 %v3695
      %3697 = vmatprep.subr.mxu0 0.0
      %3698 = vmatpush1.msra.mxu0 0.0
      %3699 = vmatprep.subr.mxu0 0.0
      %3700 = vmatpush1.msra.mxu0 0.0
      %3701 = vmatprep.subr.mxu0 0.0
      %3702 = vmatpush1.msra.mxu0 0.0
      %3703 = vmatprep.subr.mxu0 0.0
      %3704 = vmatpush1.msra.mxu0 0.0
      %3705 = vmatprep.subr.mxu0 0.0
      %3706 = vmatpush1.msra.mxu0 0.0
      %3707 = vmatprep.subr.mxu0 0.0
      %3708 = vmatpush1.msra.mxu0 0.0
      %3709 = vmatprep.subr.mxu0 0.0
      %3710 = vmatpush1.msra.mxu0 0.0
      %3711 = vmatprep.subr.mxu0 0.0
      %3712 = vmatpush1.msra.mxu0 0.0
      %3713 = vmatprep.subr.mxu0 0.0
      %3714 = vmatpush1.msra.mxu0 0.0
      %3715 = vmatprep.subr.mxu0 0.0
      %3716 = vmatpush1.msra.mxu0 0.0
      %3717 = vmatprep.subr.mxu0 0.0
      %3718 = vmatpush1.msra.mxu0 0.0
      %3719 = vmatprep.subr.mxu0 0.0
      %3720 = vmatpush1.msra.mxu0 0.0
      %3721 = vmatprep.subr.mxu0 0.0
      %3722 = vmatpush1.msra.mxu0 0.0
      %3723 = vmatprep.subr.mxu0 0.0
      %3724 = vmatpush1.msra.mxu0 0.0
      %3725 = vmatprep.subr.mxu0 0.0
      %3726 = vmatpush1.msra.mxu0 0.0
      %3727 = vmatprep.subr.mxu0 0.0
      %3728 = vmatpush1.msra.mxu0 0.0
      %3729 = vmatprep.subr.mxu0 0.0
      %3730 = vmatpush1.msra.mxu0 0.0
      %3731 = vmatprep.subr.mxu0 0.0
      %3732 = vmatpush1.msra.mxu0 0.0
      %3733 = vmatprep.subr.mxu0 0.0
      %3734 = vmatpush1.msra.mxu0 0.0
      %3735 = vmatprep.subr.mxu0 0.0
      %3736 = vmatpush1.msra.mxu0 0.0
      %3737 = vmatprep.subr.mxu0 0.0
      %3738 = vmatpush1.msra.mxu0 0.0
      %3739 = vmatprep.subr.mxu0 0.0
      %3740 = vmatpush1.msra.mxu0 0.0
      %3741 = vmatprep.subr.mxu0 0.0
      %3742 = vmatpush1.msra.mxu0 0.0
      %3743 = vmatprep.subr.mxu0 0.0
      %3744 = vmatpush1.msra.mxu0 0.0
      %3745 = vmatprep.subr.mxu0 0.0
      %3746 = vmatpush1.msra.mxu0 0.0
      %3747 = vmatprep.subr.mxu0 0.0
      %3748 = vmatpush1.msra.mxu0 0.0
      %3749 = vmatprep.subr.mxu0 0.0
      %3750 = vmatpush1.msra.mxu0 0.0
      %3751 = vmatprep.subr.mxu0 0.0
      %3752 = vmatpush1.msra.mxu0 0.0
      %3753 = vmatprep.mubr.f32.mxu0 0.0
      %v3754 = vand.u32 %v2294, 4294901760
      %3755 = vmatmul.mubr.f32.gmra.mrb[0].mxu0 %v3754
      %v3756 = vpop.f32.mrb[0].mxu0
      %v3757 = vadd.f32 %v3426, %v3756
      %v3758 = vpop.f32.mrb[0].mxu0
      %3759 = vmatprep.mubr.f32.mxu0 0.0
      %v3760 = vand.u32 %v2297, 4294901760
      %3761 = vmatmul.mubr.f32.gmra.mrb[0].mxu0 %v3760
      %v3762 = vpop.f32.mrb[0].mxu0
      %v3763 = vadd.f32 %v3434, %v3762
      %v3764 = vpop.f32.mrb[0].mxu0
      %3765 = vmatprep.mubr.f32.mxu0 0.0
      %v3766 = vand.u32 %v2300, 4294901760
      %3767 = vmatmul.mubr.f32.gmra.mrb[0].mxu0 %v3766
      %v3768 = vpop.f32.mrb[0].mxu0
      %v3769 = vadd.f32 %v3442, %v3768
      %v3770 = vpop.f32.mrb[0].mxu0
      %3771 = vmatprep.mubr.f32.mxu0 0.0
      %v3772 = vand.u32 %v2303, 4294901760
      %3773 = vmatmul.mubr.f32.gmra.mrb[0].mxu0 %v3772
      %v3774 = vpop.f32.mrb[0].mxu0
      %v3775 = vadd.f32 %v3450, %v3774
      %v3776 = vpop.f32.mrb[0].mxu0
      %3777 = vmatprep.mubr.f32.mxu0 0.0
      %v3778 = vand.u32 %v2306, 4294901760
      %3779 = vmatmul.mubr.f32.gmra.mrb[0].mxu0 %v3778
      %v3780 = vpop.f32.mrb[0].mxu0
      %v3781 = vadd.f32 %v3458, %v3780
      %v3782 = vpop.f32.mrb[0].mxu0
      %3783 = vmatprep.mubr.f32.mxu0 0.0
      %v3784 = vand.u32 %v2309, 4294901760
      %3785 = vmatmul.mubr.f32.gmra.mrb[0].mxu0 %v3784
      %v3786 = vpop.f32.mrb[0].mxu0
      %v3787 = vadd.f32 %v3466, %v3786
      %v3788 = vpop.f32.mrb[0].mxu0
      %3789 = vmatprep.mubr.f32.mxu0 0.0
      %v3790 = vand.u32 %v2312, 4294901760
      %3791 = vmatmul.mubr.f32.gmra.mrb[0].mxu0 %v3790
      %v3792 = vpop.f32.mrb[0].mxu0
      %v3793 = vadd.f32 %v3474, %v3792
      %v3794 = vpop.f32.mrb[0].mxu0
      %3795 = vmatprep.mubr.f32.mxu0 0.0
      %v3796 = vand.u32 %v2315, 4294901760
      %3797 = vmatmul.mubr.f32.gmra.mrb[0].mxu0 %v3796
      %v3798 = vpop.f32.mrb[0].mxu0
      %v3799 = vadd.f32 %v3482, %v3798
      %v3800 = vpop.f32.mrb[0].mxu0
      %3801 = vmatprep.mubr.f32.mxu0 0.0
      %v3802 = vand.u32 %v2318, 4294901760
      %3803 = vmatmul.mubr.f32.gmra.mrb[0].mxu0 %v3802
      %v3804 = vpop.f32.mrb[0].mxu0
      %v3805 = vadd.f32 %v3490, %v3804
      %v3806 = vpop.f32.mrb[0].mxu0
      %3807 = vmatprep.mubr.f32.mxu0 0.0
      %v3808 = vand.u32 %v2321, 4294901760
      %3809 = vmatmul.mubr.f32.gmra.mrb[0].mxu0 %v3808
      %v3810 = vpop.f32.mrb[0].mxu0
      %v3811 = vadd.f32 %v3498, %v3810
      %v3812 = vpop.f32.mrb[0].mxu0
      %3813 = vmatprep.mubr.f32.mxu0 0.0
      %v3814 = vand.u32 %v2324, 4294901760
      %3815 = vmatmul.mubr.f32.gmra.mrb[0].mxu0 %v3814
      %v3816 = vpop.f32.mrb[0].mxu0
      %v3817 = vadd.f32 %v3506, %v3816
      %v3818 = vpop.f32.mrb[0].mxu0
      %3819 = vmatprep.mubr.f32.mxu0 0.0
      %v3820 = vand.u32 %v2327, 4294901760
      %3821 = vmatmul.mubr.f32.gmra.mrb[0].mxu0 %v3820
      %v3822 = vpop.f32.mrb[0].mxu0
      %v3823 = vadd.f32 %v3514, %v3822
      %v3824 = vpop.f32.mrb[0].mxu0
      %3825 = vmatprep.mubr.f32.mxu0 0.0
      %v3826 = vand.u32 %v2330, 4294901760
      %3827 = vmatmul.mubr.f32.gmra.mrb[0].mxu0 %v3826
      %v3828 = vpop.f32.mrb[0].mxu0
      %v3829 = vadd.f32 %v3522, %v3828
      %v3830 = vpop.f32.mrb[0].mxu0
      %3831 = vmatprep.mubr.f32.mxu0 0.0
      %v3832 = vand.u32 %v2333, 4294901760
      %3833 = vmatmul.mubr.f32.gmra.mrb[0].mxu0 %v3832
      %v3834 = vpop.f32.mrb[0].mxu0
      %v3835 = vadd.f32 %v3530, %v3834
      %v3836 = vpop.f32.mrb[0].mxu0
      %3837 = vmatprep.mubr.f32.mxu0 0.0
      %v3838 = vand.u32 %v2336, 4294901760
      %3839 = vmatmul.mubr.f32.gmra.mrb[0].mxu0 %v3838
      %v3840 = vpop.f32.mrb[0].mxu0
      %v3841 = vadd.f32 %v3538, %v3840
      %v3842 = vpop.f32.mrb[0].mxu0
      %3843 = vmatprep.mubr.f32.mxu0 0.0
      %v3844 = vand.u32 %v2339, 4294901760
      %3845 = vmatmul.mubr.f32.gmra.mrb[0].mxu0 %v3844
      %v3846 = vpop.f32.mrb[0].mxu0
      %v3847 = vadd.f32 %v3546, %v3846
      %v3848 = vpop.f32.mrb[0].mxu0
      %3849 = vmatprep.mubr.f32.mxu0 0.0
      %v3850 = vand.u32 %v2342, 4294901760
      %3851 = vmatmul.mubr.f32.gmra.mrb[0].mxu0 %v3850
      %v3852 = vpop.f32.mrb[0].mxu0
      %v3853 = vadd.f32 %v3554, %v3852
      %v3854 = vpop.f32.mrb[0].mxu0
      %3855 = vmatprep.mubr.f32.mxu0 0.0
      %v3856 = vand.u32 %v2345, 4294901760
      %3857 = vmatmul.mubr.f32.gmra.mrb[0].mxu0 %v3856
      %v3858 = vpop.f32.mrb[0].mxu0
      %v3859 = vadd.f32 %v3562, %v3858
      %v3860 = vpop.f32.mrb[0].mxu0
      %3861 = vmatprep.mubr.f32.mxu0 0.0
      %v3862 = vand.u32 %v2348, 4294901760
      %3863 = vmatmul.mubr.f32.gmra.mrb[0].mxu0 %v3862
      %v3864 = vpop.f32.mrb[0].mxu0
      %v3865 = vadd.f32 %v3570, %v3864
      %v3866 = vpop.f32.mrb[0].mxu0
      %3867 = vmatprep.mubr.f32.mxu0 0.0
      %v3868 = vand.u32 %v2351, 4294901760
      %3869 = vmatmul.mubr.f32.gmra.mrb[0].mxu0 %v3868
      %v3870 = vpop.f32.mrb[0].mxu0
      %v3871 = vadd.f32 %v3578, %v3870
      %v3872 = vpop.f32.mrb[0].mxu0
      %3873 = vmatprep.mubr.f32.mxu0 0.0
      %v3874 = vand.u32 %v2354, 4294901760
      %3875 = vmatmul.mubr.f32.gmra.mrb[0].mxu0 %v3874
      %v3876 = vpop.f32.mrb[0].mxu0
      %v3877 = vadd.f32 %v3586, %v3876
      %v3878 = vpop.f32.mrb[0].mxu0
      %3879 = vmatprep.mubr.f32.mxu0 0.0
      %v3880 = vand.u32 %v2357, 4294901760
      %3881 = vmatmul.mubr.f32.gmra.mrb[0].mxu0 %v3880
      %v3882 = vpop.f32.mrb[0].mxu0
      %v3883 = vadd.f32 %v3594, %v3882
      %v3884 = vpop.f32.mrb[0].mxu0
      %3885 = vmatprep.mubr.f32.mxu0 0.0
      %v3886 = vand.u32 %v2360, 4294901760
      %3887 = vmatmul.mubr.f32.gmra.mrb[0].mxu0 %v3886
      %v3888 = vpop.f32.mrb[0].mxu0
      %v3889 = vadd.f32 %v3602, %v3888
      %v3890 = vpop.f32.mrb[0].mxu0
      %3891 = vmatprep.mubr.f32.mxu0 0.0
      %v3892 = vand.u32 %v2363, 4294901760
      %3893 = vmatmul.mubr.f32.gmra.mrb[0].mxu0 %v3892
      %v3894 = vpop.f32.mrb[0].mxu0
      %v3895 = vadd.f32 %v3610, %v3894
      %v3896 = vpop.f32.mrb[0].mxu0
      %3897 = vmatprep.mubr.f32.mxu0 0.0
      %v3898 = vand.u32 %v2366, 4294901760
      %3899 = vmatmul.mubr.f32.gmra.mrb[0].mxu0 %v3898
      %v3900 = vpop.f32.mrb[0].mxu0
      %v3901 = vadd.f32 %v3618, %v3900
      %v3902 = vpop.f32.mrb[0].mxu0
      %3903 = vmatprep.mubr.f32.mxu0 0.0
      %v3904 = vand.u32 %v2369, 4294901760
      %3905 = vmatmul.mubr.f32.gmra.mrb[0].mxu0 %v3904
      %v3906 = vpop.f32.mrb[0].mxu0
      %v3907 = vadd.f32 %v3626, %v3906
      %v3908 = vpop.f32.mrb[0].mxu0
      %3909 = vmatprep.mubr.f32.mxu0 0.0
      %v3910 = vand.u32 %v2372, 4294901760
      %3911 = vmatmul.mubr.f32.gmra.mrb[0].mxu0 %v3910
      %v3912 = vpop.f32.mrb[0].mxu0
      %v3913 = vadd.f32 %v3634, %v3912
      %v3914 = vpop.f32.mrb[0].mxu0
      %3915 = vmatprep.mubr.f32.mxu0 0.0
      %v3916 = vand.u32 %v2375, 4294901760
      %3917 = vmatmul.mubr.f32.gmra.mrb[0].mxu0 %v3916
      %v3918 = vpop.f32.mrb[0].mxu0
      %v3919 = vadd.f32 %v3642, %v3918
      %v3920 = vpop.f32.mrb[0].mxu0
      %3921 = vmatprep.mubr.f32.mxu0 0.0
      %v3922 = vand.u32 %v2378, 4294901760
      %3923 = vmatmul.mubr.f32.gmra.mrb[0].mxu0 %v3922
      %v3924 = vpop.f32.mrb[0].mxu0
      %v3925 = vadd.f32 %v3650, %v3924
      %v3926 = vpop.f32.mrb[0].mxu0
      %3927 = vmatprep.mubr.f32.mxu0 0.0
      %v3928 = vand.u32 %v2381, 4294901760
      %3929 = vmatmul.mubr.f32.gmra.mrb[0].mxu0 %v3928
      %v3930 = vpop.f32.mrb[0].mxu0
      %v3931 = vadd.f32 %v3658, %v3930
      %v3932 = vpop.f32.mrb[0].mxu0
      %3933 = vmatprep.mubr.f32.mxu0 0.0
      %v3934 = vand.u32 %v2384, 4294901760
      %3935 = vmatmul.mubr.f32.gmra.mrb[0].mxu0 %v3934
      %v3936 = vpop.f32.mrb[0].mxu0
      %v3937 = vadd.f32 %v3666, %v3936
      %v3938 = vpop.f32.mrb[0].mxu0
      %3939 = vmatprep.mubr.f32.mxu0 0.0
      %v3940 = vand.u32 %v2387, 4294901760
      %3941 = vmatmul.mubr.f32.gmra.mrb[0].mxu0 %v3940
      %v3942 = vpop.f32.mrb[0].mxu0
      %v3943 = vadd.f32 %v3674, %v3942
      %v3944 = vpop.f32.mrb[0].mxu0
      %3945 = vdwg.mxu0
      %3946 = vmatprep.subr.mxu0 0.0
      %v3947 = vand.u32 %v338, 4294901760
      %3948 = vmatpush1.msra.mxu0 %v3947
      %3949 = vmatprep.subr.mxu0 0.0
      %v3950 = vand.u32 %v339, 4294901760
      %3951 = vmatpush1.msra.mxu0 %v3950
      %3952 = vmatprep.subr.mxu0 0.0
      %v3953 = vand.u32 %v340, 4294901760
      %3954 = vmatpush1.msra.mxu0 %v3953
      %3955 = vmatprep.subr.mxu0 0.0
      %v3956 = vand.u32 %v341, 4294901760
      %3957 = vmatpush1.msra.mxu0 %v3956
      %3958 = vmatprep.subr.mxu0 0.0
      %3959 = vmatpush1.msra.mxu0 0.0
      %3960 = vmatprep.subr.mxu0 0.0
      %3961 = vmatpush1.msra.mxu0 0.0
      %3962 = vmatprep.subr.mxu0 0.0
      %3963 = vmatpush1.msra.mxu0 0.0
      %3964 = vmatprep.subr.mxu0 0.0
      %3965 = vmatpush1.msra.mxu0 0.0
      %3966 = vmatprep.subr.mxu0 0.0
      %3967 = vmatpush1.msra.mxu0 0.0
      %3968 = vmatprep.subr.mxu0 0.0
      %3969 = vmatpush1.msra.mxu0 0.0
      %3970 = vmatprep.subr.mxu0 0.0
      %3971 = vmatpush1.msra.mxu0 0.0
      %3972 = vmatprep.subr.mxu0 0.0
      %3973 = vmatpush1.msra.mxu0 0.0
      %3974 = vmatprep.subr.mxu0 0.0
      %3975 = vmatpush1.msra.mxu0 0.0
      %3976 = vmatprep.subr.mxu0 0.0
      %3977 = vmatpush1.msra.mxu0 0.0
      %3978 = vmatprep.subr.mxu0 0.0
      %3979 = vmatpush1.msra.mxu0 0.0
      %3980 = vmatprep.subr.mxu0 0.0
      %3981 = vmatpush1.msra.mxu0 0.0
      %3982 = vmatprep.subr.mxu0 0.0
      %3983 = vmatpush1.msra.mxu0 0.0
      %3984 = vmatprep.subr.mxu0 0.0
      %3985 = vmatpush1.msra.mxu0 0.0
      %3986 = vmatprep.subr.mxu0 0.0
      %3987 = vmatpush1.msra.mxu0 0.0
      %3988 = vmatprep.subr.mxu0 0.0
      %3989 = vmatpush1.msra.mxu0 0.0
      %3990 = vmatprep.subr.mxu0 0.0
      %3991 = vmatpush1.msra.mxu0 0.0
      %3992 = vmatprep.subr.mxu0 0.0
      %3993 = vmatpush1.msra.mxu0 0.0
      %3994 = vmatprep.subr.mxu0 0.0
      %3995 = vmatpush1.msra.mxu0 0.0
      %3996 = vmatprep.subr.mxu0 0.0
      %3997 = vmatpush1.msra.mxu0 0.0
      %3998 = vmatprep.subr.mxu0 0.0
      %3999 = vmatpush1.msra.mxu0 0.0
      %4000 = vmatprep.subr.mxu0 0.0
      %4001 = vmatpush1.msra.mxu0 0.0
      %4002 = vmatprep.subr.mxu0 0.0
      %4003 = vmatpush1.msra.mxu0 0.0
      %4004 = vmatprep.subr.mxu0 0.0
      %4005 = vmatpush1.msra.mxu0 0.0
      %4006 = vmatprep.subr.mxu0 0.0
      %4007 = vmatpush1.msra.mxu0 0.0
      %4008 = vmatprep.subr.mxu0 0.0
      %4009 = vmatpush1.msra.mxu0 0.0
      %4010 = vmatprep.subr.mxu0 0.0
      %4011 = vmatpush1.msra.mxu0 0.0
      %4012 = vmatprep.subr.mxu0 0.0
      %4013 = vmatpush1.msra.mxu0 0.0
      %4014 = vmatprep.mubr.f32.mxu0 0.0
      %v4015 = vand.u32 %v2294, 4294901760
      %4016 = vmatmul.mubr.f32.gmra.mrb[0].mxu0 %v4015
      %v4017 = vpop.f32.mrb[0].mxu0
      %v4018 = vadd.f32 %v3757, %v4017
      %v4019 = vpop.f32.mrb[0].mxu0
      %4020 = vmatprep.mubr.f32.mxu0 0.0
      %v4021 = vand.u32 %v2297, 4294901760
      %4022 = vmatmul.mubr.f32.gmra.mrb[0].mxu0 %v4021
      %v4023 = vpop.f32.mrb[0].mxu0
      %v4024 = vadd.f32 %v3763, %v4023
      %v4025 = vpop.f32.mrb[0].mxu0
      %4026 = vmatprep.mubr.f32.mxu0 0.0
      %v4027 = vand.u32 %v2300, 4294901760
      %4028 = vmatmul.mubr.f32.gmra.mrb[0].mxu0 %v4027
      %v4029 = vpop.f32.mrb[0].mxu0
      %v4030 = vadd.f32 %v3769, %v4029
      %v4031 = vpop.f32.mrb[0].mxu0
      %4032 = vmatprep.mubr.f32.mxu0 0.0
      %v4033 = vand.u32 %v2303, 4294901760
      %4034 = vmatmul.mubr.f32.gmra.mrb[0].mxu0 %v4033
      %v4035 = vpop.f32.mrb[0].mxu0
      %v4036 = vadd.f32 %v3775, %v4035
      %v4037 = vpop.f32.mrb[0].mxu0
      %4038 = vmatprep.mubr.f32.mxu0 0.0
      %v4039 = vand.u32 %v2306, 4294901760
      %4040 = vmatmul.mubr.f32.gmra.mrb[0].mxu0 %v4039
      %v4041 = vpop.f32.mrb[0].mxu0
      %v4042 = vadd.f32 %v3781, %v4041
      %v4043 = vpop.f32.mrb[0].mxu0
      %4044 = vmatprep.mubr.f32.mxu0 0.0
      %v4045 = vand.u32 %v2309, 4294901760
      %4046 = vmatmul.mubr.f32.gmra.mrb[0].mxu0 %v4045
      %v4047 = vpop.f32.mrb[0].mxu0
      %v4048 = vadd.f32 %v3787, %v4047
      %v4049 = vpop.f32.mrb[0].mxu0
      %4050 = vmatprep.mubr.f32.mxu0 0.0
      %v4051 = vand.u32 %v2312, 4294901760
      %4052 = vmatmul.mubr.f32.gmra.mrb[0].mxu0 %v4051
      %v4053 = vpop.f32.mrb[0].mxu0
      %v4054 = vadd.f32 %v3793, %v4053
      %v4055 = vpop.f32.mrb[0].mxu0
      %4056 = vmatprep.mubr.f32.mxu0 0.0
      %v4057 = vand.u32 %v2315, 4294901760
      %4058 = vmatmul.mubr.f32.gmra.mrb[0].mxu0 %v4057
      %v4059 = vpop.f32.mrb[0].mxu0
      %v4060 = vadd.f32 %v3799, %v4059
      %v4061 = vpop.f32.mrb[0].mxu0
      %4062 = vmatprep.mubr.f32.mxu0 0.0
      %v4063 = vand.u32 %v2318, 4294901760
      %4064 = vmatmul.mubr.f32.gmra.mrb[0].mxu0 %v4063
      %v4065 = vpop.f32.mrb[0].mxu0
      %v4066 = vadd.f32 %v3805, %v4065
      %v4067 = vpop.f32.mrb[0].mxu0
      %4068 = vmatprep.mubr.f32.mxu0 0.0
      %v4069 = vand.u32 %v2321, 4294901760
      %4070 = vmatmul.mubr.f32.gmra.mrb[0].mxu0 %v4069
      %v4071 = vpop.f32.mrb[0].mxu0
      %v4072 = vadd.f32 %v3811, %v4071
      %v4073 = vpop.f32.mrb[0].mxu0
      %4074 = vmatprep.mubr.f32.mxu0 0.0
      %v4075 = vand.u32 %v2324, 4294901760
      %4076 = vmatmul.mubr.f32.gmra.mrb[0].mxu0 %v4075
      %v4077 = vpop.f32.mrb[0].mxu0
      %v4078 = vadd.f32 %v3817, %v4077
      %v4079 = vpop.f32.mrb[0].mxu0
      %4080 = vmatprep.mubr.f32.mxu0 0.0
      %v4081 = vand.u32 %v2327, 4294901760
      %4082 = vmatmul.mubr.f32.gmra.mrb[0].mxu0 %v4081
      %v4083 = vpop.f32.mrb[0].mxu0
      %v4084 = vadd.f32 %v3823, %v4083
      %v4085 = vpop.f32.mrb[0].mxu0
      %4086 = vmatprep.mubr.f32.mxu0 0.0
      %v4087 = vand.u32 %v2330, 4294901760
      %4088 = vmatmul.mubr.f32.gmra.mrb[0].mxu0 %v4087
      %v4089 = vpop.f32.mrb[0].mxu0
      %v4090 = vadd.f32 %v3829, %v4089
      %v4091 = vpop.f32.mrb[0].mxu0
      %4092 = vmatprep.mubr.f32.mxu0 0.0
      %v4093 = vand.u32 %v2333, 4294901760
      %4094 = vmatmul.mubr.f32.gmra.mrb[0].mxu0 %v4093
      %v4095 = vpop.f32.mrb[0].mxu0
      %v4096 = vadd.f32 %v3835, %v4095
      %v4097 = vpop.f32.mrb[0].mxu0
      %4098 = vmatprep.mubr.f32.mxu0 0.0
      %v4099 = vand.u32 %v2336, 4294901760
      %4100 = vmatmul.mubr.f32.gmra.mrb[0].mxu0 %v4099
      %v4101 = vpop.f32.mrb[0].mxu0
      %v4102 = vadd.f32 %v3841, %v4101
      %v4103 = vpop.f32.mrb[0].mxu0
      %4104 = vmatprep.mubr.f32.mxu0 0.0
      %v4105 = vand.u32 %v2339, 4294901760
      %4106 = vmatmul.mubr.f32.gmra.mrb[0].mxu0 %v4105
      %v4107 = vpop.f32.mrb[0].mxu0
      %v4108 = vadd.f32 %v3847, %v4107
      %v4109 = vpop.f32.mrb[0].mxu0
      %4110 = vmatprep.mubr.f32.mxu0 0.0
      %v4111 = vand.u32 %v2342, 4294901760
      %4112 = vmatmul.mubr.f32.gmra.mrb[0].mxu0 %v4111
      %v4113 = vpop.f32.mrb[0].mxu0
      %v4114 = vadd.f32 %v3853, %v4113
      %v4115 = vpop.f32.mrb[0].mxu0
      %4116 = vmatprep.mubr.f32.mxu0 0.0
      %v4117 = vand.u32 %v2345, 4294901760
      %4118 = vmatmul.mubr.f32.gmra.mrb[0].mxu0 %v4117
      %v4119 = vpop.f32.mrb[0].mxu0
      %v4120 = vadd.f32 %v3859, %v4119
      %v4121 = vpop.f32.mrb[0].mxu0
      %4122 = vmatprep.mubr.f32.mxu0 0.0
      %v4123 = vand.u32 %v2348, 4294901760
      %4124 = vmatmul.mubr.f32.gmra.mrb[0].mxu0 %v4123
      %v4125 = vpop.f32.mrb[0].mxu0
      %v4126 = vadd.f32 %v3865, %v4125
      %v4127 = vpop.f32.mrb[0].mxu0
      %4128 = vmatprep.mubr.f32.mxu0 0.0
      %v4129 = vand.u32 %v2351, 4294901760
      %4130 = vmatmul.mubr.f32.gmra.mrb[0].mxu0 %v4129
      %v4131 = vpop.f32.mrb[0].mxu0
      %v4132 = vadd.f32 %v3871, %v4131
      %v4133 = vpop.f32.mrb[0].mxu0
      %4134 = vmatprep.mubr.f32.mxu0 0.0
      %v4135 = vand.u32 %v2354, 4294901760
      %4136 = vmatmul.mubr.f32.gmra.mrb[0].mxu0 %v4135
      %v4137 = vpop.f32.mrb[0].mxu0
      %v4138 = vadd.f32 %v3877, %v4137
      %v4139 = vpop.f32.mrb[0].mxu0
      %4140 = vmatprep.mubr.f32.mxu0 0.0
      %v4141 = vand.u32 %v2357, 4294901760
      %4142 = vmatmul.mubr.f32.gmra.mrb[0].mxu0 %v4141
      %v4143 = vpop.f32.mrb[0].mxu0
      %v4144 = vadd.f32 %v3883, %v4143
      %v4145 = vpop.f32.mrb[0].mxu0
      %4146 = vmatprep.mubr.f32.mxu0 0.0
      %v4147 = vand.u32 %v2360, 4294901760
      %4148 = vmatmul.mubr.f32.gmra.mrb[0].mxu0 %v4147
      %v4149 = vpop.f32.mrb[0].mxu0
      %v4150 = vadd.f32 %v3889, %v4149
      %v4151 = vpop.f32.mrb[0].mxu0
      %4152 = vmatprep.mubr.f32.mxu0 0.0
      %v4153 = vand.u32 %v2363, 4294901760
      %4154 = vmatmul.mubr.f32.gmra.mrb[0].mxu0 %v4153
      %v4155 = vpop.f32.mrb[0].mxu0
      %v4156 = vadd.f32 %v3895, %v4155
      %v4157 = vpop.f32.mrb[0].mxu0
      %4158 = vmatprep.mubr.f32.mxu0 0.0
      %v4159 = vand.u32 %v2366, 4294901760
      %4160 = vmatmul.mubr.f32.gmra.mrb[0].mxu0 %v4159
      %v4161 = vpop.f32.mrb[0].mxu0
      %v4162 = vadd.f32 %v3901, %v4161
      %v4163 = vpop.f32.mrb[0].mxu0
      %4164 = vmatprep.mubr.f32.mxu0 0.0
      %v4165 = vand.u32 %v2369, 4294901760
      %4166 = vmatmul.mubr.f32.gmra.mrb[0].mxu0 %v4165
      %v4167 = vpop.f32.mrb[0].mxu0
      %v4168 = vadd.f32 %v3907, %v4167
      %v4169 = vpop.f32.mrb[0].mxu0
      %4170 = vmatprep.mubr.f32.mxu0 0.0
      %v4171 = vand.u32 %v2372, 4294901760
      %4172 = vmatmul.mubr.f32.gmra.mrb[0].mxu0 %v4171
      %v4173 = vpop.f32.mrb[0].mxu0
      %v4174 = vadd.f32 %v3913, %v4173
      %v4175 = vpop.f32.mrb[0].mxu0
      %4176 = vmatprep.mubr.f32.mxu0 0.0
      %v4177 = vand.u32 %v2375, 4294901760
      %4178 = vmatmul.mubr.f32.gmra.mrb[0].mxu0 %v4177
      %v4179 = vpop.f32.mrb[0].mxu0
      %v4180 = vadd.f32 %v3919, %v4179
      %v4181 = vpop.f32.mrb[0].mxu0
      %4182 = vmatprep.mubr.f32.mxu0 0.0
      %v4183 = vand.u32 %v2378, 4294901760
      %4184 = vmatmul.mubr.f32.gmra.mrb[0].mxu0 %v4183
      %v4185 = vpop.f32.mrb[0].mxu0
      %v4186 = vadd.f32 %v3925, %v4185
      %v4187 = vpop.f32.mrb[0].mxu0
      %4188 = vmatprep.mubr.f32.mxu0 0.0
      %v4189 = vand.u32 %v2381, 4294901760
      %4190 = vmatmul.mubr.f32.gmra.mrb[0].mxu0 %v4189
      %v4191 = vpop.f32.mrb[0].mxu0
      %v4192 = vadd.f32 %v3931, %v4191
      %v4193 = vpop.f32.mrb[0].mxu0
      %4194 = vmatprep.mubr.f32.mxu0 0.0
      %v4195 = vand.u32 %v2384, 4294901760
      %4196 = vmatmul.mubr.f32.gmra.mrb[0].mxu0 %v4195
      %v4197 = vpop.f32.mrb[0].mxu0
      %v4198 = vadd.f32 %v3937, %v4197
      %v4199 = vpop.f32.mrb[0].mxu0
      %4200 = vmatprep.mubr.f32.mxu0 0.0
      %v4201 = vand.u32 %v2387, 4294901760
      %4202 = vmatmul.mubr.f32.gmra.mrb[0].mxu0 %v4201
      %v4203 = vpop.f32.mrb[0].mxu0
      %v4204 = vadd.f32 %v3943, %v4203
      %v4205 = vpop.f32.mrb[0].mxu0
      %4206 = vdwg.mxu0
      %v4207 = vld [vmem:[%s4] sm:$0x1]
      %v4209 = vlaneseq
      %v4210 = vshrl.u32 %v4209, 7
      %v4211 = vsub.s32 0, %v4210
      %v4212 = vrot.slane %v4207, %v4211
      %v4214 = vadd.f32 %v4018, %v4212
      %v4215 = vadd.f32 %v4024, %v4212
      %v4216 = vadd.f32 %v4030, %v4212
      %v4217 = vadd.f32 %v4036, %v4212
      %v4218 = vadd.f32 %v4042, %v4212
      %v4219 = vadd.f32 %v4048, %v4212
      %v4220 = vadd.f32 %v4054, %v4212
      %v4221 = vadd.f32 %v4060, %v4212
      %v4222 = vadd.f32 %v4066, %v4212
      %v4223 = vadd.f32 %v4072, %v4212
      %v4224 = vadd.f32 %v4078, %v4212
      %v4225 = vadd.f32 %v4084, %v4212
      %v4226 = vadd.f32 %v4090, %v4212
      %v4227 = vadd.f32 %v4096, %v4212
      %v4228 = vadd.f32 %v4102, %v4212
      %v4229 = vadd.f32 %v4108, %v4212
      %v4230 = vadd.f32 %v4114, %v4212
      %v4231 = vadd.f32 %v4120, %v4212
      %v4232 = vadd.f32 %v4126, %v4212
      %v4233 = vadd.f32 %v4132, %v4212
      %v4234 = vadd.f32 %v4138, %v4212
      %v4235 = vadd.f32 %v4144, %v4212
      %v4236 = vadd.f32 %v4150, %v4212
      %v4237 = vadd.f32 %v4156, %v4212
      %v4238 = vadd.f32 %v4162, %v4212
      %v4239 = vadd.f32 %v4168, %v4212
      %v4240 = vadd.f32 %v4174, %v4212
      %v4241 = vadd.f32 %v4180, %v4212
      %v4242 = vadd.f32 %v4186, %v4212
      %v4243 = vadd.f32 %v4192, %v4212
      %v4244 = vadd.f32 %v4198, %v4212
      %v4245 = vadd.f32 %v4204, %v4212
      %v4246 = vmax.f32 %v4214, 0.0
      %v4247 = vmax.f32 %v4215, 0.0
      %v4248 = vmax.f32 %v4216, 0.0
      %v4249 = vmax.f32 %v4217, 0.0
      %v4250 = vmax.f32 %v4218, 0.0
      %v4251 = vmax.f32 %v4219, 0.0
      %v4252 = vmax.f32 %v4220, 0.0
      %v4253 = vmax.f32 %v4221, 0.0
      %v4254 = vmax.f32 %v4222, 0.0
      %v4255 = vmax.f32 %v4223, 0.0
      %v4256 = vmax.f32 %v4224, 0.0
      %v4257 = vmax.f32 %v4225, 0.0
      %v4258 = vmax.f32 %v4226, 0.0
      %v4259 = vmax.f32 %v4227, 0.0
      %v4260 = vmax.f32 %v4228, 0.0
      %v4261 = vmax.f32 %v4229, 0.0
      %v4262 = vmax.f32 %v4230, 0.0
      %v4263 = vmax.f32 %v4231, 0.0
      %v4264 = vmax.f32 %v4232, 0.0
      %v4265 = vmax.f32 %v4233, 0.0
      %v4266 = vmax.f32 %v4234, 0.0
      %v4267 = vmax.f32 %v4235, 0.0
      %v4268 = vmax.f32 %v4236, 0.0
      %v4269 = vmax.f32 %v4237, 0.0
      %v4270 = vmax.f32 %v4238, 0.0
      %v4271 = vmax.f32 %v4239, 0.0
      %v4272 = vmax.f32 %v4240, 0.0
      %v4273 = vmax.f32 %v4241, 0.0
      %v4274 = vmax.f32 %v4242, 0.0
      %v4275 = vmax.f32 %v4243, 0.0
      %v4276 = vmax.f32 %v4244, 0.0
      %v4277 = vmax.f32 %v4245, 0.0
      %v4278 = vld [vmem:[%s5] sm:$0x1]
      %v4280 = vlaneseq
      %v4281 = vshrl.u32 %v4280, 7
      %v4282 = vsub.s32 0, %v4281
      %v4283 = vrot.slane %v4278, %v4282
      %v4285 = vmul.f32 %v4246, %v4283
      %v4286 = vmul.f32 %v4247, %v4283
      %v4287 = vmul.f32 %v4248, %v4283
      %v4288 = vmul.f32 %v4249, %v4283
      %v4289 = vmul.f32 %v4250, %v4283
      %v4290 = vmul.f32 %v4251, %v4283
      %v4291 = vmul.f32 %v4252, %v4283
      %v4292 = vmul.f32 %v4253, %v4283
      %v4293 = vmul.f32 %v4254, %v4283
      %v4294 = vmul.f32 %v4255, %v4283
      %v4295 = vmul.f32 %v4256, %v4283
      %v4296 = vmul.f32 %v4257, %v4283
      %v4297 = vmul.f32 %v4258, %v4283
      %v4298 = vmul.f32 %v4259, %v4283
      %v4299 = vmul.f32 %v4260, %v4283
      %v4300 = vmul.f32 %v4261, %v4283
      %v4301 = vmul.f32 %v4262, %v4283
      %v4302 = vmul.f32 %v4263, %v4283
      %v4303 = vmul.f32 %v4264, %v4283
      %v4304 = vmul.f32 %v4265, %v4283
      %v4305 = vmul.f32 %v4266, %v4283
      %v4306 = vmul.f32 %v4267, %v4283
      %v4307 = vmul.f32 %v4268, %v4283
      %v4308 = vmul.f32 %v4269, %v4283
      %v4309 = vmul.f32 %v4270, %v4283
      %v4310 = vmul.f32 %v4271, %v4283
      %v4311 = vmul.f32 %v4272, %v4283
      %v4312 = vmul.f32 %v4273, %v4283
      %v4313 = vmul.f32 %v4274, %v4283
      %v4314 = vmul.f32 %v4275, %v4283
      %v4315 = vmul.f32 %v4276, %v4283
      %v4316 = vmul.f32 %v4277, %v4283
      %v4317 = vsel %vm378, %v4285, 0.0
      %4318 = vadd.xlane.f32.xlu0 %v4317
      %v4319 = vpop.xlane.xlu0 %4318
      %v4320 = vsel %vm378, %v4286, 0.0
      %4321 = vadd.xlane.f32.xlu0 %v4320
      %v4322 = vpop.xlane.xlu0 %4321
      %v4323 = vsel %vm378, %v4287, 0.0
      %4324 = vadd.xlane.f32.xlu0 %v4323
      %v4325 = vpop.xlane.xlu0 %4324
      %v4326 = vsel %vm378, %v4288, 0.0
      %4327 = vadd.xlane.f32.xlu0 %v4326
      %v4328 = vpop.xlane.xlu0 %4327
      %v4329 = vsel %vm378, %v4289, 0.0
      %4330 = vadd.xlane.f32.xlu0 %v4329
      %v4331 = vpop.xlane.xlu0 %4330
      %v4332 = vsel %vm378, %v4290, 0.0
      %4333 = vadd.xlane.f32.xlu0 %v4332
      %v4334 = vpop.xlane.xlu0 %4333
      %v4335 = vsel %vm378, %v4291, 0.0
      %4336 = vadd.xlane.f32.xlu0 %v4335
      %v4337 = vpop.xlane.xlu0 %4336
      %v4338 = vsel %vm378, %v4292, 0.0
      %4339 = vadd.xlane.f32.xlu0 %v4338
      %v4340 = vpop.xlane.xlu0 %4339
      %v4341 = vsel %vm378, %v4293, 0.0
      %4342 = vadd.xlane.f32.xlu0 %v4341
      %v4343 = vpop.xlane.xlu0 %4342
      %v4344 = vsel %vm378, %v4294, 0.0
      %4345 = vadd.xlane.f32.xlu0 %v4344
      %v4346 = vpop.xlane.xlu0 %4345
      %v4347 = vsel %vm378, %v4295, 0.0
      %4348 = vadd.xlane.f32.xlu0 %v4347
      %v4349 = vpop.xlane.xlu0 %4348
      %v4350 = vsel %vm378, %v4296, 0.0
      %4351 = vadd.xlane.f32.xlu0 %v4350
      %v4352 = vpop.xlane.xlu0 %4351
      %v4353 = vsel %vm378, %v4297, 0.0
      %4354 = vadd.xlane.f32.xlu0 %v4353
      %v4355 = vpop.xlane.xlu0 %4354
      %v4356 = vsel %vm378, %v4298, 0.0
      %4357 = vadd.xlane.f32.xlu0 %v4356
      %v4358 = vpop.xlane.xlu0 %4357
      %v4359 = vsel %vm378, %v4299, 0.0
      %4360 = vadd.xlane.f32.xlu0 %v4359
      %v4361 = vpop.xlane.xlu0 %4360
      %v4362 = vsel %vm378, %v4300, 0.0
      %4363 = vadd.xlane.f32.xlu0 %v4362
      %v4364 = vpop.xlane.xlu0 %4363
      %v4365 = vsel %vm378, %v4301, 0.0
      %4366 = vadd.xlane.f32.xlu0 %v4365
      %v4367 = vpop.xlane.xlu0 %4366
      %v4368 = vsel %vm378, %v4302, 0.0
      %4369 = vadd.xlane.f32.xlu0 %v4368
      %v4370 = vpop.xlane.xlu0 %4369
      %v4371 = vsel %vm378, %v4303, 0.0
      %4372 = vadd.xlane.f32.xlu0 %v4371
      %v4373 = vpop.xlane.xlu0 %4372
      %v4374 = vsel %vm378, %v4304, 0.0
      %4375 = vadd.xlane.f32.xlu0 %v4374
      %v4376 = vpop.xlane.xlu0 %4375
      %v4377 = vsel %vm378, %v4305, 0.0
      %4378 = vadd.xlane.f32.xlu0 %v4377
      %v4379 = vpop.xlane.xlu0 %4378
      %v4380 = vsel %vm378, %v4306, 0.0
      %4381 = vadd.xlane.f32.xlu0 %v4380
      %v4382 = vpop.xlane.xlu0 %4381
      %v4383 = vsel %vm378, %v4307, 0.0
      %4384 = vadd.xlane.f32.xlu0 %v4383
      %v4385 = vpop.xlane.xlu0 %4384
      %v4386 = vsel %vm378, %v4308, 0.0
      %4387 = vadd.xlane.f32.xlu0 %v4386
      %v4388 = vpop.xlane.xlu0 %4387
      %v4389 = vsel %vm378, %v4309, 0.0
      %4390 = vadd.xlane.f32.xlu0 %v4389
      %v4391 = vpop.xlane.xlu0 %4390
      %v4392 = vsel %vm378, %v4310, 0.0
      %4393 = vadd.xlane.f32.xlu0 %v4392
      %v4394 = vpop.xlane.xlu0 %4393
      %v4395 = vsel %vm378, %v4311, 0.0
      %4396 = vadd.xlane.f32.xlu0 %v4395
      %v4397 = vpop.xlane.xlu0 %4396
      %v4398 = vsel %vm378, %v4312, 0.0
      %4399 = vadd.xlane.f32.xlu0 %v4398
      %v4400 = vpop.xlane.xlu0 %4399
      %v4401 = vsel %vm378, %v4313, 0.0
      %4402 = vadd.xlane.f32.xlu0 %v4401
      %v4403 = vpop.xlane.xlu0 %4402
      %v4404 = vsel %vm378, %v4314, 0.0
      %4405 = vadd.xlane.f32.xlu0 %v4404
      %v4406 = vpop.xlane.xlu0 %4405
      %v4407 = vsel %vm378, %v4315, 0.0
      %4408 = vadd.xlane.f32.xlu0 %v4407
      %v4409 = vpop.xlane.xlu0 %4408
      %v4410 = vsel %vm378, %v4316, 0.0
      %4411 = vadd.xlane.f32.xlu0 %v4410
      %v4412 = vpop.xlane.xlu0 %4411
      %v4413 = vld [vmem:[#allocation2] sm:$0x1]
      %v4415 = vlaneseq
      %v4416 = vshrl.u32 %v4415, 7
      %v4417 = vsub.s32 0, %v4416
      %v4418 = vrot.slane %v4413, %v4417
      %v4420 = vadd.f32 %v4319, %v4418
      %v4421 = vadd.f32 %v4322, %v4418
      %v4422 = vadd.f32 %v4325, %v4418
      %v4423 = vadd.f32 %v4328, %v4418
      %v4424 = vadd.f32 %v4331, %v4418
      %v4425 = vadd.f32 %v4334, %v4418
      %v4426 = vadd.f32 %v4337, %v4418
      %v4427 = vadd.f32 %v4340, %v4418
      %v4428 = vadd.f32 %v4343, %v4418
      %v4429 = vadd.f32 %v4346, %v4418
      %v4430 = vadd.f32 %v4349, %v4418
      %v4431 = vadd.f32 %v4352, %v4418
      %v4432 = vadd.f32 %v4355, %v4418
      %v4433 = vadd.f32 %v4358, %v4418
      %v4434 = vadd.f32 %v4361, %v4418
      %v4435 = vadd.f32 %v4364, %v4418
      %v4436 = vadd.f32 %v4367, %v4418
      %v4437 = vadd.f32 %v4370, %v4418
      %v4438 = vadd.f32 %v4373, %v4418
      %v4439 = vadd.f32 %v4376, %v4418
      %v4440 = vadd.f32 %v4379, %v4418
      %v4441 = vadd.f32 %v4382, %v4418
      %v4442 = vadd.f32 %v4385, %v4418
      %v4443 = vadd.f32 %v4388, %v4418
      %v4444 = vadd.f32 %v4391, %v4418
      %v4445 = vadd.f32 %v4394, %v4418
      %v4446 = vadd.f32 %v4397, %v4418
      %v4447 = vadd.f32 %v4400, %v4418
      %v4448 = vadd.f32 %v4403, %v4418
      %v4449 = vadd.f32 %v4406, %v4418
      %v4450 = vadd.f32 %v4409, %v4418
      %v4451 = vadd.f32 %v4412, %v4418
      %vm4452 = vcmask 7168
      %4453 = vst.msk [vmem:[%s304] sm:$0xff] %vm4452, %v4420
      %4454 = vst.msk [vmem:[%s304 + $0x8] sm:$0xff] %vm4452, %v4421
      %4455 = vst.msk [vmem:[%s304 + $0x10] sm:$0xff] %vm4452, %v4422
      %4456 = vst.msk [vmem:[%s304 + $0x18] sm:$0xff] %vm4452, %v4423
      %4457 = vst.msk [vmem:[%s304 + $0x20] sm:$0xff] %vm4452, %v4424
      %4458 = vst.msk [vmem:[%s304 + $0x28] sm:$0xff] %vm4452, %v4425
      %4459 = vst.msk [vmem:[%s304 + $0x30] sm:$0xff] %vm4452, %v4426
      %4460 = vst.msk [vmem:[%s304 + $0x38] sm:$0xff] %vm4452, %v4427
      %4461 = vst.msk [vmem:[%s304 + $0x40] sm:$0xff] %vm4452, %v4428
      %4462 = vst.msk [vmem:[%s304 + $0x48] sm:$0xff] %vm4452, %v4429
      %4463 = vst.msk [vmem:[%s304 + $0x50] sm:$0xff] %vm4452, %v4430
      %4464 = vst.msk [vmem:[%s304 + $0x58] sm:$0xff] %vm4452, %v4431
      %4465 = vst.msk [vmem:[%s304 + $0x60] sm:$0xff] %vm4452, %v4432
      %4466 = vst.msk [vmem:[%s304 + $0x68] sm:$0xff] %vm4452, %v4433
      %4467 = vst.msk [vmem:[%s304 + $0x70] sm:$0xff] %vm4452, %v4434
      %4468 = vst.msk [vmem:[%s304 + $0x78] sm:$0xff] %vm4452, %v4435
      %4469 = vst.msk [vmem:[%s304 + $0x80] sm:$0xff] %vm4452, %v4436
      %4470 = vst.msk [vmem:[%s304 + $0x88] sm:$0xff] %vm4452, %v4437
      %4471 = vst.msk [vmem:[%s304 + $0x90] sm:$0xff] %vm4452, %v4438
      %4472 = vst.msk [vmem:[%s304 + $0x98] sm:$0xff] %vm4452, %v4439
      %4473 = vst.msk [vmem:[%s304 + $0xa0] sm:$0xff] %vm4452, %v4440
      %4474 = vst.msk [vmem:[%s304 + $0xa8] sm:$0xff] %vm4452, %v4441
      %4475 = vst.msk [vmem:[%s304 + $0xb0] sm:$0xff] %vm4452, %v4442
      %4476 = vst.msk [vmem:[%s304 + $0xb8] sm:$0xff] %vm4452, %v4443
      %4477 = vst.msk [vmem:[%s304 + $0xc0] sm:$0xff] %vm4452, %v4444
      %4478 = vst.msk [vmem:[%s304 + $0xc8] sm:$0xff] %vm4452, %v4445
      %4479 = vst.msk [vmem:[%s304 + $0xd0] sm:$0xff] %vm4452, %v4446
      %4480 = vst.msk [vmem:[%s304 + $0xd8] sm:$0xff] %vm4452, %v4447
      %4481 = vst.msk [vmem:[%s304 + $0xe0] sm:$0xff] %vm4452, %v4448
      %4482 = vst.msk [vmem:[%s304 + $0xe8] sm:$0xff] %vm4452, %v4449
      %4483 = vst.msk [vmem:[%s304 + $0xf0] sm:$0xff] %vm4452, %v4450
      %4484 = vst.msk [vmem:[%s304 + $0xf8] sm:$0xff] %vm4452, %v4451
      %s4485 = smul.u32 32, %s20
      %p4486 = scmp.lt.s32.totalorder %s4485, 127
      %s4487 = scalar_select %p4486, %s4485, 127
      %s4488 = smul.addr %s4487, 8
      %s4489 = scalar_lea.vmem %s7, %s4488
      // Predicated region
      $region49: #{edge_decoder_forward.1} parent=47 // pred_check
        %p4490 = pneg %p195
      $region50: #{edge_decoder_forward.1} parent=47 // pred_check_branch
        %4492 = sbr.rel (%p4490) target = $region52
      $region51: #{edge_decoder_forward.1} parent=47 // pred_region
        %s4493 = smul.u32 32, %s20
      $region52: #{edge_decoder_forward.1} parent=47 // pred_fallthru
        _
    $region48: #{edge_decoder_forward.1} parent=5 // pred_fallthru
      _
    %p4494 = scmp.le.s32.totalorder 2, %s15
    // Predicated region
    $region53: #{edge_decoder_forward.1} parent=5 // pred_check
      %p4495 = pneg %p4494
    $region54: #{edge_decoder_forward.1} parent=5 // pred_check_branch
      %4497 = sbr.rel (%p4495) target = $region56
    $region55: #{edge_decoder_forward.1} parent=5 // pred_region
      %s4498 = ssub.s32 %s15, 2
      // Predicated region
      $region57: #{edge_decoder_forward.1} parent=55 // pred_check
        %p4499 = pneg %p201
      $region58: #{edge_decoder_forward.1} parent=55 // pred_check_branch
        %4501 = sbr.rel (%p4499) target = $region60
      $region59: #{edge_decoder_forward.1} parent=55 // pred_region
        %s4502 = smul.u32 32, %s21
        %p4503 = scmp.lt.s32.totalorder %s4502, 127
        %s4504 = scalar_select %p4503, %s4502, 127
        %s4505 = smul.addr %s4504, 8
        %s4506 = scalar_lea.vmem %s7, %s4505
      $region60: #{edge_decoder_forward.1} parent=55 // pred_fallthru
        _
    $region56: #{edge_decoder_forward.1} parent=5 // pred_fallthru
      _
  $region6: #{edge_decoder_forward.1} parent=0 // loop_footer
    %s19 = sadd.s32 1, %s15
  $region7: #{edge_decoder_forward.1} parent=0 // loop_footer_branch
    %14 = sbr.rel target = $region3
  $region8: #{edge_decoder_forward.1} parent=0 // loop_exit
    _

</llo_original>
